<compile_context>
chip_gen: v7x
topology: tpu7x:2x2x1
jax: 0.10.0
libtpu: 0.0.40
codegen_flags: <defaults>
</compile_context>

<pallas_src>
import functools

import jax
import jax.numpy as jnp
from jax.experimental import pallas as pl
from jax.experimental.pallas import tpu as pltpu

EPS = 1e-5
LANE = 128   # lane width  -> channel padding target
SUB = 8      # sublane width -> stats row padding


def _round_up(x, m):
    return (x + m - 1) // m * m


def _vmem_budget():
    """Generation-aware VMEM budget (bytes)."""
    try:
        cap = int(pltpu.get_tpu_info().vmem_capacity_bytes)
    except Exception:
        cap = 64 << 20  # conservative: v7x physical VMEM per TensorCore
    return int(cap * 0.85)


# ----------------------------------------------------------------------------
# Kernel A: 3x3 stride-1 conv with in-kernel tap formation (no im2col).
#   Grid is over images; the input block is one zero-padded NHWC image.
#   Optionally fuses the previous BatchNorm apply + ReLU (per-tap, with an
#   iota mask so padded border pixels contribute exactly zero).
#   Emits bf16 conv output + per-image partial sum / sum-of-squares stats.
# ----------------------------------------------------------------------------
def _conv3x3_tap_kernel(*refs, ho, wo, fuse_bn_relu):
    if fuse_bn_relu:
        x_ref, w_ref, coef_ref, y_ref, s_ref, acc_ref = refs
    else:
        x_ref, w_ref, y_ref, s_ref, acc_ref = refs

    rows = ho * wo
    cin = x_ref.shape[-1]
    cpad = y_ref.shape[-1]

    if fuse_bn_relu:
        scale = coef_ref[0:1, :]                                   # (1, cpad)
        bias = coef_ref[1:2, :]
        rr = jax.lax.broadcasted_iota(jnp.int32, (ho, wo, cin), 0)  # out row
        cc = jax.lax.broadcasted_iota(jnp.int32, (ho, wo, cin), 1)  # out col

    first = True
    for dy in range(3):
        for dx in range(3):
            a = x_ref[pl.ds(dy, ho), pl.ds(dx, wo), :]             # (ho, wo, cin)
            if fuse_bn_relu:
                act = jnp.maximum(a.astype(jnp.float32) * scale + bias, 0.0)
                valid = ((rr + dy >= 1) & (rr + dy <= ho)
                         & (cc + dx >= 1) & (cc + dx <= wo))
                a2d = (jnp.where(valid, act, 0.0)
                       .reshape(rows, cin).astype(jnp.bfloat16))
            else:
                a2d = a.reshape(rows, cin)
            contrib = jnp.dot(a2d, w_ref[dy * 3 + dx],
                              preferred_element_type=jnp.float32)
            if first:
                acc_ref[...] = contrib
                first = False
            else:
                acc_ref[...] += contrib

    acc = acc_ref[...]
    y_ref[...] = acc.astype(y_ref.dtype)

    row_id = jax.lax.broadcasted_iota(jnp.int32, (SUB, cpad), 0)
    s_ref[...] = (jnp.where(row_id == 0, jnp.sum(acc, axis=0, keepdims=True), 0.0)
                  + jnp.where(row_id == 1,
                              jnp.sum(acc * acc, axis=0, keepdims=True), 0.0))


# ----------------------------------------------------------------------------
# Kernel B: conv-as-matmul over im2col patches (fallback: strided / projection
#           conv1, or odd output widths), with optional fused 1x1 projection.
#           Emits bf16 outputs + partial per-channel stats.
# ----------------------------------------------------------------------------
def _matmul_stats_kernel(*refs, has_proj):
    if has_proj:
        p_ref, w_ref, xc_ref, wsc_ref, y_ref, ysc_ref, s_ref = refs
    else:
        p_ref, w_ref, y_ref, s_ref = refs

    acc = jnp.dot(p_ref[...], w_ref[...], preferred_element_type=jnp.float32)
    y_ref[...] = acc.astype(y_ref.dtype)

    c = acc.shape[1]
    row = jax.lax.broadcasted_iota(jnp.int32, (SUB, c), 0)
    stats = (jnp.where(row == 0, jnp.sum(acc, axis=0, keepdims=True), 0.0)
             + jnp.where(row == 1, jnp.sum(acc * acc, axis=0, keepdims=True), 0.0))

    if has_proj:
        acc_sc = jnp.dot(xc_ref[...], wsc_ref[...],
                         preferred_element_type=jnp.float32)
        ysc_ref[...] = acc_sc.astype(ysc_ref.dtype)
        stats = (stats
                 + jnp.where(row == 2, jnp.sum(acc_sc, axis=0, keepdims=True), 0.0)
                 + jnp.where(row == 3,
                             jnp.sum(acc_sc * acc_sc, axis=0, keepdims=True), 0.0))

    s_ref[0] = stats


# ----------------------------------------------------------------------------
# Kernel C: final fused stage: bn2 apply + (projection-BN apply or identity)
#           residual add + ReLU.
# ----------------------------------------------------------------------------
def _bn_residual_relu_kernel(*refs, has_proj):
    if has_proj:
        y_ref, ysc_ref, coef_ref, coefsc_ref, o_ref = refs
        res = (ysc_ref[...].astype(jnp.float32) * coefsc_ref[0:1, :]
               + coefsc_ref[1:2, :])
    else:
        y_ref, res_ref, coef_ref, o_ref = refs
        res = res_ref[...].astype(jnp.float32)
    y = y_ref[...].astype(jnp.float32) * coef_ref[0:1, :] + coef_ref[1:2, :]
    o_ref[...] = jnp.maximum(y + res, 0.0)


# ----------------------------------------------------------------------------
# pallas_call wrappers
# ----------------------------------------------------------------------------
def _conv_tap_call(x_sp, w_taps, coef, *, ho, wo, cpad, vmem_limit):
    n, hp, wp, cin = x_sp.shape
    rows = ho * wo
    fuse = coef is not None

    in_specs = [pl.BlockSpec((None, hp, wp, cin), lambda i: (i, 0, 0, 0)),
                pl.BlockSpec((9, cin, cpad), lambda i: (0, 0, 0))]
    args = [x_sp, w_taps]
    if fuse:
        in_specs.append(pl.BlockSpec((2, cpad), lambda i: (0, 0)))
        args.append(coef)

    flops = 2 * n * rows * 9 * cin * cpad
    bytes_acc = (x_sp.size * 2 + w_taps.size * 2
                 + n * rows * cpad * 2 + n * SUB * cpad * 4)

    kernel = functools.partial(_conv3x3_tap_kernel, ho=ho, wo=wo,
                               fuse_bn_relu=fuse)
    y, st = pl.pallas_call(
        kernel,
        grid=(n,),
        in_specs=in_specs,
        out_specs=(pl.BlockSpec((None, rows, cpad), lambda i: (i, 0, 0)),
                   pl.BlockSpec((None, SUB, cpad), lambda i: (i, 0, 0))),
        out_shape=(jax.ShapeDtypeStruct((n, rows, cpad), jnp.bfloat16),
                   jax.ShapeDtypeStruct((n, SUB, cpad), jnp.float32)),
        scratch_shapes=[pltpu.VMEM((rows, cpad), jnp.float32)],
        compiler_params=pltpu.CompilerParams(
            dimension_semantics=("parallel",), vmem_limit_bytes=vmem_limit),
        cost_estimate=pl.CostEstimate(flops=flops, transcendentals=0,
                                      bytes_accessed=bytes_acc),
    )(*args)
    return y, st


def _conv_stats_call(patches, w_mat, xc=None, wsc=None, *, tm, vmem_limit):
    rows_pad, kdim = patches.shape
    cpad = w_mat.shape[1]
    grid = rows_pad // tm
    has_proj = xc is not None

    args = [patches, w_mat]
    in_specs = [pl.BlockSpec((tm, kdim), lambda i: (i, 0)),
                pl.BlockSpec((kdim, cpad), lambda i: (0, 0))]
    if has_proj:
        cin_pad = xc.shape[1]
        args += [xc, wsc]
        in_specs += [pl.BlockSpec((tm, cin_pad), lambda i: (i, 0)),
                     pl.BlockSpec((cin_pad, cpad), lambda i: (0, 0))]

    out_shapes = [jax.ShapeDtypeStruct((rows_pad, cpad), jnp.bfloat16)]
    out_specs = [pl.BlockSpec((tm, cpad), lambda i: (i, 0))]
    if has_proj:
        out_shapes.append(jax.ShapeDtypeStruct((rows_pad, cpad), jnp.bfloat16))
        out_specs.append(pl.BlockSpec((tm, cpad), lambda i: (i, 0)))
    out_shapes.append(jax.ShapeDtypeStruct((grid, SUB, cpad), jnp.float32))
    out_specs.append(pl.BlockSpec((1, SUB, cpad), lambda i: (i, 0, 0)))

    flops = 2 * rows_pad * kdim * cpad
    bytes_acc = (patches.size * 2 + w_mat.size * 2
                 + rows_pad * cpad * 2 + grid * SUB * cpad * 4)
    if has_proj:
        flops += 2 * rows_pad * xc.shape[1] * cpad
        bytes_acc += xc.size * 2 + wsc.size * 2 + rows_pad * cpad * 2

    kernel = functools.partial(_matmul_stats_kernel, has_proj=has_proj)
    outs = pl.pallas_call(
        kernel,
        grid=(grid,),
        in_specs=in_specs,
        out_specs=tuple(out_specs),
        out_shape=tuple(out_shapes),
        compiler_params=pltpu.CompilerParams(
            dimension_semantics=("parallel",), vmem_limit_bytes=vmem_limit),
        cost_estimate=pl.CostEstimate(flops=flops, transcendentals=0,
                                      bytes_accessed=bytes_acc),
    )(*args)
    if has_proj:
        y, ysc, stats = outs
        return y, ysc, stats
    y, stats = outs
    return y, stats


def _final_call(y2, coef2, residual, coefsc, *, has_proj, vmem_limit):
    n, hw, cpad = y2.shape
    in_specs = [pl.BlockSpec((None, hw, cpad), lambda i: (i, 0, 0)),
                pl.BlockSpec((None, hw, cpad), lambda i: (i, 0, 0)),
                pl.BlockSpec((2, cpad), lambda i: (0, 0))]
    args = [y2, residual, coef2]
    if has_proj:
        in_specs.append(pl.BlockSpec((2, cpad), lambda i: (0, 0)))
        args.append(coefsc)

    kernel = functools.partial(_bn_residual_relu_kernel, has_proj=has_proj)
    return pl.pallas_call(
        kernel,
        grid=(n,),
        in_specs=in_specs,
        out_specs=pl.BlockSpec((None, hw, cpad), lambda i: (i, 0, 0)),
        out_shape=jax.ShapeDtypeStruct((n, hw, cpad), jnp.float32),
        compiler_params=pltpu.CompilerParams(
            dimension_semantics=("parallel",), vmem_limit_bytes=vmem_limit),
    )(*args)


# ----------------------------------------------------------------------------
# JAX glue: tiling heuristics, weight reshaping, im2col fallback, BN folding.
# ----------------------------------------------------------------------------
def _tap_fits(hp, wp, cin, hw, cpad, budget):
    need = (2 * hp * wp * cin * 2        # input tile, bf16, double-buffered
            + 2 * 9 * cin * cpad * 2     # tap weights, bf16, double-buffered
            + 2 * hw * cpad * 2          # bf16 output tile, double-buffered
            + 2 * SUB * cpad * 4         # stats tile
            + 3 * hw * cpad * 4          # f32 accumulator + temporaries
            + (2 << 20))                 # headroom
    return need <= budget


def _choose_tm(rows, kdim_pad, cpad, extra_cols, budget, tm_max):
    per_row = 2 * 2 * (kdim_pad + cpad + extra_cols)        # streamed, bf16, x2 buf
    fixed = 2 * 2 * kdim_pad * cpad + 2 * SUB * cpad * 4 + (2 << 20)
    avail = max(budget - fixed, 16 * per_row)
    tm = min(tm_max, (avail // per_row) // 16 * 16)
    half = _round_up((rows + 1) // 2, 16)   # keep >= 2 grid steps (megacore)
    return int(max(16, min(tm, half)))


def _im2col(x_nhwc, ksize, stride):
    n, h, w, c = x_nhwc.shape
    pad = (ksize - 1) // 2
    ho = (h + 2 * pad - ksize) // stride + 1
    wo = (w + 2 * pad - ksize) // stride + 1
    xp = jnp.pad(x_nhwc, ((0, 0), (pad, pad), (pad, pad), (0, 0)))
    taps = []
    for dy in range(ksize):
        for dx in range(ksize):
            taps.append(
                xp[:, dy:dy + (ho - 1) * stride + 1:stride,
                      dx:dx + (wo - 1) * stride + 1:stride, :])
    patches = jnp.stack(taps, axis=3)  # (N, Ho, Wo, K*K, C)
    return patches.reshape(n * ho * wo, ksize * ksize * c), ho, wo


def _flatten_weight(w_oihw, k_pad, c_pad):
    # (Cout, Cin, kh, kw) -> (kh*kw*Cin, Cout), matching patch (tap, chan) order.
    cout = w_oihw.shape[0]
    wm = jnp.transpose(w_oihw, (2, 3, 1, 0)).reshape(-1, cout)
    wm = jnp.pad(wm, ((0, k_pad - wm.shape[0]), (0, c_pad - cout)))
    return wm.astype(jnp.bfloat16)


def _tap_weight(w_oihw, cin_pad, cout_pad):
    # (Cout, Cin, 3, 3) -> (9, cin_pad, cout_pad) with tap index dy*3+dx.
    cout, cin, kh, kw = w_oihw.shape
    wt = jnp.transpose(w_oihw, (2, 3, 1, 0)).reshape(kh * kw, cin, cout)
    wt = jnp.pad(wt, ((0, 0), (0, cin_pad - cin), (0, cout_pad - cout)))
    return wt.astype(jnp.bfloat16)


def _bn_coef(sum_, sumsq, count, gamma, beta, cpad):
    # Fold training-mode BN (batch stats, biased var) into scale/bias.
    # NOTE: E[x^2]-E[x]^2 in f32; padded rows contribute exact zeros.
    mean = sum_ / count
    var = jnp.maximum(sumsq / count - mean * mean, 0.0)
    g = jnp.pad(gamma, (0, cpad - gamma.shape[0]))
    b = jnp.pad(beta, (0, cpad - beta.shape[0]))
    scale = g * jax.lax.rsqrt(var + EPS)
    bias = b - mean * scale
    return jnp.stack([scale, bias], axis=0)  # (2, cpad) f32


# ----------------------------------------------------------------------------
# BasicBlock forward
# ----------------------------------------------------------------------------
def basic_block_forward(x_nchw, params, *, stride, in_planes, planes, tm_max=512):
    x = jnp.transpose(x_nchw, (0, 2, 3, 1)).astype(jnp.float32)  # NHWC
    n, h, w_sp, _ = x.shape
    has_proj = (stride != 1) or (in_planes != planes)
    cpad = _round_up(planes, LANE)
    ho = (h - 1) // stride + 1
    wo = (w_sp - 1) // stride + 1
    hw = ho * wo
    rows = n * hw
    budget = _vmem_budget()

    x_bf = x.astype(jnp.bfloat16)

    # ---- conv1 (3x3, stride) + partial BN1 stats (+ fused 1x1 projection) ----
    fast1 = (stride == 1 and not has_proj and wo % 8 == 0
             and _tap_fits(h + 2, w_sp + 2, in_planes, hw, cpad, budget))
    ysc_flat = None
    if fast1:
        xpad = jnp.pad(x_bf, ((0, 0), (1, 1), (1, 1), (0, 0)))
        w1 = _tap_weight(params["w1"], in_planes, cpad)
        y1_flat, st1 = _conv_tap_call(xpad, w1, None, ho=ho, wo=wo, cpad=cpad,
                                      vmem_limit=budget)
    else:
        patches1, _, _ = _im2col(x_bf, 3, stride)
        k1 = patches1.shape[1]
        k1p = _round_up(k1, LANE)
        extra = 0
        if has_proj:
            cin_pad = _round_up(in_planes, LANE)
            extra = cin_pad + cpad
        tm = _choose_tm(rows, k1p, cpad, extra, budget, tm_max)
        rows_pad = _round_up(rows, tm)
        patches1 = jnp.pad(patches1, ((0, rows_pad - rows), (0, k1p - k1)))
        w1m = _flatten_weight(params["w1"], k1p, cpad)
        if has_proj:
            xc = x_bf[:, ::stride, ::stride, :].reshape(rows, in_planes)
            xc = jnp.pad(xc, ((0, rows_pad - rows), (0, cin_pad - in_planes)))
            wsc = params["wsc"].reshape(planes, in_planes).T
            wsc = jnp.pad(wsc, ((0, cin_pad - in_planes),
                                (0, cpad - planes))).astype(jnp.bfloat16)
            y1, ysc, st1 = _conv_stats_call(patches1, w1m, xc, wsc,
                                            tm=tm, vmem_limit=budget)
            ysc_flat = ysc[:rows].reshape(n, hw, cpad)
        else:
            y1, st1 = _conv_stats_call(patches1, w1m, tm=tm, vmem_limit=budget)
        y1_flat = y1[:rows].reshape(n, hw, cpad)

    s1 = jnp.sum(st1, axis=0)  # tiny cross-tile reduction
    coef1 = _bn_coef(s1[0], s1[1], float(rows), params["g1"], params["b1"], cpad)
    coefsc = None
    if has_proj:
        coefsc = _bn_coef(s1[2], s1[3], float(rows),
                          params["gsc"], params["bsc"], cpad)

    # ---- conv2 (3x3, stride 1) with BN1-apply + ReLU fused in-kernel ----
    fast2 = (wo % 8 == 0 and _tap_fits(ho + 2, wo + 2, cpad, hw, cpad, budget))
    if fast2:
        y1sp = jnp.pad(y1_flat.reshape(n, ho, wo, cpad),
                       ((0, 0), (1, 1), (1, 1), (0, 0)))
        w2 = _tap_weight(params["w2"], cpad, cpad)
        y2_flat, st2 = _conv_tap_call(y1sp, w2, coef1, ho=ho, wo=wo, cpad=cpad,
                                      vmem_limit=budget)
    else:
        # TODO(synk): rare fallback (odd widths / huge maps): BN1+ReLU done in XLA.
        out1 = jnp.maximum(y1_flat.astype(jnp.float32) * coef1[0] + coef1[1], 0.0)
        out1 = out1[:, :, :planes].reshape(n, ho, wo, planes).astype(jnp.bfloat16)
        patches2, _, _ = _im2col(out1, 3, 1)
        k2 = patches2.shape[1]
        k2p = _round_up(k2, LANE)
        tm2 = _choose_tm(rows, k2p, cpad, 0, budget, tm_max)
        rows_pad2 = _round_up(rows, tm2)
        patches2 = jnp.pad(patches2, ((0, rows_pad2 - rows), (0, k2p - k2)))
        w2m = _flatten_weight(params["w2"], k2p, cpad)
        y2, st2 = _conv_stats_call(patches2, w2m, tm=tm2, vmem_limit=budget)
        y2_flat = y2[:rows].reshape(n, hw, cpad)

    s2 = jnp.sum(st2, axis=0)
    coef2 = _bn_coef(s2[0], s2[1], float(rows), params["g2"], params["b2"], cpad)

    # ---- final: bn2 apply + shortcut(-BN) + residual add + ReLU ----
    if has_proj:
        residual = ysc_flat                                  # bf16 (n, hw, cpad)
    else:
        residual = jnp.pad(x.reshape(n, hw, planes),
                           ((0, 0), (0, 0), (0, cpad - planes)))
    out_flat = _final_call(y2_flat, coef2, residual, coefsc,
                           has_proj=has_proj, vmem_limit=budget)

    out = out_flat[:, :, :planes].reshape(n, ho, wo, planes)
    return jnp.transpose(out, (0, 3, 1, 2))  # back to NCHW


# ----------------------------------------------------------------------------
# Pure-JAX reference (for correctness check)
# ----------------------------------------------------------------------------
def _bn_ref(x, g, b):
    m = jnp.mean(x, axis=(0, 1, 2), keepdims=True)
    v = jnp.mean((x - m) ** 2, axis=(0, 1, 2), keepdims=True)
    return g * (x - m) * jax.lax.rsqrt(v + EPS) + b


def _conv_ref(x_nhwc, w_oihw, stride, pad):
    return jax.lax.conv_general_dilated(
        x_nhwc,
        jnp.transpose(w_oihw, (2, 3, 1, 0)),
        window_strides=(stride, stride),
        padding=((pad, pad), (pad, pad)),
        dimension_numbers=("NHWC", "HWIO", "NHWC"),
    )


def ref_forward(x_nchw, params, *, stride, in_planes, planes):
    x = jnp.transpose(x_nchw, (0, 2, 3, 1)).astype(jnp.float32)
    out = jax.nn.relu(_bn_ref(_conv_ref(x, params["w1"], stride, 1),
                              params["g1"], params["b1"]))
    out = _bn_ref(_conv_ref(out, params["w2"], 1, 1), params["g2"], params["b2"])
    if stride != 1 or in_planes != planes:
        sc = _bn_ref(_conv_ref(x, params["wsc"], stride, 0),
                     params["gsc"], params["bsc"])
    else:
        sc = x
    return jnp.transpose(jax.nn.relu(out + sc), (0, 3, 1, 2))


# ----------------------------------------------------------------------------
# Deterministic parameter init (shapes from BasicBlock.__init__)
# ----------------------------------------------------------------------------
def init_params(key, in_planes, planes, stride):
    ks = jax.random.split(key, 9)
    p = {
        "w1": 0.1 * jax.random.normal(ks[0], (planes, in_planes, 3, 3), jnp.float32),
        "g1": 1.0 + 0.1 * jax.random.normal(ks[1], (planes,), jnp.float32),
        "b1": 0.1 * jax.random.normal(ks[2], (planes,), jnp.float32),
        "w2": 0.1 * jax.random.normal(ks[3], (planes, planes, 3, 3), jnp.float32),
        "g2": 1.0 + 0.1 * jax.random.normal(ks[4], (planes,), jnp.float32),
        "b2": 0.1 * jax.random.normal(ks[5], (planes,), jnp.float32),
    }
    if stride != 1 or in_planes != planes:
        p["wsc"] = 0.1 * jax.random.normal(ks[6], (planes, in_planes, 1, 1), jnp.float32)
        p["gsc"] = 1.0 + 0.1 * jax.random.normal(ks[7], (planes,), jnp.float32)
        p["bsc"] = 0.1 * jax.random.normal(ks[8], (planes,), jnp.float32)
    return p


if __name__ == "__main__":
    key = jax.random.PRNGKey(0)

    # (in_planes, planes, stride, N, H, W)
    configs = [
        (4, 8, 2, 2, 16, 16),   # projection shortcut: conv1 im2col(+proj), conv2 tap path
        (8, 8, 1, 2, 16, 16),   # identity shortcut:   both convs tap path
    ]
    for idx, (in_planes, planes, stride, n, h, w) in enumerate(configs):
        key, kx, kp = jax.random.split(key, 3)
        x = jax.random.normal(kx, (n, in_planes, h, w), jnp.float32)  # NCHW
        params = init_params(kp, in_planes, planes, stride)

        fwd = jax.jit(functools.partial(
            basic_block_forward, stride=stride, in_planes=in_planes,
            planes=planes))
        out = jax.block_until_ready(fwd(x, params))

        ref = ref_forward(x, params, stride=stride,
                          in_planes=in_planes, planes=planes)
        assert out.shape == ref.shape == (n, planes, h // stride, w // stride), out.shape
        max_err = float(jnp.max(jnp.abs(out - ref)))
        # Tolerance reflects bf16 MXU inputs + bf16 intermediates (f32 accumulation).
        assert jnp.allclose(out, ref, atol=3e-2, rtol=2e-2), (idx, max_err)

    print("KERNEL_OK")
</pallas_src>

<mosaic_0001>
module attributes {stable_mosaic.version = 11 : i64} {
  func.func @_matmul_stats_kernel(%arg0: i32, %arg1: memref<64x128xbf16, #tpu.memory_space<vmem>>, %arg2: memref<128x128xbf16, #tpu.memory_space<vmem>>, %arg3: memref<64x128xbf16, #tpu.memory_space<vmem>>, %arg4: memref<128x128xbf16, #tpu.memory_space<vmem>>, %arg5: memref<64x128xbf16, #tpu.memory_space<vmem>>, %arg6: memref<64x128xbf16, #tpu.memory_space<vmem>>, %arg7: memref<1x8x128xf32, #tpu.memory_space<vmem>>) attributes {dimension_semantics = [#tpu.dimension_semantics<parallel>], iteration_bounds = array<i64: 2>, scalar_prefetch = 0 : i64, scratch_operands = 0 : i64, tpu.core_type = #tpu.core_type<tc>, window_params = [{transform_indices = @transform_0, window_bounds = array<i64: 64, 128>}, {pipeline_mode = #tpu.pipeline_mode<synchronous>, transform_indices = @transform_1, window_bounds = array<i64: 128, 128>}, {transform_indices = @transform_2, window_bounds = array<i64: 64, 128>}, {pipeline_mode = #tpu.pipeline_mode<synchronous>, transform_indices = @transform_3, window_bounds = array<i64: 128, 128>}, {transform_indices = @transform_4, window_bounds = array<i64: 64, 128>}, {transform_indices = @transform_5, window_bounds = array<i64: 64, 128>}, {transform_indices = @transform_6, window_bounds = array<i64: 1, 8, 128>}]} {
    %c0 = arith.constant 0 : index
    %c0_0 = arith.constant 0 : index
    %0 = vector.load %arg1[%c0, %c0_0] : memref<64x128xbf16, #tpu.memory_space<vmem>>, vector<64x128xbf16>
    %c0_1 = arith.constant 0 : index
    %c0_2 = arith.constant 0 : index
    %1 = vector.load %arg2[%c0_1, %c0_2] : memref<128x128xbf16, #tpu.memory_space<vmem>>, vector<128x128xbf16>
    %cst = arith.constant dense<0.000000e+00> : vector<64x128xf32>
    %2 = tpu.matmul %0, %1, %cst {dimension_numbers = #tpu.dot_dimension_numbers<[1], [0], [0], [1], [0, 0, 1, 1], [], []>} : vector<64x128xbf16>, vector<128x128xbf16>, vector<64x128xf32> -> vector<64x128xf32>
    %3 = arith.truncf %2 : vector<64x128xf32> to vector<64x128xbf16>
    %c0_3 = arith.constant 0 : index
    %c0_4 = arith.constant 0 : index
    %4 = vector.load %arg5[%c0_3, %c0_4] : memref<64x128xbf16, #tpu.memory_space<vmem>>, vector<64x128xbf16>
    tpu.vector_store %arg5[%c0_3, %c0_4], %3 {strides = array<i32>} : memref<64x128xbf16, #tpu.memory_space<vmem>>, vector<64x128xbf16>,
    %5 = tpu.iota {dimensions = array<i32: 0>} : vector<8x128xi32>
    %c0_i32 = arith.constant 0 : i32
    %6 = vector.broadcast %c0_i32 : i32 to vector<8x128xi32>
    %7 = arith.cmpi eq, %5, %6 : vector<8x128xi32>
    %cst_5 = arith.constant dense<0.000000e+00> : vector<128xf32>
    %8 = vector.multi_reduction <add>, %2, %cst_5 [0] : vector<64x128xf32> to vector<128xf32>
    %9 = vector.shape_cast %8 : vector<128xf32> to vector<1x128xf32>
    %cst_6 = arith.constant 0.000000e+00 : f32
    %10 = vector.shape_cast %9 : vector<1x128xf32> to vector<1x128xf32>
    %11 = vector.broadcast %10 : vector<1x128xf32> to vector<8x128xf32>
    %12 = vector.broadcast %cst_6 : f32 to vector<8x128xf32>
    %13 = arith.select %7, %11, %12 : vector<8x128xi1>, vector<8x128xf32>
    %c1_i32 = arith.constant 1 : i32
    %14 = vector.broadcast %c1_i32 : i32 to vector<8x128xi32>
    %15 = arith.cmpi eq, %5, %14 : vector<8x128xi32>
    %16 = arith.mulf %2, %2 : vector<64x128xf32>
    %cst_7 = arith.constant dense<0.000000e+00> : vector<128xf32>
    %17 = vector.multi_reduction <add>, %16, %cst_7 [0] : vector<64x128xf32> to vector<128xf32>
    %18 = vector.shape_cast %17 : vector<128xf32> to vector<1x128xf32>
    %cst_8 = arith.constant 0.000000e+00 : f32
    %19 = vector.shape_cast %18 : vector<1x128xf32> to vector<1x128xf32>
    %20 = vector.broadcast %19 : vector<1x128xf32> to vector<8x128xf32>
    %21 = vector.broadcast %cst_8 : f32 to vector<8x128xf32>
    %22 = arith.select %15, %20, %21 : vector<8x128xi1>, vector<8x128xf32>
    %23 = arith.addf %13, %22 : vector<8x128xf32>
    %c0_9 = arith.constant 0 : index
    %c0_10 = arith.constant 0 : index
    %24 = vector.load %arg3[%c0_9, %c0_10] : memref<64x128xbf16, #tpu.memory_space<vmem>>, vector<64x128xbf16>
    %c0_11 = arith.constant 0 : index
    %c0_12 = arith.constant 0 : index
    %25 = vector.load %arg4[%c0_11, %c0_12] : memref<128x128xbf16, #tpu.memory_space<vmem>>, vector<128x128xbf16>
    %cst_13 = arith.constant dense<0.000000e+00> : vector<64x128xf32>
    %26 = tpu.matmul %24, %25, %cst_13 {dimension_numbers = #tpu.dot_dimension_numbers<[1], [0], [0], [1], [0, 0, 1, 1], [], []>} : vector<64x128xbf16>, vector<128x128xbf16>, vector<64x128xf32> -> vector<64x128xf32>
    %27 = arith.truncf %26 : vector<64x128xf32> to vector<64x128xbf16>
    %c0_14 = arith.constant 0 : index
    %c0_15 = arith.constant 0 : index
    %28 = vector.load %arg6[%c0_14, %c0_15] : memref<64x128xbf16, #tpu.memory_space<vmem>>, vector<64x128xbf16>
    tpu.vector_store %arg6[%c0_14, %c0_15], %27 {strides = array<i32>} : memref<64x128xbf16, #tpu.memory_space<vmem>>, vector<64x128xbf16>,
    %c2_i32 = arith.constant 2 : i32
    %29 = vector.broadcast %c2_i32 : i32 to vector<8x128xi32>
    %30 = arith.cmpi eq, %5, %29 : vector<8x128xi32>
    %cst_16 = arith.constant dense<0.000000e+00> : vector<128xf32>
    %31 = vector.multi_reduction <add>, %26, %cst_16 [0] : vector<64x128xf32> to vector<128xf32>
    %32 = vector.shape_cast %31 : vector<128xf32> to vector<1x128xf32>
    %cst_17 = arith.constant 0.000000e+00 : f32
    %33 = vector.shape_cast %32 : vector<1x128xf32> to vector<1x128xf32>
    %34 = vector.broadcast %33 : vector<1x128xf32> to vector<8x128xf32>
    %35 = vector.broadcast %cst_17 : f32 to vector<8x128xf32>
    %36 = arith.select %30, %34, %35 : vector<8x128xi1>, vector<8x128xf32>
    %37 = arith.addf %23, %36 : vector<8x128xf32>
    %c3_i32 = arith.constant 3 : i32
    %38 = vector.broadcast %c3_i32 : i32 to vector<8x128xi32>
    %39 = arith.cmpi eq, %5, %38 : vector<8x128xi32>
    %40 = arith.mulf %26, %26 : vector<64x128xf32>
    %cst_18 = arith.constant dense<0.000000e+00> : vector<128xf32>
    %41 = vector.multi_reduction <add>, %40, %cst_18 [0] : vector<64x128xf32> to vector<128xf32>
    %42 = vector.shape_cast %41 : vector<128xf32> to vector<1x128xf32>
    %cst_19 = arith.constant 0.000000e+00 : f32
    %43 = vector.shape_cast %42 : vector<1x128xf32> to vector<1x128xf32>
    %44 = vector.broadcast %43 : vector<1x128xf32> to vector<8x128xf32>
    %45 = vector.broadcast %cst_19 : f32 to vector<8x128xf32>
    %46 = arith.select %39, %44, %45 : vector<8x128xi1>, vector<8x128xf32>
    %47 = arith.addf %37, %46 : vector<8x128xf32>
    %c0_20 = arith.constant 0 : index
    %c0_21 = arith.constant 0 : index
    %c0_22 = arith.constant 0 : index
    %48 = vector.load %arg7[%c0_20, %c0_21, %c0_22] : memref<1x8x128xf32, #tpu.memory_space<vmem>>, vector<1x8x128xf32>
    %49 = vector.shape_cast %48 : vector<1x8x128xf32> to vector<8x128xf32>
    %50 = vector.shape_cast %47 : vector<8x128xf32> to vector<1x8x128xf32>
    tpu.vector_store %arg7[%c0_20, %c0_21, %c0_22], %50 {strides = array<i32>} : memref<1x8x128xf32, #tpu.memory_space<vmem>>, vector<1x8x128xf32>,
    return
  }
  func.func @transform_0(%arg0: i32) -> (i32, i32) {
    %c0_i32 = arith.constant 0 : i32
    %c0_i32_0 = arith.constant 0 : i32
    return %arg0, %c0_i32 : i32, i32
  }
  func.func @transform_1(%arg0: i32) -> (i32, i32) {
    %c0_i32 = arith.constant 0 : i32
    %c0_i32_0 = arith.constant 0 : i32
    %c0_i32_1 = arith.constant 0 : i32
    return %c0_i32, %c0_i32_0 : i32, i32
  }
  func.func @transform_2(%arg0: i32) -> (i32, i32) {
    %c0_i32 = arith.constant 0 : i32
    %c0_i32_0 = arith.constant 0 : i32
    return %arg0, %c0_i32 : i32, i32
  }
  func.func @transform_3(%arg0: i32) -> (i32, i32) {
    %c0_i32 = arith.constant 0 : i32
    %c0_i32_0 = arith.constant 0 : i32
    %c0_i32_1 = arith.constant 0 : i32
    return %c0_i32, %c0_i32_0 : i32, i32
  }
  func.func @transform_4(%arg0: i32) -> (i32, i32) {
    %c0_i32 = arith.constant 0 : i32
    %c0_i32_0 = arith.constant 0 : i32
    return %arg0, %c0_i32 : i32, i32
  }
  func.func @transform_5(%arg0: i32) -> (i32, i32) {
    %c0_i32 = arith.constant 0 : i32
    %c0_i32_0 = arith.constant 0 : i32
    return %arg0, %c0_i32 : i32, i32
  }
  func.func @transform_6(%arg0: i32) -> (i32, i32, i32) {
    %c0_i32 = arith.constant 0 : i32
    %c0_i32_0 = arith.constant 0 : i32
    %c0_i32_1 = arith.constant 0 : i32
    return %arg0, %c0_i32, %c0_i32_0 : i32, i32, i32
  }
}

module attributes {stable_mosaic.version = 11 : i64} {
  func.func @_conv3x3_tap_kernel(%arg0: i32, %arg1: memref<1x10x10x128xbf16, #tpu.memory_space<vmem>>, %arg2: memref<9x128x128xbf16, #tpu.memory_space<vmem>>, %arg3: memref<2x128xf32, #tpu.memory_space<vmem>>, %arg4: memref<1x64x128xbf16, #tpu.memory_space<vmem>>, %arg5: memref<1x8x128xf32, #tpu.memory_space<vmem>>, %arg6: memref<64x128xf32, #tpu.memory_space<vmem>>) attributes {dimension_semantics = [#tpu.dimension_semantics<parallel>], iteration_bounds = array<i64: 2>, scalar_prefetch = 0 : i64, scratch_operands = 1 : i64, tpu.core_type = #tpu.core_type<tc>, window_params = [{transform_indices = @transform_0, window_bounds = array<i64: 1, 10, 10, 128>}, {pipeline_mode = #tpu.pipeline_mode<synchronous>, transform_indices = @transform_1, window_bounds = array<i64: 9, 128, 128>}, {pipeline_mode = #tpu.pipeline_mode<synchronous>, transform_indices = @transform_2, window_bounds = array<i64: 2, 128>}, {transform_indices = @transform_3, window_bounds = array<i64: 1, 64, 128>}, {transform_indices = @transform_4, window_bounds = array<i64: 1, 8, 128>}]} {
    %c0 = arith.constant 0 : index
    %c0_0 = arith.constant 0 : index
    %0 = vector.load %arg3[%c0, %c0_0] : memref<2x128xf32, #tpu.memory_space<vmem>>, vector<1x128xf32>
    %c1 = arith.constant 1 : index
    %c0_1 = arith.constant 0 : index
    %1 = vector.load %arg3[%c1, %c0_1] : memref<2x128xf32, #tpu.memory_space<vmem>>, vector<1x128xf32>
    %2 = tpu.iota {dimensions = array<i32: 0>} : vector<8x8x128xi32>
    %3 = tpu.iota {dimensions = array<i32: 1>} : vector<8x8x128xi32>
    %c0_2 = arith.constant 0 : index
    %c0_3 = arith.constant 0 : index
    %c0_4 = arith.constant 0 : index
    %c0_5 = arith.constant 0 : index
    %4 = vector.load %arg1[%c0_2, %c0_3, %c0_4, %c0_5] : memref<1x10x10x128xbf16, #tpu.memory_space<vmem>>, vector<1x8x8x128xbf16>
    %5 = vector.shape_cast %4 : vector<1x8x8x128xbf16> to vector<8x8x128xbf16>
    %6 = arith.extf %5 : vector<8x8x128xbf16> to vector<8x8x128xf32>
    %7 = vector.shape_cast %0 : vector<1x128xf32> to vector<1x1x128xf32>
    %8 = vector.broadcast %7 : vector<1x1x128xf32> to vector<8x8x128xf32>
    %9 = arith.mulf %6, %8 : vector<8x8x128xf32>
    %10 = vector.shape_cast %1 : vector<1x128xf32> to vector<1x1x128xf32>
    %11 = vector.broadcast %10 : vector<1x1x128xf32> to vector<8x8x128xf32>
    %12 = arith.addf %9, %11 : vector<8x8x128xf32>
    %cst = arith.constant 0.000000e+00 : f32
    %13 = vector.broadcast %cst : f32 to vector<8x8x128xf32>
    %14 = arith.maximumf %12, %13 : vector<8x8x128xf32>
    %c0_i32 = arith.constant 0 : i32
    %15 = vector.broadcast %c0_i32 : i32 to vector<8x8x128xi32>
    %16 = arith.addi %2, %15 : vector<8x8x128xi32>
    %c1_i32 = arith.constant 1 : i32
    %17 = vector.broadcast %c1_i32 : i32 to vector<8x8x128xi32>
    %18 = arith.cmpi sge, %16, %17 : vector<8x8x128xi32>
    %c0_i32_6 = arith.constant 0 : i32
    %19 = vector.broadcast %c0_i32_6 : i32 to vector<8x8x128xi32>
    %20 = arith.addi %2, %19 : vector<8x8x128xi32>
    %c8_i32 = arith.constant 8 : i32
    %21 = vector.broadcast %c8_i32 : i32 to vector<8x8x128xi32>
    %22 = arith.cmpi sle, %20, %21 : vector<8x8x128xi32>
    %23 = arith.andi %18, %22 : vector<8x8x128xi1>
    %c0_i32_7 = arith.constant 0 : i32
    %24 = vector.broadcast %c0_i32_7 : i32 to vector<8x8x128xi32>
    %25 = arith.addi %3, %24 : vector<8x8x128xi32>
    %c1_i32_8 = arith.constant 1 : i32
    %26 = vector.broadcast %c1_i32_8 : i32 to vector<8x8x128xi32>
    %27 = arith.cmpi sge, %25, %26 : vector<8x8x128xi32>
    %28 = arith.andi %23, %27 : vector<8x8x128xi1>
    %c0_i32_9 = arith.constant 0 : i32
    %29 = vector.broadcast %c0_i32_9 : i32 to vector<8x8x128xi32>
    %30 = arith.addi %3, %29 : vector<8x8x128xi32>
    %c8_i32_10 = arith.constant 8 : i32
    %31 = vector.broadcast %c8_i32_10 : i32 to vector<8x8x128xi32>
    %32 = arith.cmpi sle, %30, %31 : vector<8x8x128xi32>
    %33 = arith.andi %28, %32 : vector<8x8x128xi1>
    %cst_11 = arith.constant 0.000000e+00 : f32
    %34 = vector.broadcast %cst_11 : f32 to vector<8x8x128xf32>
    %35 = arith.select %33, %14, %34 : vector<8x8x128xi1>, vector<8x8x128xf32>
    %36 = vector.shape_cast %35 : vector<8x8x128xf32> to vector<64x128xf32>
    %37 = arith.truncf %36 : vector<64x128xf32> to vector<64x128xbf16>
    %c0_12 = arith.constant 0 : index
    %c0_13 = arith.constant 0 : index
    %c0_14 = arith.constant 0 : index
    %38 = vector.load %arg2[%c0_12, %c0_13, %c0_14] : memref<9x128x128xbf16, #tpu.memory_space<vmem>>, vector<1x128x128xbf16>
    %39 = vector.shape_cast %38 : vector<1x128x128xbf16> to vector<128x128xbf16>
    %cst_15 = arith.constant dense<0.000000e+00> : vector<64x128xf32>
    %40 = tpu.matmul %37, %39, %cst_15 {dimension_numbers = #tpu.dot_dimension_numbers<[1], [0], [0], [1], [0, 0, 1, 1], [], []>} : vector<64x128xbf16>, vector<128x128xbf16>, vector<64x128xf32> -> vector<64x128xf32>
    %c0_16 = arith.constant 0 : index
    %c0_17 = arith.constant 0 : index
    %41 = vector.load %arg6[%c0_16, %c0_17] : memref<64x128xf32, #tpu.memory_space<vmem>>, vector<64x128xf32>
    tpu.vector_store %arg6[%c0_16, %c0_17], %40 {strides = array<i32>} : memref<64x128xf32, #tpu.memory_space<vmem>>, vector<64x128xf32>,
    %c0_18 = arith.constant 0 : index
    %c0_19 = arith.constant 0 : index
    %c1_20 = arith.constant 1 : index
    %c0_21 = arith.constant 0 : index
    %42 = vector.load %arg1[%c0_18, %c0_19, %c1_20, %c0_21] : memref<1x10x10x128xbf16, #tpu.memory_space<vmem>>, vector<1x8x8x128xbf16>
    %43 = vector.shape_cast %42 : vector<1x8x8x128xbf16> to vector<8x8x128xbf16>
    %44 = arith.extf %43 : vector<8x8x128xbf16> to vector<8x8x128xf32>
    %45 = vector.shape_cast %0 : vector<1x128xf32> to vector<1x1x128xf32>
    %46 = vector.broadcast %45 : vector<1x1x128xf32> to vector<8x8x128xf32>
    %47 = arith.mulf %44, %46 : vector<8x8x128xf32>
    %48 = vector.shape_cast %1 : vector<1x128xf32> to vector<1x1x128xf32>
    %49 = vector.broadcast %48 : vector<1x1x128xf32> to vector<8x8x128xf32>
    %50 = arith.addf %47, %49 : vector<8x8x128xf32>
    %cst_22 = arith.constant 0.000000e+00 : f32
    %51 = vector.broadcast %cst_22 : f32 to vector<8x8x128xf32>
    %52 = arith.maximumf %50, %51 : vector<8x8x128xf32>
    %c0_i32_23 = arith.constant 0 : i32
    %53 = vector.broadcast %c0_i32_23 : i32 to vector<8x8x128xi32>
    %54 = arith.addi %2, %53 : vector<8x8x128xi32>
    %c1_i32_24 = arith.constant 1 : i32
    %55 = vector.broadcast %c1_i32_24 : i32 to vector<8x8x128xi32>
    %56 = arith.cmpi sge, %54, %55 : vector<8x8x128xi32>
    %c0_i32_25 = arith.constant 0 : i32
    %57 = vector.broadcast %c0_i32_25 : i32 to vector<8x8x128xi32>
    %58 = arith.addi %2, %57 : vector<8x8x128xi32>
    %c8_i32_26 = arith.constant 8 : i32
    %59 = vector.broadcast %c8_i32_26 : i32 to vector<8x8x128xi32>
    %60 = arith.cmpi sle, %58, %59 : vector<8x8x128xi32>
    %61 = arith.andi %56, %60 : vector<8x8x128xi1>
    %c1_i32_27 = arith.constant 1 : i32
    %62 = vector.broadcast %c1_i32_27 : i32 to vector<8x8x128xi32>
    %63 = arith.addi %3, %62 : vector<8x8x128xi32>
    %c1_i32_28 = arith.constant 1 : i32
    %64 = vector.broadcast %c1_i32_28 : i32 to vector<8x8x128xi32>
    %65 = arith.cmpi sge, %63, %64 : vector<8x8x128xi32>
    %66 = arith.andi %61, %65 : vector<8x8x128xi1>
    %c1_i32_29 = arith.constant 1 : i32
    %67 = vector.broadcast %c1_i32_29 : i32 to vector<8x8x128xi32>
    %68 = arith.addi %3, %67 : vector<8x8x128xi32>
    %c8_i32_30 = arith.constant 8 : i32
    %69 = vector.broadcast %c8_i32_30 : i32 to vector<8x8x128xi32>
    %70 = arith.cmpi sle, %68, %69 : vector<8x8x128xi32>
    %71 = arith.andi %66, %70 : vector<8x8x128xi1>
    %cst_31 = arith.constant 0.000000e+00 : f32
    %72 = vector.broadcast %cst_31 : f32 to vector<8x8x128xf32>
    %73 = arith.select %71, %52, %72 : vector<8x8x128xi1>, vector<8x8x128xf32>
    %74 = vector.shape_cast %73 : vector<8x8x128xf32> to vector<64x128xf32>
    %75 = arith.truncf %74 : vector<64x128xf32> to vector<64x128xbf16>
    %c1_32 = arith.constant 1 : index
    %c0_33 = arith.constant 0 : index
    %c0_34 = arith.constant 0 : index
    %76 = vector.load %arg2[%c1_32, %c0_33, %c0_34] : memref<9x128x128xbf16, #tpu.memory_space<vmem>>, vector<1x128x128xbf16>
    %77 = vector.shape_cast %76 : vector<1x128x128xbf16> to vector<128x128xbf16>
    %cst_35 = arith.constant dense<0.000000e+00> : vector<64x128xf32>
    %78 = tpu.matmul %75, %77, %cst_35 {dimension_numbers = #tpu.dot_dimension_numbers<[1], [0], [0], [1], [0, 0, 1, 1], [], []>} : vector<64x128xbf16>, vector<128x128xbf16>, vector<64x128xf32> -> vector<64x128xf32>
    %c0_36 = arith.constant 0 : index
    %c0_37 = arith.constant 0 : index
    %79 = vector.load %arg6[%c0_36, %c0_37] : memref<64x128xf32, #tpu.memory_space<vmem>>, vector<64x128xf32>
    %80 = arith.addf %79, %78 : vector<64x128xf32>
    %c0_38 = arith.constant 0 : index
    %c0_39 = arith.constant 0 : index
    %81 = vector.load %arg6[%c0_38, %c0_39] : memref<64x128xf32, #tpu.memory_space<vmem>>, vector<64x128xf32>
    tpu.vector_store %arg6[%c0_38, %c0_39], %80 {strides = array<i32>} : memref<64x128xf32, #tpu.memory_space<vmem>>, vector<64x128xf32>,
    %c0_40 = arith.constant 0 : index
    %c0_41 = arith.constant 0 : index
    %c2 = arith.constant 2 : index
    %c0_42 = arith.constant 0 : index
    %82 = vector.load %arg1[%c0_40, %c0_41, %c2, %c0_42] : memref<1x10x10x128xbf16, #tpu.memory_space<vmem>>, vector<1x8x8x128xbf16>
    %83 = vector.shape_cast %82 : vector<1x8x8x128xbf16> to vector<8x8x128xbf16>
    %84 = arith.extf %83 : vector<8x8x128xbf16> to vector<8x8x128xf32>
    %85 = vector.shape_cast %0 : vector<1x128xf32> to vector<1x1x128xf32>
    %86 = vector.broadcast %85 : vector<1x1x128xf32> to vector<8x8x128xf32>
    %87 = arith.mulf %84, %86 : vector<8x8x128xf32>
    %88 = vector.shape_cast %1 : vector<1x128xf32> to vector<1x1x128xf32>
    %89 = vector.broadcast %88 : vector<1x1x128xf32> to vector<8x8x128xf32>
    %90 = arith.addf %87, %89 : vector<8x8x128xf32>
    %cst_43 = arith.constant 0.000000e+00 : f32
    %91 = vector.broadcast %cst_43 : f32 to vector<8x8x128xf32>
    %92 = arith.maximumf %90, %91 : vector<8x8x128xf32>
    %c0_i32_44 = arith.constant 0 : i32
    %93 = vector.broadcast %c0_i32_44 : i32 to vector<8x8x128xi32>
    %94 = arith.addi %2, %93 : vector<8x8x128xi32>
    %c1_i32_45 = arith.constant 1 : i32
    %95 = vector.broadcast %c1_i32_45 : i32 to vector<8x8x128xi32>
    %96 = arith.cmpi sge, %94, %95 : vector<8x8x128xi32>
    %c0_i32_46 = arith.constant 0 : i32
    %97 = vector.broadcast %c0_i32_46 : i32 to vector<8x8x128xi32>
    %98 = arith.addi %2, %97 : vector<8x8x128xi32>
    %c8_i32_47 = arith.constant 8 : i32
    %99 = vector.broadcast %c8_i32_47 : i32 to vector<8x8x128xi32>
    %100 = arith.cmpi sle, %98, %99 : vector<8x8x128xi32>
    %101 = arith.andi %96, %100 : vector<8x8x128xi1>
    %c2_i32 = arith.constant 2 : i32
    %102 = vector.broadcast %c2_i32 : i32 to vector<8x8x128xi32>
    %103 = arith.addi %3, %102 : vector<8x8x128xi32>
    %c1_i32_48 = arith.constant 1 : i32
    %104 = vector.broadcast %c1_i32_48 : i32 to vector<8x8x128xi32>
    %105 = arith.cmpi sge, %103, %104 : vector<8x8x128xi32>
    %106 = arith.andi %101, %105 : vector<8x8x128xi1>
    %c2_i32_49 = arith.constant 2 : i32
    %107 = vector.broadcast %c2_i32_49 : i32 to vector<8x8x128xi32>
    %108 = arith.addi %3, %107 : vector<8x8x128xi32>
    %c8_i32_50 = arith.constant 8 : i32
    %109 = vector.broadcast %c8_i32_50 : i32 to vector<8x8x128xi32>
    %110 = arith.cmpi sle, %108, %109 : vector<8x8x128xi32>
    %111 = arith.andi %106, %110 : vector<8x8x128xi1>
    %cst_51 = arith.constant 0.000000e+00 : f32
    %112 = vector.broadcast %cst_51 : f32 to vector<8x8x128xf32>
    %113 = arith.select %111, %92, %112 : vector<8x8x128xi1>, vector<8x8x128xf32>
    %114 = vector.shape_cast %113 : vector<8x8x128xf32> to vector<64x128xf32>
    %115 = arith.truncf %114 : vector<64x128xf32> to vector<64x128xbf16>
    %c2_52 = arith.constant 2 : index
    %c0_53 = arith.constant 0 : index
    %c0_54 = arith.constant 0 : index
    %116 = vector.load %arg2[%c2_52, %c0_53, %c0_54] : memref<9x128x128xbf16, #tpu.memory_space<vmem>>, vector<1x128x128xbf16>
    %117 = vector.shape_cast %116 : vector<1x128x128xbf16> to vector<128x128xbf16>
    %cst_55 = arith.constant dense<0.000000e+00> : vector<64x128xf32>
    %118 = tpu.matmul %115, %117, %cst_55 {dimension_numbers = #tpu.dot_dimension_numbers<[1], [0], [0], [1], [0, 0, 1, 1], [], []>} : vector<64x128xbf16>, vector<128x128xbf16>, vector<64x128xf32> -> vector<64x128xf32>
    %c0_56 = arith.constant 0 : index
    %c0_57 = arith.constant 0 : index
    %119 = vector.load %arg6[%c0_56, %c0_57] : memref<64x128xf32, #tpu.memory_space<vmem>>, vector<64x128xf32>
    %120 = arith.addf %119, %118 : vector<64x128xf32>
    %c0_58 = arith.constant 0 : index
    %c0_59 = arith.constant 0 : index
    %121 = vector.load %arg6[%c0_58, %c0_59] : memref<64x128xf32, #tpu.memory_space<vmem>>, vector<64x128xf32>
    tpu.vector_store %arg6[%c0_58, %c0_59], %120 {strides = array<i32>} : memref<64x128xf32, #tpu.memory_space<vmem>>, vector<64x128xf32>,
    %c0_60 = arith.constant 0 : index
    %c1_61 = arith.constant 1 : index
    %c0_62 = arith.constant 0 : index
    %c0_63 = arith.constant 0 : index
    %122 = vector.load %arg1[%c0_60, %c1_61, %c0_62, %c0_63] : memref<1x10x10x128xbf16, #tpu.memory_space<vmem>>, vector<1x8x8x128xbf16>
    %123 = vector.shape_cast %122 : vector<1x8x8x128xbf16> to vector<8x8x128xbf16>
    %124 = arith.extf %123 : vector<8x8x128xbf16> to vector<8x8x128xf32>
    %125 = vector.shape_cast %0 : vector<1x128xf32> to vector<1x1x128xf32>
    %126 = vector.broadcast %125 : vector<1x1x128xf32> to vector<8x8x128xf32>
    %127 = arith.mulf %124, %126 : vector<8x8x128xf32>
    %128 = vector.shape_cast %1 : vector<1x128xf32> to vector<1x1x128xf32>
    %129 = vector.broadcast %128 : vector<1x1x128xf32> to vector<8x8x128xf32>
    %130 = arith.addf %127, %129 : vector<8x8x128xf32>
    %cst_64 = arith.constant 0.000000e+00 : f32
    %131 = vector.broadcast %cst_64 : f32 to vector<8x8x128xf32>
    %132 = arith.maximumf %130, %131 : vector<8x8x128xf32>
    %c1_i32_65 = arith.constant 1 : i32
    %133 = vector.broadcast %c1_i32_65 : i32 to vector<8x8x128xi32>
    %134 = arith.addi %2, %133 : vector<8x8x128xi32>
    %c1_i32_66 = arith.constant 1 : i32
    %135 = vector.broadcast %c1_i32_66 : i32 to vector<8x8x128xi32>
    %136 = arith.cmpi sge, %134, %135 : vector<8x8x128xi32>
    %c1_i32_67 = arith.constant 1 : i32
    %137 = vector.broadcast %c1_i32_67 : i32 to vector<8x8x128xi32>
    %138 = arith.addi %2, %137 : vector<8x8x128xi32>
    %c8_i32_68 = arith.constant 8 : i32
    %139 = vector.broadcast %c8_i32_68 : i32 to vector<8x8x128xi32>
    %140 = arith.cmpi sle, %138, %139 : vector<8x8x128xi32>
    %141 = arith.andi %136, %140 : vector<8x8x128xi1>
    %c0_i32_69 = arith.constant 0 : i32
    %142 = vector.broadcast %c0_i32_69 : i32 to vector<8x8x128xi32>
    %143 = arith.addi %3, %142 : vector<8x8x128xi32>
    %c1_i32_70 = arith.constant 1 : i32
    %144 = vector.broadcast %c1_i32_70 : i32 to vector<8x8x128xi32>
    %145 = arith.cmpi sge, %143, %144 : vector<8x8x128xi32>
    %146 = arith.andi %141, %145 : vector<8x8x128xi1>
    %c0_i32_71 = arith.constant 0 : i32
    %147 = vector.broadcast %c0_i32_71 : i32 to vector<8x8x128xi32>
    %148 = arith.addi %3, %147 : vector<8x8x128xi32>
    %c8_i32_72 = arith.constant 8 : i32
    %149 = vector.broadcast %c8_i32_72 : i32 to vector<8x8x128xi32>
    %150 = arith.cmpi sle, %148, %149 : vector<8x8x128xi32>
    %151 = arith.andi %146, %150 : vector<8x8x128xi1>
    %cst_73 = arith.constant 0.000000e+00 : f32
    %152 = vector.broadcast %cst_73 : f32 to vector<8x8x128xf32>
    %153 = arith.select %151, %132, %152 : vector<8x8x128xi1>, vector<8x8x128xf32>
    %154 = vector.shape_cast %153 : vector<8x8x128xf32> to vector<64x128xf32>
    %155 = arith.truncf %154 : vector<64x128xf32> to vector<64x128xbf16>
    %c3 = arith.constant 3 : index
    %c0_74 = arith.constant 0 : index
    %c0_75 = arith.constant 0 : index
    %156 = vector.load %arg2[%c3, %c0_74, %c0_75] : memref<9x128x128xbf16, #tpu.memory_space<vmem>>, vector<1x128x128xbf16>
    %157 = vector.shape_cast %156 : vector<1x128x128xbf16> to vector<128x128xbf16>
    %cst_76 = arith.constant dense<0.000000e+00> : vector<64x128xf32>
    %158 = tpu.matmul %155, %157, %cst_76 {dimension_numbers = #tpu.dot_dimension_numbers<[1], [0], [0], [1], [0, 0, 1, 1], [], []>} : vector<64x128xbf16>, vector<128x128xbf16>, vector<64x128xf32> -> vector<64x128xf32>
    %c0_77 = arith.constant 0 : index
    %c0_78 = arith.constant 0 : index
    %159 = vector.load %arg6[%c0_77, %c0_78] : memref<64x128xf32, #tpu.memory_space<vmem>>, vector<64x128xf32>
    %160 = arith.addf %159, %158 : vector<64x128xf32>
    %c0_79 = arith.constant 0 : index
    %c0_80 = arith.constant 0 : index
    %161 = vector.load %arg6[%c0_79, %c0_80] : memref<64x128xf32, #tpu.memory_space<vmem>>, vector<64x128xf32>
    tpu.vector_store %arg6[%c0_79, %c0_80], %160 {strides = array<i32>} : memref<64x128xf32, #tpu.memory_space<vmem>>, vector<64x128xf32>,
    %c0_81 = arith.constant 0 : index
    %c1_82 = arith.constant 1 : index
    %c1_83 = arith.constant 1 : index
    %c0_84 = arith.constant 0 : index
    %162 = vector.load %arg1[%c0_81, %c1_82, %c1_83, %c0_84] : memref<1x10x10x128xbf16, #tpu.memory_space<vmem>>, vector<1x8x8x128xbf16>
    %163 = vector.shape_cast %162 : vector<1x8x8x128xbf16> to vector<8x8x128xbf16>
    %164 = arith.extf %163 : vector<8x8x128xbf16> to vector<8x8x128xf32>
    %165 = vector.shape_cast %0 : vector<1x128xf32> to vector<1x1x128xf32>
    %166 = vector.broadcast %165 : vector<1x1x128xf32> to vector<8x8x128xf32>
    %167 = arith.mulf %164, %166 : vector<8x8x128xf32>
    %168 = vector.shape_cast %1 : vector<1x128xf32> to vector<1x1x128xf32>
    %169 = vector.broadcast %168 : vector<1x1x128xf32> to vector<8x8x128xf32>
    %170 = arith.addf %167, %169 : vector<8x8x128xf32>
    %cst_85 = arith.constant 0.000000e+00 : f32
    %171 = vector.broadcast %cst_85 : f32 to vector<8x8x128xf32>
    %172 = arith.maximumf %170, %171 : vector<8x8x128xf32>
    %c1_i32_86 = arith.constant 1 : i32
    %173 = vector.broadcast %c1_i32_86 : i32 to vector<8x8x128xi32>
    %174 = arith.addi %2, %173 : vector<8x8x128xi32>
    %c1_i32_87 = arith.constant 1 : i32
    %175 = vector.broadcast %c1_i32_87 : i32 to vector<8x8x128xi32>
    %176 = arith.cmpi sge, %174, %175 : vector<8x8x128xi32>
    %c1_i32_88 = arith.constant 1 : i32
    %177 = vector.broadcast %c1_i32_88 : i32 to vector<8x8x128xi32>
    %178 = arith.addi %2, %177 : vector<8x8x128xi32>
    %c8_i32_89 = arith.constant 8 : i32
    %179 = vector.broadcast %c8_i32_89 : i32 to vector<8x8x128xi32>
    %180 = arith.cmpi sle, %178, %179 : vector<8x8x128xi32>
    %181 = arith.andi %176, %180 : vector<8x8x128xi1>
    %c1_i32_90 = arith.constant 1 : i32
    %182 = vector.broadcast %c1_i32_90 : i32 to vector<8x8x128xi32>
    %183 = arith.addi %3, %182 : vector<8x8x128xi32>
    %c1_i32_91 = arith.constant 1 : i32
    %184 = vector.broadcast %c1_i32_91 : i32 to vector<8x8x128xi32>
    %185 = arith.cmpi sge, %183, %184 : vector<8x8x128xi32>
    %186 = arith.andi %181, %185 : vector<8x8x128xi1>
    %c1_i32_92 = arith.constant 1 : i32
    %187 = vector.broadcast %c1_i32_92 : i32 to vector<8x8x128xi32>
    %188 = arith.addi %3, %187 : vector<8x8x128xi32>
    %c8_i32_93 = arith.constant 8 : i32
    %189 = vector.broadcast %c8_i32_93 : i32 to vector<8x8x128xi32>
    %190 = arith.cmpi sle, %188, %189 : vector<8x8x128xi32>
    %191 = arith.andi %186, %190 : vector<8x8x128xi1>
    %cst_94 = arith.constant 0.000000e+00 : f32
    %192 = vector.broadcast %cst_94 : f32 to vector<8x8x128xf32>
    %193 = arith.select %191, %172, %192 : vector<8x8x128xi1>, vector<8x8x128xf32>
    %194 = vector.shape_cast %193 : vector<8x8x128xf32> to vector<64x128xf32>
    %195 = arith.truncf %194 : vector<64x128xf32> to vector<64x128xbf16>
    %c4 = arith.constant 4 : index
    %c0_95 = arith.constant 0 : index
    %c0_96 = arith.constant 0 : index
    %196 = vector.load %arg2[%c4, %c0_95, %c0_96] : memref<9x128x128xbf16, #tpu.memory_space<vmem>>, vector<1x128x128xbf16>
    %197 = vector.shape_cast %196 : vector<1x128x128xbf16> to vector<128x128xbf16>
    %cst_97 = arith.constant dense<0.000000e+00> : vector<64x128xf32>
    %198 = tpu.matmul %195, %197, %cst_97 {dimension_numbers = #tpu.dot_dimension_numbers<[1], [0], [0], [1], [0, 0, 1, 1], [], []>} : vector<64x128xbf16>, vector<128x128xbf16>, vector<64x128xf32> -> vector<64x128xf32>
    %c0_98 = arith.constant 0 : index
    %c0_99 = arith.constant 0 : index
    %199 = vector.load %arg6[%c0_98, %c0_99] : memref<64x128xf32, #tpu.memory_space<vmem>>, vector<64x128xf32>
    %200 = arith.addf %199, %198 : vector<64x128xf32>
    %c0_100 = arith.constant 0 : index
    %c0_101 = arith.constant 0 : index
    %201 = vector.load %arg6[%c0_100, %c0_101] : memref<64x128xf32, #tpu.memory_space<vmem>>, vector<64x128xf32>
    tpu.vector_store %arg6[%c0_100, %c0_101], %200 {strides = array<i32>} : memref<64x128xf32, #tpu.memory_space<vmem>>, vector<64x128xf32>,
    %c0_102 = arith.constant 0 : index
    %c1_103 = arith.constant 1 : index
    %c2_104 = arith.constant 2 : index
    %c0_105 = arith.constant 0 : index
    %202 = vector.load %arg1[%c0_102, %c1_103, %c2_104, %c0_105] : memref<1x10x10x128xbf16, #tpu.memory_space<vmem>>, vector<1x8x8x128xbf16>
    %203 = vector.shape_cast %202 : vector<1x8x8x128xbf16> to vector<8x8x128xbf16>
    %204 = arith.extf %203 : vector<8x8x128xbf16> to vector<8x8x128xf32>
    %205 = vector.shape_cast %0 : vector<1x128xf32> to vector<1x1x128xf32>
    %206 = vector.broadcast %205 : vector<1x1x128xf32> to vector<8x8x128xf32>
    %207 = arith.mulf %204, %206 : vector<8x8x128xf32>
    %208 = vector.shape_cast %1 : vector<1x128xf32> to vector<1x1x128xf32>
    %209 = vector.broadcast %208 : vector<1x1x128xf32> to vector<8x8x128xf32>
    %210 = arith.addf %207, %209 : vector<8x8x128xf32>
    %cst_106 = arith.constant 0.000000e+00 : f32
    %211 = vector.broadcast %cst_106 : f32 to vector<8x8x128xf32>
    %212 = arith.maximumf %210, %211 : vector<8x8x128xf32>
    %c1_i32_107 = arith.constant 1 : i32
    %213 = vector.broadcast %c1_i32_107 : i32 to vector<8x8x128xi32>
    %214 = arith.addi %2, %213 : vector<8x8x128xi32>
    %c1_i32_108 = arith.constant 1 : i32
    %215 = vector.broadcast %c1_i32_108 : i32 to vector<8x8x128xi32>
    %216 = arith.cmpi sge, %214, %215 : vector<8x8x128xi32>
    %c1_i32_109 = arith.constant 1 : i32
    %217 = vector.broadcast %c1_i32_109 : i32 to vector<8x8x128xi32>
    %218 = arith.addi %2, %217 : vector<8x8x128xi32>
    %c8_i32_110 = arith.constant 8 : i32
    %219 = vector.broadcast %c8_i32_110 : i32 to vector<8x8x128xi32>
    %220 = arith.cmpi sle, %218, %219 : vector<8x8x128xi32>
    %221 = arith.andi %216, %220 : vector<8x8x128xi1>
    %c2_i32_111 = arith.constant 2 : i32
    %222 = vector.broadcast %c2_i32_111 : i32 to vector<8x8x128xi32>
    %223 = arith.addi %3, %222 : vector<8x8x128xi32>
    %c1_i32_112 = arith.constant 1 : i32
    %224 = vector.broadcast %c1_i32_112 : i32 to vector<8x8x128xi32>
    %225 = arith.cmpi sge, %223, %224 : vector<8x8x128xi32>
    %226 = arith.andi %221, %225 : vector<8x8x128xi1>
    %c2_i32_113 = arith.constant 2 : i32
    %227 = vector.broadcast %c2_i32_113 : i32 to vector<8x8x128xi32>
    %228 = arith.addi %3, %227 : vector<8x8x128xi32>
    %c8_i32_114 = arith.constant 8 : i32
    %229 = vector.broadcast %c8_i32_114 : i32 to vector<8x8x128xi32>
    %230 = arith.cmpi sle, %228, %229 : vector<8x8x128xi32>
    %231 = arith.andi %226, %230 : vector<8x8x128xi1>
    %cst_115 = arith.constant 0.000000e+00 : f32
    %232 = vector.broadcast %cst_115 : f32 to vector<8x8x128xf32>
    %233 = arith.select %231, %212, %232 : vector<8x8x128xi1>, vector<8x8x128xf32>
    %234 = vector.shape_cast %233 : vector<8x8x128xf32> to vector<64x128xf32>
    %235 = arith.truncf %234 : vector<64x128xf32> to vector<64x128xbf16>
    %c5 = arith.constant 5 : index
    %c0_116 = arith.constant 0 : index
    %c0_117 = arith.constant 0 : index
    %236 = vector.load %arg2[%c5, %c0_116, %c0_117] : memref<9x128x128xbf16, #tpu.memory_space<vmem>>, vector<1x128x128xbf16>
    %237 = vector.shape_cast %236 : vector<1x128x128xbf16> to vector<128x128xbf16>
    %cst_118 = arith.constant dense<0.000000e+00> : vector<64x128xf32>
    %238 = tpu.matmul %235, %237, %cst_118 {dimension_numbers = #tpu.dot_dimension_numbers<[1], [0], [0], [1], [0, 0, 1, 1], [], []>} : vector<64x128xbf16>, vector<128x128xbf16>, vector<64x128xf32> -> vector<64x128xf32>
    %c0_119 = arith.constant 0 : index
    %c0_120 = arith.constant 0 : index
    %239 = vector.load %arg6[%c0_119, %c0_120] : memref<64x128xf32, #tpu.memory_space<vmem>>, vector<64x128xf32>
    %240 = arith.addf %239, %238 : vector<64x128xf32>
    %c0_121 = arith.constant 0 : index
    %c0_122 = arith.constant 0 : index
    %241 = vector.load %arg6[%c0_121, %c0_122] : memref<64x128xf32, #tpu.memory_space<vmem>>, vector<64x128xf32>
    tpu.vector_store %arg6[%c0_121, %c0_122], %240 {strides = array<i32>} : memref<64x128xf32, #tpu.memory_space<vmem>>, vector<64x128xf32>,
    %c0_123 = arith.constant 0 : index
    %c2_124 = arith.constant 2 : index
    %c0_125 = arith.constant 0 : index
    %c0_126 = arith.constant 0 : index
    %242 = vector.load %arg1[%c0_123, %c2_124, %c0_125, %c0_126] : memref<1x10x10x128xbf16, #tpu.memory_space<vmem>>, vector<1x8x8x128xbf16>
    %243 = vector.shape_cast %242 : vector<1x8x8x128xbf16> to vector<8x8x128xbf16>
    %244 = arith.extf %243 : vector<8x8x128xbf16> to vector<8x8x128xf32>
    %245 = vector.shape_cast %0 : vector<1x128xf32> to vector<1x1x128xf32>
    %246 = vector.broadcast %245 : vector<1x1x128xf32> to vector<8x8x128xf32>
    %247 = arith.mulf %244, %246 : vector<8x8x128xf32>
    %248 = vector.shape_cast %1 : vector<1x128xf32> to vector<1x1x128xf32>
    %249 = vector.broadcast %248 : vector<1x1x128xf32> to vector<8x8x128xf32>
    %250 = arith.addf %247, %249 : vector<8x8x128xf32>
    %cst_127 = arith.constant 0.000000e+00 : f32
    %251 = vector.broadcast %cst_127 : f32 to vector<8x8x128xf32>
    %252 = arith.maximumf %250, %251 : vector<8x8x128xf32>
    %c2_i32_128 = arith.constant 2 : i32
    %253 = vector.broadcast %c2_i32_128 : i32 to vector<8x8x128xi32>
    %254 = arith.addi %2, %253 : vector<8x8x128xi32>
    %c1_i32_129 = arith.constant 1 : i32
    %255 = vector.broadcast %c1_i32_129 : i32 to vector<8x8x128xi32>
    %256 = arith.cmpi sge, %254, %255 : vector<8x8x128xi32>
    %c2_i32_130 = arith.constant 2 : i32
    %257 = vector.broadcast %c2_i32_130 : i32 to vector<8x8x128xi32>
    %258 = arith.addi %2, %257 : vector<8x8x128xi32>
    %c8_i32_131 = arith.constant 8 : i32
    %259 = vector.broadcast %c8_i32_131 : i32 to vector<8x8x128xi32>
    %260 = arith.cmpi sle, %258, %259 : vector<8x8x128xi32>
    %261 = arith.andi %256, %260 : vector<8x8x128xi1>
    %c0_i32_132 = arith.constant 0 : i32
    %262 = vector.broadcast %c0_i32_132 : i32 to vector<8x8x128xi32>
    %263 = arith.addi %3, %262 : vector<8x8x128xi32>
    %c1_i32_133 = arith.constant 1 : i32
    %264 = vector.broadcast %c1_i32_133 : i32 to vector<8x8x128xi32>
    %265 = arith.cmpi sge, %263, %264 : vector<8x8x128xi32>
    %266 = arith.andi %261, %265 : vector<8x8x128xi1>
    %c0_i32_134 = arith.constant 0 : i32
    %267 = vector.broadcast %c0_i32_134 : i32 to vector<8x8x128xi32>
    %268 = arith.addi %3, %267 : vector<8x8x128xi32>
    %c8_i32_135 = arith.constant 8 : i32
    %269 = vector.broadcast %c8_i32_135 : i32 to vector<8x8x128xi32>
    %270 = arith.cmpi sle, %268, %269 : vector<8x8x128xi32>
    %271 = arith.andi %266, %270 : vector<8x8x128xi1>
    %cst_136 = arith.constant 0.000000e+00 : f32
    %272 = vector.broadcast %cst_136 : f32 to vector<8x8x128xf32>
    %273 = arith.select %271, %252, %272 : vector<8x8x128xi1>, vector<8x8x128xf32>
    %274 = vector.shape_cast %273 : vector<8x8x128xf32> to vector<64x128xf32>
    %275 = arith.truncf %274 : vector<64x128xf32> to vector<64x128xbf16>
    %c6 = arith.constant 6 : index
    %c0_137 = arith.constant 0 : index
    %c0_138 = arith.constant 0 : index
    %276 = vector.load %arg2[%c6, %c0_137, %c0_138] : memref<9x128x128xbf16, #tpu.memory_space<vmem>>, vector<1x128x128xbf16>
    %277 = vector.shape_cast %276 : vector<1x128x128xbf16> to vector<128x128xbf16>
    %cst_139 = arith.constant dense<0.000000e+00> : vector<64x128xf32>
    %278 = tpu.matmul %275, %277, %cst_139 {dimension_numbers = #tpu.dot_dimension_numbers<[1], [0], [0], [1], [0, 0, 1, 1], [], []>} : vector<64x128xbf16>, vector<128x128xbf16>, vector<64x128xf32> -> vector<64x128xf32>
    %c0_140 = arith.constant 0 : index
    %c0_141 = arith.constant 0 : index
    %279 = vector.load %arg6[%c0_140, %c0_141] : memref<64x128xf32, #tpu.memory_space<vmem>>, vector<64x128xf32>
    %280 = arith.addf %279, %278 : vector<64x128xf32>
    %c0_142 = arith.constant 0 : index
    %c0_143 = arith.constant 0 : index
    %281 = vector.load %arg6[%c0_142, %c0_143] : memref<64x128xf32, #tpu.memory_space<vmem>>, vector<64x128xf32>
    tpu.vector_store %arg6[%c0_142, %c0_143], %280 {strides = array<i32>} : memref<64x128xf32, #tpu.memory_space<vmem>>, vector<64x128xf32>,
    %c0_144 = arith.constant 0 : index
    %c2_145 = arith.constant 2 : index
    %c1_146 = arith.constant 1 : index
    %c0_147 = arith.constant 0 : index
    %282 = vector.load %arg1[%c0_144, %c2_145, %c1_146, %c0_147] : memref<1x10x10x128xbf16, #tpu.memory_space<vmem>>, vector<1x8x8x128xbf16>
    %283 = vector.shape_cast %282 : vector<1x8x8x128xbf16> to vector<8x8x128xbf16>
    %284 = arith.extf %283 : vector<8x8x128xbf16> to vector<8x8x128xf32>
    %285 = vector.shape_cast %0 : vector<1x128xf32> to vector<1x1x128xf32>
    %286 = vector.broadcast %285 : vector<1x1x128xf32> to vector<8x8x128xf32>
    %287 = arith.mulf %284, %286 : vector<8x8x128xf32>
    %288 = vector.shape_cast %1 : vector<1x128xf32> to vector<1x1x128xf32>
    %289 = vector.broadcast %288 : vector<1x1x128xf32> to vector<8x8x128xf32>
    %290 = arith.addf %287, %289 : vector<8x8x128xf32>
    %cst_148 = arith.constant 0.000000e+00 : f32
    %291 = vector.broadcast %cst_148 : f32 to vector<8x8x128xf32>
    %292 = arith.maximumf %290, %291 : vector<8x8x128xf32>
    %c2_i32_149 = arith.constant 2 : i32
    %293 = vector.broadcast %c2_i32_149 : i32 to vector<8x8x128xi32>
    %294 = arith.addi %2, %293 : vector<8x8x128xi32>
    %c1_i32_150 = arith.constant 1 : i32
    %295 = vector.broadcast %c1_i32_150 : i32 to vector<8x8x128xi32>
    %296 = arith.cmpi sge, %294, %295 : vector<8x8x128xi32>
    %c2_i32_151 = arith.constant 2 : i32
    %297 = vector.broadcast %c2_i32_151 : i32 to vector<8x8x128xi32>
    %298 = arith.addi %2, %297 : vector<8x8x128xi32>
    %c8_i32_152 = arith.constant 8 : i32
    %299 = vector.broadcast %c8_i32_152 : i32 to vector<8x8x128xi32>
    %300 = arith.cmpi sle, %298, %299 : vector<8x8x128xi32>
    %301 = arith.andi %296, %300 : vector<8x8x128xi1>
    %c1_i32_153 = arith.constant 1 : i32
    %302 = vector.broadcast %c1_i32_153 : i32 to vector<8x8x128xi32>
    %303 = arith.addi %3, %302 : vector<8x8x128xi32>
    %c1_i32_154 = arith.constant 1 : i32
    %304 = vector.broadcast %c1_i32_154 : i32 to vector<8x8x128xi32>
    %305 = arith.cmpi sge, %303, %304 : vector<8x8x128xi32>
    %306 = arith.andi %301, %305 : vector<8x8x128xi1>
    %c1_i32_155 = arith.constant 1 : i32
    %307 = vector.broadcast %c1_i32_155 : i32 to vector<8x8x128xi32>
    %308 = arith.addi %3, %307 : vector<8x8x128xi32>
    %c8_i32_156 = arith.constant 8 : i32
    %309 = vector.broadcast %c8_i32_156 : i32 to vector<8x8x128xi32>
    %310 = arith.cmpi sle, %308, %309 : vector<8x8x128xi32>
    %311 = arith.andi %306, %310 : vector<8x8x128xi1>
    %cst_157 = arith.constant 0.000000e+00 : f32
    %312 = vector.broadcast %cst_157 : f32 to vector<8x8x128xf32>
    %313 = arith.select %311, %292, %312 : vector<8x8x128xi1>, vector<8x8x128xf32>
    %314 = vector.shape_cast %313 : vector<8x8x128xf32> to vector<64x128xf32>
    %315 = arith.truncf %314 : vector<64x128xf32> to vector<64x128xbf16>
    %c7 = arith.constant 7 : index
    %c0_158 = arith.constant 0 : index
    %c0_159 = arith.constant 0 : index
    %316 = vector.load %arg2[%c7, %c0_158, %c0_159] : memref<9x128x128xbf16, #tpu.memory_space<vmem>>, vector<1x128x128xbf16>
    %317 = vector.shape_cast %316 : vector<1x128x128xbf16> to vector<128x128xbf16>
    %cst_160 = arith.constant dense<0.000000e+00> : vector<64x128xf32>
    %318 = tpu.matmul %315, %317, %cst_160 {dimension_numbers = #tpu.dot_dimension_numbers<[1], [0], [0], [1], [0, 0, 1, 1], [], []>} : vector<64x128xbf16>, vector<128x128xbf16>, vector<64x128xf32> -> vector<64x128xf32>
    %c0_161 = arith.constant 0 : index
    %c0_162 = arith.constant 0 : index
    %319 = vector.load %arg6[%c0_161, %c0_162] : memref<64x128xf32, #tpu.memory_space<vmem>>, vector<64x128xf32>
    %320 = arith.addf %319, %318 : vector<64x128xf32>
    %c0_163 = arith.constant 0 : index
    %c0_164 = arith.constant 0 : index
    %321 = vector.load %arg6[%c0_163, %c0_164] : memref<64x128xf32, #tpu.memory_space<vmem>>, vector<64x128xf32>
    tpu.vector_store %arg6[%c0_163, %c0_164], %320 {strides = array<i32>} : memref<64x128xf32, #tpu.memory_space<vmem>>, vector<64x128xf32>,
    %c0_165 = arith.constant 0 : index
    %c2_166 = arith.constant 2 : index
    %c2_167 = arith.constant 2 : index
    %c0_168 = arith.constant 0 : index
    %322 = vector.load %arg1[%c0_165, %c2_166, %c2_167, %c0_168] : memref<1x10x10x128xbf16, #tpu.memory_space<vmem>>, vector<1x8x8x128xbf16>
    %323 = vector.shape_cast %322 : vector<1x8x8x128xbf16> to vector<8x8x128xbf16>
    %324 = arith.extf %323 : vector<8x8x128xbf16> to vector<8x8x128xf32>
    %325 = vector.shape_cast %0 : vector<1x128xf32> to vector<1x1x128xf32>
    %326 = vector.broadcast %325 : vector<1x1x128xf32> to vector<8x8x128xf32>
    %327 = arith.mulf %324, %326 : vector<8x8x128xf32>
    %328 = vector.shape_cast %1 : vector<1x128xf32> to vector<1x1x128xf32>
    %329 = vector.broadcast %328 : vector<1x1x128xf32> to vector<8x8x128xf32>
    %330 = arith.addf %327, %329 : vector<8x8x128xf32>
    %cst_169 = arith.constant 0.000000e+00 : f32
    %331 = vector.broadcast %cst_169 : f32 to vector<8x8x128xf32>
    %332 = arith.maximumf %330, %331 : vector<8x8x128xf32>
    %c2_i32_170 = arith.constant 2 : i32
    %333 = vector.broadcast %c2_i32_170 : i32 to vector<8x8x128xi32>
    %334 = arith.addi %2, %333 : vector<8x8x128xi32>
    %c1_i32_171 = arith.constant 1 : i32
    %335 = vector.broadcast %c1_i32_171 : i32 to vector<8x8x128xi32>
    %336 = arith.cmpi sge, %334, %335 : vector<8x8x128xi32>
    %c2_i32_172 = arith.constant 2 : i32
    %337 = vector.broadcast %c2_i32_172 : i32 to vector<8x8x128xi32>
    %338 = arith.addi %2, %337 : vector<8x8x128xi32>
    %c8_i32_173 = arith.constant 8 : i32
    %339 = vector.broadcast %c8_i32_173 : i32 to vector<8x8x128xi32>
    %340 = arith.cmpi sle, %338, %339 : vector<8x8x128xi32>
    %341 = arith.andi %336, %340 : vector<8x8x128xi1>
    %c2_i32_174 = arith.constant 2 : i32
    %342 = vector.broadcast %c2_i32_174 : i32 to vector<8x8x128xi32>
    %343 = arith.addi %3, %342 : vector<8x8x128xi32>
    %c1_i32_175 = arith.constant 1 : i32
    %344 = vector.broadcast %c1_i32_175 : i32 to vector<8x8x128xi32>
    %345 = arith.cmpi sge, %343, %344 : vector<8x8x128xi32>
    %346 = arith.andi %341, %345 : vector<8x8x128xi1>
    %c2_i32_176 = arith.constant 2 : i32
    %347 = vector.broadcast %c2_i32_176 : i32 to vector<8x8x128xi32>
    %348 = arith.addi %3, %347 : vector<8x8x128xi32>
    %c8_i32_177 = arith.constant 8 : i32
    %349 = vector.broadcast %c8_i32_177 : i32 to vector<8x8x128xi32>
    %350 = arith.cmpi sle, %348, %349 : vector<8x8x128xi32>
    %351 = arith.andi %346, %350 : vector<8x8x128xi1>
    %cst_178 = arith.constant 0.000000e+00 : f32
    %352 = vector.broadcast %cst_178 : f32 to vector<8x8x128xf32>
    %353 = arith.select %351, %332, %352 : vector<8x8x128xi1>, vector<8x8x128xf32>
    %354 = vector.shape_cast %353 : vector<8x8x128xf32> to vector<64x128xf32>
    %355 = arith.truncf %354 : vector<64x128xf32> to vector<64x128xbf16>
    %c8 = arith.constant 8 : index
    %c0_179 = arith.constant 0 : index
    %c0_180 = arith.constant 0 : index
    %356 = vector.load %arg2[%c8, %c0_179, %c0_180] : memref<9x128x128xbf16, #tpu.memory_space<vmem>>, vector<1x128x128xbf16>
    %357 = vector.shape_cast %356 : vector<1x128x128xbf16> to vector<128x128xbf16>
    %cst_181 = arith.constant dense<0.000000e+00> : vector<64x128xf32>
    %358 = tpu.matmul %355, %357, %cst_181 {dimension_numbers = #tpu.dot_dimension_numbers<[1], [0], [0], [1], [0, 0, 1, 1], [], []>} : vector<64x128xbf16>, vector<128x128xbf16>, vector<64x128xf32> -> vector<64x128xf32>
    %c0_182 = arith.constant 0 : index
    %c0_183 = arith.constant 0 : index
    %359 = vector.load %arg6[%c0_182, %c0_183] : memref<64x128xf32, #tpu.memory_space<vmem>>, vector<64x128xf32>
    %360 = arith.addf %359, %358 : vector<64x128xf32>
    %c0_184 = arith.constant 0 : index
    %c0_185 = arith.constant 0 : index
    %361 = vector.load %arg6[%c0_184, %c0_185] : memref<64x128xf32, #tpu.memory_space<vmem>>, vector<64x128xf32>
    tpu.vector_store %arg6[%c0_184, %c0_185], %360 {strides = array<i32>} : memref<64x128xf32, #tpu.memory_space<vmem>>, vector<64x128xf32>,
    %c0_186 = arith.constant 0 : index
    %c0_187 = arith.constant 0 : index
    %362 = vector.load %arg6[%c0_186, %c0_187] : memref<64x128xf32, #tpu.memory_space<vmem>>, vector<64x128xf32>
    %363 = arith.truncf %362 : vector<64x128xf32> to vector<64x128xbf16>
    %c0_188 = arith.constant 0 : index
    %c0_189 = arith.constant 0 : index
    %c0_190 = arith.constant 0 : index
    %364 = vector.load %arg4[%c0_188, %c0_189, %c0_190] : memref<1x64x128xbf16, #tpu.memory_space<vmem>>, vector<1x64x128xbf16>
    %365 = vector.shape_cast %364 : vector<1x64x128xbf16> to vector<64x128xbf16>
    %366 = vector.shape_cast %363 : vector<64x128xbf16> to vector<1x64x128xbf16>
    tpu.vector_store %arg4[%c0_188, %c0_189, %c0_190], %366 {strides = array<i32>} : memref<1x64x128xbf16, #tpu.memory_space<vmem>>, vector<1x64x128xbf16>,
    %367 = tpu.iota {dimensions = array<i32: 0>} : vector<8x128xi32>
    %c0_i32_191 = arith.constant 0 : i32
    %368 = vector.broadcast %c0_i32_191 : i32 to vector<8x128xi32>
    %369 = arith.cmpi eq, %367, %368 : vector<8x128xi32>
    %cst_192 = arith.constant dense<0.000000e+00> : vector<128xf32>
    %370 = vector.multi_reduction <add>, %362, %cst_192 [0] : vector<64x128xf32> to vector<128xf32>
    %371 = vector.shape_cast %370 : vector<128xf32> to vector<1x128xf32>
    %cst_193 = arith.constant 0.000000e+00 : f32
    %372 = vector.shape_cast %371 : vector<1x128xf32> to vector<1x128xf32>
    %373 = vector.broadcast %372 : vector<1x128xf32> to vector<8x128xf32>
    %374 = vector.broadcast %cst_193 : f32 to vector<8x128xf32>
    %375 = arith.select %369, %373, %374 : vector<8x128xi1>, vector<8x128xf32>
    %c1_i32_194 = arith.constant 1 : i32
    %376 = vector.broadcast %c1_i32_194 : i32 to vector<8x128xi32>
    %377 = arith.cmpi eq, %367, %376 : vector<8x128xi32>
    %378 = arith.mulf %362, %362 : vector<64x128xf32>
    %cst_195 = arith.constant dense<0.000000e+00> : vector<128xf32>
    %379 = vector.multi_reduction <add>, %378, %cst_195 [0] : vector<64x128xf32> to vector<128xf32>
    %380 = vector.shape_cast %379 : vector<128xf32> to vector<1x128xf32>
    %cst_196 = arith.constant 0.000000e+00 : f32
    %381 = vector.shape_cast %380 : vector<1x128xf32> to vector<1x128xf32>
    %382 = vector.broadcast %381 : vector<1x128xf32> to vector<8x128xf32>
    %383 = vector.broadcast %cst_196 : f32 to vector<8x128xf32>
    %384 = arith.select %377, %382, %383 : vector<8x128xi1>, vector<8x128xf32>
    %385 = arith.addf %375, %384 : vector<8x128xf32>
    %c0_197 = arith.constant 0 : index
    %c0_198 = arith.constant 0 : index
    %c0_199 = arith.constant 0 : index
    %386 = vector.load %arg5[%c0_197, %c0_198, %c0_199] : memref<1x8x128xf32, #tpu.memory_space<vmem>>, vector<1x8x128xf32>
    %387 = vector.shape_cast %386 : vector<1x8x128xf32> to vector<8x128xf32>
    %388 = vector.shape_cast %385 : vector<8x128xf32> to vector<1x8x128xf32>
    tpu.vector_store %arg5[%c0_197, %c0_198, %c0_199], %388 {strides = array<i32>} : memref<1x8x128xf32, #tpu.memory_space<vmem>>, vector<1x8x128xf32>,
    return
  }
  func.func @transform_0(%arg0: i32) -> (i32, i32, i32, i32) {
    %c0_i32 = arith.constant 0 : i32
    %c0_i32_0 = arith.constant 0 : i32
    %c0_i32_1 = arith.constant 0 : i32
    %c0_i32_2 = arith.constant 0 : i32
    return %arg0, %c0_i32, %c0_i32_0, %c0_i32_1 : i32, i32, i32, i32
  }
  func.func @transform_1(%arg0: i32) -> (i32, i32, i32) {
    %c0_i32 = arith.constant 0 : i32
    %c0_i32_0 = arith.constant 0 : i32
    %c0_i32_1 = arith.constant 0 : i32
    %c0_i32_2 = arith.constant 0 : i32
    return %c0_i32, %c0_i32_0, %c0_i32_1 : i32, i32, i32
  }
  func.func @transform_2(%arg0: i32) -> (i32, i32) {
    %c0_i32 = arith.constant 0 : i32
    %c0_i32_0 = arith.constant 0 : i32
    %c0_i32_1 = arith.constant 0 : i32
    return %c0_i32, %c0_i32_0 : i32, i32
  }
  func.func @transform_3(%arg0: i32) -> (i32, i32, i32) {
    %c0_i32 = arith.constant 0 : i32
    %c0_i32_0 = arith.constant 0 : i32
    %c0_i32_1 = arith.constant 0 : i32
    return %arg0, %c0_i32, %c0_i32_0 : i32, i32, i32
  }
  func.func @transform_4(%arg0: i32) -> (i32, i32, i32) {
    %c0_i32 = arith.constant 0 : i32
    %c0_i32_0 = arith.constant 0 : i32
    %c0_i32_1 = arith.constant 0 : i32
    return %arg0, %c0_i32, %c0_i32_0 : i32, i32, i32
  }
}

module attributes {stable_mosaic.version = 11 : i64} {
  func.func @_bn_residual_relu_kernel(%arg0: i32, %arg1: memref<1x64x128xbf16, #tpu.memory_space<vmem>>, %arg2: memref<1x64x128xbf16, #tpu.memory_space<vmem>>, %arg3: memref<2x128xf32, #tpu.memory_space<vmem>>, %arg4: memref<2x128xf32, #tpu.memory_space<vmem>>, %arg5: memref<1x64x128xf32, #tpu.memory_space<vmem>>) attributes {dimension_semantics = [#tpu.dimension_semantics<parallel>], iteration_bounds = array<i64: 2>, scalar_prefetch = 0 : i64, scratch_operands = 0 : i64, tpu.core_type = #tpu.core_type<tc>, window_params = [{transform_indices = @transform_0, window_bounds = array<i64: 1, 64, 128>}, {transform_indices = @transform_1, window_bounds = array<i64: 1, 64, 128>}, {pipeline_mode = #tpu.pipeline_mode<synchronous>, transform_indices = @transform_2, window_bounds = array<i64: 2, 128>}, {pipeline_mode = #tpu.pipeline_mode<synchronous>, transform_indices = @transform_3, window_bounds = array<i64: 2, 128>}, {transform_indices = @transform_4, window_bounds = array<i64: 1, 64, 128>}]} {
    %c0 = arith.constant 0 : index
    %c0_0 = arith.constant 0 : index
    %c0_1 = arith.constant 0 : index
    %0 = vector.load %arg2[%c0, %c0_0, %c0_1] : memref<1x64x128xbf16, #tpu.memory_space<vmem>>, vector<1x64x128xbf16>
    %1 = vector.shape_cast %0 : vector<1x64x128xbf16> to vector<64x128xbf16>
    %2 = arith.extf %1 : vector<64x128xbf16> to vector<64x128xf32>
    %c0_2 = arith.constant 0 : index
    %c0_3 = arith.constant 0 : index
    %3 = vector.load %arg4[%c0_2, %c0_3] : memref<2x128xf32, #tpu.memory_space<vmem>>, vector<1x128xf32>
    %4 = vector.broadcast %3 : vector<1x128xf32> to vector<64x128xf32>
    %5 = arith.mulf %2, %4 : vector<64x128xf32>
    %c1 = arith.constant 1 : index
    %c0_4 = arith.constant 0 : index
    %6 = vector.load %arg4[%c1, %c0_4] : memref<2x128xf32, #tpu.memory_space<vmem>>, vector<1x128xf32>
    %7 = vector.broadcast %6 : vector<1x128xf32> to vector<64x128xf32>
    %8 = arith.addf %5, %7 : vector<64x128xf32>
    %c0_5 = arith.constant 0 : index
    %c0_6 = arith.constant 0 : index
    %c0_7 = arith.constant 0 : index
    %9 = vector.load %arg1[%c0_5, %c0_6, %c0_7] : memref<1x64x128xbf16, #tpu.memory_space<vmem>>, vector<1x64x128xbf16>
    %10 = vector.shape_cast %9 : vector<1x64x128xbf16> to vector<64x128xbf16>
    %11 = arith.extf %10 : vector<64x128xbf16> to vector<64x128xf32>
    %c0_8 = arith.constant 0 : index
    %c0_9 = arith.constant 0 : index
    %12 = vector.load %arg3[%c0_8, %c0_9] : memref<2x128xf32, #tpu.memory_space<vmem>>, vector<1x128xf32>
    %13 = vector.broadcast %12 : vector<1x128xf32> to vector<64x128xf32>
    %14 = arith.mulf %11, %13 : vector<64x128xf32>
    %c1_10 = arith.constant 1 : index
    %c0_11 = arith.constant 0 : index
    %15 = vector.load %arg3[%c1_10, %c0_11] : memref<2x128xf32, #tpu.memory_space<vmem>>, vector<1x128xf32>
    %16 = vector.broadcast %15 : vector<1x128xf32> to vector<64x128xf32>
    %17 = arith.addf %14, %16 : vector<64x128xf32>
    %18 = arith.addf %17, %8 : vector<64x128xf32>
    %cst = arith.constant 0.000000e+00 : f32
    %19 = vector.broadcast %cst : f32 to vector<64x128xf32>
    %20 = arith.maximumf %18, %19 : vector<64x128xf32>
    %c0_12 = arith.constant 0 : index
    %c0_13 = arith.constant 0 : index
    %c0_14 = arith.constant 0 : index
    %21 = vector.load %arg5[%c0_12, %c0_13, %c0_14] : memref<1x64x128xf32, #tpu.memory_space<vmem>>, vector<1x64x128xf32>
    %22 = vector.shape_cast %21 : vector<1x64x128xf32> to vector<64x128xf32>
    %23 = vector.shape_cast %20 : vector<64x128xf32> to vector<1x64x128xf32>
    tpu.vector_store %arg5[%c0_12, %c0_13, %c0_14], %23 {strides = array<i32>} : memref<1x64x128xf32, #tpu.memory_space<vmem>>, vector<1x64x128xf32>,
    return
  }
  func.func @transform_0(%arg0: i32) -> (i32, i32, i32) {
    %c0_i32 = arith.constant 0 : i32
    %c0_i32_0 = arith.constant 0 : i32
    %c0_i32_1 = arith.constant 0 : i32
    return %arg0, %c0_i32, %c0_i32_0 : i32, i32, i32
  }
  func.func @transform_1(%arg0: i32) -> (i32, i32, i32) {
    %c0_i32 = arith.constant 0 : i32
    %c0_i32_0 = arith.constant 0 : i32
    %c0_i32_1 = arith.constant 0 : i32
    return %arg0, %c0_i32, %c0_i32_0 : i32, i32, i32
  }
  func.func @transform_2(%arg0: i32) -> (i32, i32) {
    %c0_i32 = arith.constant 0 : i32
    %c0_i32_0 = arith.constant 0 : i32
    %c0_i32_1 = arith.constant 0 : i32
    return %c0_i32, %c0_i32_0 : i32, i32
  }
  func.func @transform_3(%arg0: i32) -> (i32, i32) {
    %c0_i32 = arith.constant 0 : i32
    %c0_i32_0 = arith.constant 0 : i32
    %c0_i32_1 = arith.constant 0 : i32
    return %c0_i32, %c0_i32_0 : i32, i32
  }
  func.func @transform_4(%arg0: i32) -> (i32, i32, i32) {
    %c0_i32 = arith.constant 0 : i32
    %c0_i32_0 = arith.constant 0 : i32
    %c0_i32_1 = arith.constant 0 : i32
    return %arg0, %c0_i32, %c0_i32_0 : i32, i32, i32
  }
}

</mosaic_0001>

<llo_original>
// kernel: basic_block_forward.3
$region0: #{basic_block_forward.3}
  #allocation0 [shape = 'u32[]', space=smem, size = 0x4, offset = 0x4, fixed_abs, tag = 'smem constant byte address 0x4 - core index']
  #allocation1 [shape = 'u32[144,128]{1,0:T(1,128)}', space=vmem, size = 0x12000, scoped, tag = 'internal scratch']
  %s0 = inlined_call_operand.vmem [shape: bf16[128,128], index: 0, kind: input, shape index: {}]
  %s1 = inlined_call_operand.vmem [shape: bf16[128,128], index: 1, kind: input, shape index: {}]
  %s2 = inlined_call_operand.vmem [shape: bf16[128,128], index: 2, kind: input, shape index: {}]
  %s3 = inlined_call_operand.vmem [shape: bf16[128,128], index: 3, kind: input, shape index: {}]
  %s4 = inlined_call_operand.vmem [shape: bf16[128,128], index: 4, kind: output, shape index: {0}]
  %s5 = inlined_call_operand.vmem [shape: bf16[128,128], index: 5, kind: output, shape index: {1}]
  %s6 = inlined_call_operand.vmem [shape: f32[2,8,128], index: 6, kind: output, shape index: {2}]
  %7 = xla_tuple %s4, %s5, %s6
  %s8 = sld [smem:[#allocation0]]
  $region65: #{basic_block_forward.3} parent=0
    _
  %s10 = ssub.s32 1, %s8
  %s11 = scalar_select 0, %s10, %s8
  loop: start=0, step=1, limit=4
  $region2: #{basic_block_forward.3} parent=0 // loop_pre_header
    _
  $region3: #{basic_block_forward.3} parent=0 // loop_header
    %s13 = sphi 0, %s17
    %p14 = scmp.ge.s32.totalorder %s13, 4
    %s23 = sphi 0, %s25
    %s26 = sphi 0, %s23
    %s27 = sphi 0, %s26
    %s43 = sphi 0, %s27
    %s47 = sphi 0, %s47
    %s49 = sphi 0, %s47
    %s50 = sphi 0, %s49
    %s64 = sphi 0, %s50
    %s70 = sphi 0, %s72
    %s73 = sphi 0, %s70
    %s74 = sphi 0, %s73
    %s90 = sphi 0, %s74
    %s94 = sphi 0, %s94
    %s96 = sphi 0, %s94
    %s97 = sphi 0, %s96
    %s111 = sphi 0, %s97
    %s117 = sphi 0, %s119
    %s120 = sphi 0, %s117
    %s121 = sphi 0, %s120
    %s137 = sphi 0, %s121
    %s143 = sphi 0, %s145
    %s146 = sphi 0, %s143
    %s147 = sphi 0, %s146
    %s163 = sphi 0, %s147
    %s169 = sphi 0, %s171
    %s172 = sphi 0, %s169
    %s173 = sphi 0, %s172
    %s189 = sphi 0, %s173
  $region4: #{basic_block_forward.3} parent=0 // loop_header_branch
    %16 = sbr.rel (%p14) target = $region8
  $region5: #{basic_block_forward.3} parent=0 // loop_body
    %s18 = ssub.s32 %s13, 1
    %s19 = ssub.s32 %s13, 2
    %s20 = sadd.s32 %s13, 1
    %s21 = ssub.s32 %s13, %s20
    %p22 = scmp.eq.s32.totalorder %s21, 0
    %s24 = sadd.s32 %s23, 1
    %s25 = scalar_select %p22, %s23, %s24
    %p28 = pneg %p22
    %p29 = scmp.eq.s32.totalorder %s13, 1
    %p30 = por %p28, %p29
    %p31 = scmp.ne.s32.totalorder %s23, %s26
    %p32 = scmp.eq.s32.totalorder %s13, 0
    %p33 = por %p31, %p32
    %p34 = scmp.ne.s32.totalorder %s23, %s26
    %p35 = scmp.eq.s32.totalorder %s18, 1
    %p36 = por %p34, %p35
    %p37 = scmp.ne.s32.totalorder %s26, %s27
    %p38 = scmp.eq.s32.totalorder %s18, 0
    %p39 = por %p37, %p38
    %p40 = scmp.ne.s32.totalorder %s26, %s27
    %p41 = scmp.eq.s32.totalorder %s19, 1
    %p42 = por %p40, %p41
    %p44 = scmp.ne.s32.totalorder %s27, %s43
    %p45 = scmp.eq.s32.totalorder %s19, 0
    %p46 = por %p44, %p45
    %s48 = sadd.s32 %s47, 1
    %p51 = scmp.eq.s32.totalorder %s13, 1
    %p52 = scmp.ne.s32.totalorder %s47, %s49
    %p53 = scmp.eq.s32.totalorder %s13, 0
    %p54 = por %p52, %p53
    %p55 = scmp.ne.s32.totalorder %s47, %s49
    %p56 = scmp.eq.s32.totalorder %s18, 1
    %p57 = por %p55, %p56
    %p58 = scmp.ne.s32.totalorder %s49, %s50
    %p59 = scmp.eq.s32.totalorder %s18, 0
    %p60 = por %p58, %p59
    %p61 = scmp.ne.s32.totalorder %s49, %s50
    %p62 = scmp.eq.s32.totalorder %s19, 1
    %p63 = por %p61, %p62
    %p65 = scmp.ne.s32.totalorder %s50, %s64
    %p66 = scmp.eq.s32.totalorder %s19, 0
    %p67 = por %p65, %p66
    %s68 = ssub.s32 %s13, %s20
    %p69 = scmp.eq.s32.totalorder %s68, 0
    %s71 = sadd.s32 %s70, 1
    %s72 = scalar_select %p69, %s70, %s71
    %p75 = pneg %p69
    %p76 = scmp.eq.s32.totalorder %s13, 1
    %p77 = por %p75, %p76
    %p78 = scmp.ne.s32.totalorder %s70, %s73
    %p79 = scmp.eq.s32.totalorder %s13, 0
    %p80 = por %p78, %p79
    %p81 = scmp.ne.s32.totalorder %s70, %s73
    %p82 = scmp.eq.s32.totalorder %s18, 1
    %p83 = por %p81, %p82
    %p84 = scmp.ne.s32.totalorder %s73, %s74
    %p85 = scmp.eq.s32.totalorder %s18, 0
    %p86 = por %p84, %p85
    %p87 = scmp.ne.s32.totalorder %s73, %s74
    %p88 = scmp.eq.s32.totalorder %s19, 1
    %p89 = por %p87, %p88
    %p91 = scmp.ne.s32.totalorder %s74, %s90
    %p92 = scmp.eq.s32.totalorder %s19, 0
    %p93 = por %p91, %p92
    %s95 = sadd.s32 %s94, 1
    %p98 = scmp.eq.s32.totalorder %s13, 1
    %p99 = scmp.ne.s32.totalorder %s94, %s96
    %p100 = scmp.eq.s32.totalorder %s13, 0
    %p101 = por %p99, %p100
    %p102 = scmp.ne.s32.totalorder %s94, %s96
    %p103 = scmp.eq.s32.totalorder %s18, 1
    %p104 = por %p102, %p103
    %p105 = scmp.ne.s32.totalorder %s96, %s97
    %p106 = scmp.eq.s32.totalorder %s18, 0
    %p107 = por %p105, %p106
    %p108 = scmp.ne.s32.totalorder %s96, %s97
    %p109 = scmp.eq.s32.totalorder %s19, 1
    %p110 = por %p108, %p109
    %p112 = scmp.ne.s32.totalorder %s97, %s111
    %p113 = scmp.eq.s32.totalorder %s19, 0
    %p114 = por %p112, %p113
    %s115 = ssub.s32 %s13, %s20
    %p116 = scmp.eq.s32.totalorder %s115, 0
    %s118 = sadd.s32 %s117, 1
    %s119 = scalar_select %p116, %s117, %s118
    %p122 = pneg %p116
    %p123 = scmp.eq.s32.totalorder %s13, 1
    %p124 = por %p122, %p123
    %p125 = scmp.ne.s32.totalorder %s117, %s120
    %p126 = scmp.eq.s32.totalorder %s13, 0
    %p127 = por %p125, %p126
    %p128 = scmp.ne.s32.totalorder %s117, %s120
    %p129 = scmp.eq.s32.totalorder %s18, 1
    %p130 = por %p128, %p129
    %p131 = scmp.ne.s32.totalorder %s120, %s121
    %p132 = scmp.eq.s32.totalorder %s18, 0
    %p133 = por %p131, %p132
    %p134 = scmp.ne.s32.totalorder %s120, %s121
    %p135 = scmp.eq.s32.totalorder %s19, 1
    %p136 = por %p134, %p135
    %p138 = scmp.ne.s32.totalorder %s121, %s137
    %p139 = scmp.eq.s32.totalorder %s19, 0
    %p140 = por %p138, %p139
    %s141 = ssub.s32 %s13, %s20
    %p142 = scmp.eq.s32.totalorder %s141, 0
    %s144 = sadd.s32 %s143, 1
    %s145 = scalar_select %p142, %s143, %s144
    %p148 = pneg %p142
    %p149 = scmp.eq.s32.totalorder %s13, 1
    %p150 = por %p148, %p149
    %p151 = scmp.ne.s32.totalorder %s143, %s146
    %p152 = scmp.eq.s32.totalorder %s13, 0
    %p153 = por %p151, %p152
    %p154 = scmp.ne.s32.totalorder %s143, %s146
    %p155 = scmp.eq.s32.totalorder %s18, 1
    %p156 = por %p154, %p155
    %p157 = scmp.ne.s32.totalorder %s146, %s147
    %p158 = scmp.eq.s32.totalorder %s18, 0
    %p159 = por %p157, %p158
    %p160 = scmp.ne.s32.totalorder %s146, %s147
    %p161 = scmp.eq.s32.totalorder %s19, 1
    %p162 = por %p160, %p161
    %p164 = scmp.ne.s32.totalorder %s147, %s163
    %p165 = scmp.eq.s32.totalorder %s19, 0
    %p166 = por %p164, %p165
    %s167 = ssub.s32 %s13, %s20
    %p168 = scmp.eq.s32.totalorder %s167, 0
    %s170 = sadd.s32 %s169, 1
    %s171 = scalar_select %p168, %s169, %s170
    %p174 = pneg %p168
    %p175 = scmp.eq.s32.totalorder %s13, 1
    %p176 = por %p174, %p175
    %p177 = scmp.ne.s32.totalorder %s169, %s172
    %p178 = scmp.eq.s32.totalorder %s13, 0
    %p179 = por %p177, %p178
    %p180 = scmp.ne.s32.totalorder %s169, %s172
    %p181 = scmp.eq.s32.totalorder %s18, 1
    %p182 = por %p180, %p181
    %p183 = scmp.ne.s32.totalorder %s172, %s173
    %p184 = scmp.eq.s32.totalorder %s18, 0
    %p185 = por %p183, %p184
    %p186 = scmp.ne.s32.totalorder %s172, %s173
    %p187 = scmp.eq.s32.totalorder %s19, 1
    %p188 = por %p186, %p187
    %p190 = scmp.ne.s32.totalorder %s173, %s189
    %p191 = scmp.eq.s32.totalorder %s19, 0
    %p192 = por %p190, %p191
    %p193 = scmp.le.s32.totalorder 1, %s13
    %p194 = scmp.lt.s32.totalorder %s13, 3
    %p195 = pnand %p193, %p194
    %p196 = pneg %p195
    // Predicated region
    $region9: #{basic_block_forward.3} parent=5 // pred_check
      _
    $region10: #{basic_block_forward.3} parent=5 // pred_check_branch
      %198 = sbr.rel (%p195) target = $region12
    $region11: #{basic_block_forward.3} parent=5 // pred_region
      %s199 = ssub.s32 %s13, 1
      // Predicated region
      $region13: #{basic_block_forward.3} parent=11 // pred_check
        %p200 = pneg %p60
      $region14: #{basic_block_forward.3} parent=11 // pred_check_branch
        %202 = sbr.rel (%p200) target = $region16
      $region15: #{basic_block_forward.3} parent=11 // pred_region
        _
      $region16: #{basic_block_forward.3} parent=11 // pred_fallthru
        _
      // Predicated region
      $region17: #{basic_block_forward.3} parent=11 // pred_check
        %p203 = pneg %p107
      $region18: #{basic_block_forward.3} parent=11 // pred_check_branch
        %205 = sbr.rel (%p203) target = $region20
      $region19: #{basic_block_forward.3} parent=11 // pred_region
        _
      $region20: #{basic_block_forward.3} parent=11 // pred_fallthru
        _
    $region12: #{basic_block_forward.3} parent=5 // pred_fallthru
      _
    %p206 = scmp.lt.s32.totalorder %s13, 2
    // Predicated region
    $region21: #{basic_block_forward.3} parent=5 // pred_check
      %p207 = pneg %p206
    $region22: #{basic_block_forward.3} parent=5 // pred_check_branch
      %209 = sbr.rel (%p207) target = $region24
    $region23: #{basic_block_forward.3} parent=5 // pred_region
      // Predicated region
      $region25: #{basic_block_forward.3} parent=23 // pred_check
        %p210 = pneg %p33
      $region26: #{basic_block_forward.3} parent=23 // pred_check_branch
        %212 = sbr.rel (%p210) target = $region28
      $region27: #{basic_block_forward.3} parent=23 // pred_region
        %s213 = smul.u32 8, %s13
        %p214 = scmp.lt.s32.totalorder %s213, 15
        %s215 = scalar_select %p214, %s213, 15
        %s216 = smul.addr %s215, 4
        %s217 = scalar_lea.vmem %s0, %s216
        %s218 = smul.u32 8, %s13
      $region28: #{basic_block_forward.3} parent=23 // pred_fallthru
        _
      // Predicated region
      $region29: #{basic_block_forward.3} parent=23 // pred_check
        %p219 = pneg %p80
      $region30: #{basic_block_forward.3} parent=23 // pred_check_branch
        %221 = sbr.rel (%p219) target = $region32
      $region31: #{basic_block_forward.3} parent=23 // pred_region
        %s222 = smul.u32 8, %s13
        %p223 = scmp.lt.s32.totalorder %s222, 15
        %s224 = scalar_select %p223, %s222, 15
        %s225 = smul.addr %s224, 4
        %s226 = scalar_lea.vmem %s2, %s225
        %s227 = smul.u32 8, %s13
      $region32: #{basic_block_forward.3} parent=23 // pred_fallthru
        _
    $region24: #{basic_block_forward.3} parent=5 // pred_fallthru
      _
    %p228 = scmp.le.s32.totalorder 1, %s13
    %p229 = scmp.lt.s32.totalorder %s13, 3
    %p230 = pnand %p228, %p229
    %p231 = pneg %p230
    // Predicated region
    $region33: #{basic_block_forward.3} parent=5 // pred_check
      _
    $region34: #{basic_block_forward.3} parent=5 // pred_check_branch
      %233 = sbr.rel (%p230) target = $region36
    $region35: #{basic_block_forward.3} parent=5 // pred_region
      %s234 = ssub.s32 %s13, 1
      %s235 = smul.u32 8, %s18
      %p236 = scmp.lt.s32.totalorder %s235, 15
      %s237 = scalar_select %p236, %s235, 15
      %s238 = smul.addr %s237, 4
      %s239 = scalar_lea.vmem %s0, %s238
      %p240 = pneg %p39
      %p241 = pneg %p36
      %p242 = pneg %p60
      %p243 = pneg %p57
      %s244 = smul.u32 8, %s18
      %p245 = scmp.lt.s32.totalorder %s244, 15
      %s246 = scalar_select %p245, %s244, 15
      %s247 = smul.addr %s246, 4
      %s248 = scalar_lea.vmem %s2, %s247
      %p249 = pneg %p86
      %p250 = pneg %p83
      %p251 = pneg %p107
      %p252 = pneg %p104
      %p253 = pneg %p133
      %p254 = pneg %p130
      %s255 = smul.u32 8, %s18
      %p256 = scmp.lt.s32.totalorder %s255, 15
      %s257 = scalar_select %p256, %s255, 15
      %s258 = smul.addr %s257, 4
      %s259 = scalar_lea.vmem %s4, %s258
      %p260 = pneg %p159
      %p261 = pneg %p156
      %s262 = smul.u32 8, %s18
      %p263 = scmp.lt.s32.totalorder %s262, 15
      %s264 = scalar_select %p263, %s262, 15
      %s265 = smul.addr %s264, 4
      %s266 = scalar_lea.vmem %s5, %s265
      %p267 = pneg %p185
      %p268 = pneg %p182
      %p269 = scmp.lt.s32.totalorder %s18, 1
      %s270 = scalar_select %p269, %s18, 1
      %s271 = smul.addr %s270, 8
      %s272 = scalar_lea.vmem %s6, %s271
      %s273 = smul.u32 8, %s18
      %p274 = scmp.lt.s32.totalorder %s273, 15
      %s275 = scalar_select %p274, %s273, 15
      %s276 = smul.addr %s275, 4
      %s277 = scalar_lea.vmem %s0, %s276
      %s278 = smul.u32 8, %s18
      %s279 = smul.u32 8, %s18
      %p280 = scmp.lt.s32.totalorder %s279, 15
      %s281 = scalar_select %p280, %s279, 15
      %s282 = smul.addr %s281, 4
      %s283 = scalar_lea.vmem %s2, %s282
      %s284 = smul.u32 8, %s18
      %s285 = smul.u32 8, %s18
      %p286 = scmp.lt.s32.totalorder %s285, 15
      %s287 = scalar_select %p286, %s285, 15
      %s288 = smul.addr %s287, 4
      %s289 = scalar_lea.vmem %s4, %s288
      %s290 = smul.u32 8, %s18
      %s291 = smul.u32 8, %s18
      %p292 = scmp.lt.s32.totalorder %s291, 15
      %s293 = scalar_select %p292, %s291, 15
      %s294 = smul.addr %s293, 4
      %s295 = scalar_lea.vmem %s5, %s294
      %s296 = smul.u32 8, %s18
      %p297 = scmp.lt.s32.totalorder %s18, 1
      %s298 = scalar_select %p297, %s18, 1
      %s299 = smul.addr %s298, 8
      %s300 = scalar_lea.vmem %s6, %s299
      %v302 = vld [vmem:[%s277] sm:$0xf]
      %v303 = vld [vmem:[%s277 + $0x4] sm:$0xf]
      %v304 = vld [vmem:[%s277 + $0x8] sm:$0xf]
      %v305 = vld [vmem:[%s277 + $0xc] sm:$0xf]
      %v306 = vld [vmem:[%s277 + $0x10] sm:$0xf]
      %v307 = vld [vmem:[%s277 + $0x14] sm:$0xf]
      %v308 = vld [vmem:[%s277 + $0x18] sm:$0xf]
      %v309 = vld [vmem:[%s277 + $0x1c] sm:$0xf]
      %v310 = vld [vmem:[%s1] sm:$0xf]
      %v311 = vld [vmem:[%s1 + $0x4] sm:$0xf]
      %v312 = vld [vmem:[%s1 + $0x8] sm:$0xf]
      %v313 = vld [vmem:[%s1 + $0xc] sm:$0xf]
      %v314 = vld [vmem:[%s1 + $0x10] sm:$0xf]
      %v315 = vld [vmem:[%s1 + $0x14] sm:$0xf]
      %v316 = vld [vmem:[%s1 + $0x18] sm:$0xf]
      %v317 = vld [vmem:[%s1 + $0x1c] sm:$0xf]
      %v318 = vld [vmem:[%s1 + $0x20] sm:$0xf]
      %v319 = vld [vmem:[%s1 + $0x24] sm:$0xf]
      %v320 = vld [vmem:[%s1 + $0x28] sm:$0xf]
      %v321 = vld [vmem:[%s1 + $0x2c] sm:$0xf]
      %v322 = vld [vmem:[%s1 + $0x30] sm:$0xf]
      %v323 = vld [vmem:[%s1 + $0x34] sm:$0xf]
      %v324 = vld [vmem:[%s1 + $0x38] sm:$0xf]
      %v325 = vld [vmem:[%s1 + $0x3c] sm:$0xf]
      %v334 = vunpack.c.l.b16 %v302
      %v335 = vunpack.c.l.b16 %v303
      %v336 = vunpack.c.l.b16 %v304
      %v337 = vunpack.c.l.b16 %v305
      %v338 = vunpack.c.l.b16 %v306
      %v339 = vunpack.c.l.b16 %v307
      %v340 = vunpack.c.l.b16 %v308
      %v341 = vunpack.c.l.b16 %v309
      %v342 = vpack.c.b16 %v335, %v334
      %v343 = vpack.c.b16 %v337, %v336
      %v344 = vpack.c.b16 %v339, %v338
      %v345 = vpack.c.b16 %v341, %v340
      %v366 = vunpack.c.l.b16 %v310
      %v367 = vunpack.c.l.b16 %v311
      %v368 = vunpack.c.l.b16 %v312
      %v369 = vunpack.c.l.b16 %v313
      %v370 = vunpack.c.l.b16 %v314
      %v371 = vunpack.c.l.b16 %v315
      %v372 = vunpack.c.l.b16 %v316
      %v373 = vunpack.c.l.b16 %v317
      %v374 = vunpack.c.l.b16 %v318
      %v375 = vunpack.c.l.b16 %v319
      %v376 = vunpack.c.l.b16 %v320
      %v377 = vunpack.c.l.b16 %v321
      %v378 = vunpack.c.l.b16 %v322
      %v379 = vunpack.c.l.b16 %v323
      %v380 = vunpack.c.l.b16 %v324
      %v381 = vunpack.c.l.b16 %v325
      %v382 = vpack.c.b16 %v367, %v366
      %v383 = vpack.c.b16 %v369, %v368
      %v384 = vpack.c.b16 %v371, %v370
      %v385 = vpack.c.b16 %v373, %v372
      %v386 = vpack.c.b16 %v375, %v374
      %v387 = vpack.c.b16 %v377, %v376
      %v388 = vpack.c.b16 %v379, %v378
      %v389 = vpack.c.b16 %v381, %v380
      %398 = vmatprep.subr.bf16.mxu0 0
      %399 = vmatpush1.bf16.msra.mxu0 %v382
      %400 = vmatprep.subr.bf16.mxu0 0
      %401 = vmatpush1.bf16.msra.mxu0 %v383
      %402 = vmatprep.subr.bf16.mxu0 0
      %403 = vmatpush1.bf16.msra.mxu0 %v384
      %404 = vmatprep.subr.bf16.mxu0 0
      %405 = vmatpush1.bf16.msra.mxu0 %v385
      %406 = vmatprep.subr.bf16.mxu0 0
      %407 = vmatpush1.bf16.msra.mxu0 %v386
      %408 = vmatprep.subr.bf16.mxu0 0
      %409 = vmatpush1.bf16.msra.mxu0 %v387
      %410 = vmatprep.subr.bf16.mxu0 0
      %411 = vmatpush1.bf16.msra.mxu0 %v388
      %412 = vmatprep.subr.bf16.mxu0 0
      %413 = vmatpush1.bf16.msra.mxu0 %v389
      %414 = vmatprep.subr.bf16.mxu0 0
      %415 = vmatpush1.bf16.msra.mxu0 0
      %416 = vmatprep.subr.bf16.mxu0 0
      %417 = vmatpush1.bf16.msra.mxu0 0
      %418 = vmatprep.subr.bf16.mxu0 0
      %419 = vmatpush1.bf16.msra.mxu0 0
      %420 = vmatprep.subr.bf16.mxu0 0
      %421 = vmatpush1.bf16.msra.mxu0 0
      %422 = vmatprep.subr.bf16.mxu0 0
      %423 = vmatpush1.bf16.msra.mxu0 0
      %424 = vmatprep.subr.bf16.mxu0 0
      %425 = vmatpush1.bf16.msra.mxu0 0
      %426 = vmatprep.subr.bf16.mxu0 0
      %427 = vmatpush1.bf16.msra.mxu0 0
      %428 = vmatprep.subr.bf16.mxu0 0
      %429 = vmatpush1.bf16.msra.mxu0 0
      %430 = vmatprep.mubr.bf16.mxu0 0
      %431 = vmatmul.mubr.bf16.gmra.mrb[0].mxu0 %v342
      %v432 = vpop.f32.mrb[0].mxu0
      %v433 = vadd.f32 0.0, %v432
      %v434 = vpop.f32.mrb[0].mxu0
      %v435 = vpop.f32.mrb[0].mxu0
      %v436 = vadd.f32 0.0, %v435
      %v437 = vpop.f32.mrb[0].mxu0
      %438 = vmatprep.mubr.bf16.mxu0 0
      %439 = vmatmul.mubr.bf16.gmra.mrb[0].mxu0 %v343
      %v440 = vpop.f32.mrb[0].mxu0
      %v441 = vadd.f32 0.0, %v440
      %v442 = vpop.f32.mrb[0].mxu0
      %v443 = vpop.f32.mrb[0].mxu0
      %v444 = vadd.f32 0.0, %v443
      %v445 = vpop.f32.mrb[0].mxu0
      %446 = vmatprep.mubr.bf16.mxu0 0
      %447 = vmatmul.mubr.bf16.gmra.mrb[0].mxu0 %v344
      %v448 = vpop.f32.mrb[0].mxu0
      %v449 = vadd.f32 0.0, %v448
      %v450 = vpop.f32.mrb[0].mxu0
      %v451 = vpop.f32.mrb[0].mxu0
      %v452 = vadd.f32 0.0, %v451
      %v453 = vpop.f32.mrb[0].mxu0
      %454 = vmatprep.mubr.bf16.mxu0 0
      %455 = vmatmul.mubr.bf16.gmra.mrb[0].mxu0 %v345
      %v456 = vpop.f32.mrb[0].mxu0
      %v457 = vadd.f32 0.0, %v456
      %v458 = vpop.f32.mrb[0].mxu0
      %v459 = vpop.f32.mrb[0].mxu0
      %v460 = vadd.f32 0.0, %v459
      %v461 = vpop.f32.mrb[0].mxu0
      %462 = vdwg.mxu0
      %v463 = vpack.c.bf16 %v436, %v433
      %v464 = vpack.c.bf16 %v444, %v441
      %v465 = vpack.c.bf16 %v452, %v449
      %v466 = vpack.c.bf16 %v460, %v457
      %v471 = vunpack.c.l.b16 %v463
      %v472 = vunpack.c.h.b16 %v463
      %v473 = vunpack.c.l.b16 %v464
      %v474 = vunpack.c.h.b16 %v464
      %v475 = vunpack.c.l.b16 %v465
      %v476 = vunpack.c.h.b16 %v465
      %v477 = vunpack.c.l.b16 %v466
      %v478 = vunpack.c.h.b16 %v466
      %v479 = vpack.c.b16 %v471, %v471
      %v480 = vpack.c.b16 %v472, %v472
      %v481 = vpack.c.b16 %v473, %v473
      %v482 = vpack.c.b16 %v474, %v474
      %v483 = vpack.c.b16 %v475, %v475
      %v484 = vpack.c.b16 %v476, %v476
      %v485 = vpack.c.b16 %v477, %v477
      %v486 = vpack.c.b16 %v478, %v478
      %495 = vst [vmem:[%s289] sm:$0xf] %v479
      %496 = vst [vmem:[%s289 + $0x4] sm:$0xf] %v480
      %497 = vst [vmem:[%s289 + $0x8] sm:$0xf] %v481
      %498 = vst [vmem:[%s289 + $0xc] sm:$0xf] %v482
      %499 = vst [vmem:[%s289 + $0x10] sm:$0xf] %v483
      %500 = vst [vmem:[%s289 + $0x14] sm:$0xf] %v484
      %501 = vst [vmem:[%s289 + $0x18] sm:$0xf] %v485
      %502 = vst [vmem:[%s289 + $0x1c] sm:$0xf] %v486
      %v503 = vlaneseq
      %v504 = vshrl.u32 %v503, 7
      %vm505 = vcmp.eq.s32.totalorder %v504, 0
      %v506 = vadd.f32 %v433, %v436
      %v507 = vadd.f32 %v506, %v441
      %v508 = vadd.f32 %v507, %v444
      %v509 = vadd.f32 %v508, %v449
      %v510 = vadd.f32 %v509, %v452
      %v511 = vadd.f32 %v510, %v457
      %v512 = vadd.f32 %v511, %v460
      %v513 = vrot.slane %v512, 4
      %v514 = vadd.f32 %v512, %v513
      %v515 = vrot.slane %v514, 2
      %v516 = vadd.f32 %v514, %v515
      %v517 = vrot.slane %v516, 1
      %v518 = vadd.f32 %v516, %v517
      %v519 = vsel %vm505, %v518, 0.0
      %vm520 = vcmp.eq.s32.totalorder %v504, 1
      %v521 = vmul.f32 %v433, %v433
      %v522 = vmul.f32 %v436, %v436
      %v523 = vmul.f32 %v441, %v441
      %v524 = vmul.f32 %v444, %v444
      %v525 = vmul.f32 %v449, %v449
      %v526 = vmul.f32 %v452, %v452
      %v527 = vmul.f32 %v457, %v457
      %v528 = vmul.f32 %v460, %v460
      %v529 = vadd.f32 %v521, %v522
      %v530 = vadd.f32 %v529, %v523
      %v531 = vadd.f32 %v530, %v524
      %v532 = vadd.f32 %v531, %v525
      %v533 = vadd.f32 %v532, %v526
      %v534 = vadd.f32 %v533, %v527
      %v535 = vadd.f32 %v534, %v528
      %v536 = vrot.slane %v535, 4
      %v537 = vadd.f32 %v535, %v536
      %v538 = vrot.slane %v537, 2
      %v539 = vadd.f32 %v537, %v538
      %v540 = vrot.slane %v539, 1
      %v541 = vadd.f32 %v539, %v540
      %v542 = vsel %vm520, %v541, 0.0
      %v543 = vadd.f32 %v519, %v542
      %v544 = vld [vmem:[%s283] sm:$0xf]
      %v545 = vld [vmem:[%s283 + $0x4] sm:$0xf]
      %v546 = vld [vmem:[%s283 + $0x8] sm:$0xf]
      %v547 = vld [vmem:[%s283 + $0xc] sm:$0xf]
      %v548 = vld [vmem:[%s283 + $0x10] sm:$0xf]
      %v549 = vld [vmem:[%s283 + $0x14] sm:$0xf]
      %v550 = vld [vmem:[%s283 + $0x18] sm:$0xf]
      %v551 = vld [vmem:[%s283 + $0x1c] sm:$0xf]
      %v552 = vld [vmem:[%s3] sm:$0xf]
      %v553 = vld [vmem:[%s3 + $0x4] sm:$0xf]
      %v554 = vld [vmem:[%s3 + $0x8] sm:$0xf]
      %v555 = vld [vmem:[%s3 + $0xc] sm:$0xf]
      %v556 = vld [vmem:[%s3 + $0x10] sm:$0xf]
      %v557 = vld [vmem:[%s3 + $0x14] sm:$0xf]
      %v558 = vld [vmem:[%s3 + $0x18] sm:$0xf]
      %v559 = vld [vmem:[%s3 + $0x1c] sm:$0xf]
      %v560 = vld [vmem:[%s3 + $0x20] sm:$0xf]
      %v561 = vld [vmem:[%s3 + $0x24] sm:$0xf]
      %v562 = vld [vmem:[%s3 + $0x28] sm:$0xf]
      %v563 = vld [vmem:[%s3 + $0x2c] sm:$0xf]
      %v564 = vld [vmem:[%s3 + $0x30] sm:$0xf]
      %v565 = vld [vmem:[%s3 + $0x34] sm:$0xf]
      %v566 = vld [vmem:[%s3 + $0x38] sm:$0xf]
      %v567 = vld [vmem:[%s3 + $0x3c] sm:$0xf]
      %v576 = vunpack.c.l.b16 %v544
      %v577 = vunpack.c.l.b16 %v545
      %v578 = vunpack.c.l.b16 %v546
      %v579 = vunpack.c.l.b16 %v547
      %v580 = vunpack.c.l.b16 %v548
      %v581 = vunpack.c.l.b16 %v549
      %v582 = vunpack.c.l.b16 %v550
      %v583 = vunpack.c.l.b16 %v551
      %v584 = vpack.c.b16 %v577, %v576
      %v585 = vpack.c.b16 %v579, %v578
      %v586 = vpack.c.b16 %v581, %v580
      %v587 = vpack.c.b16 %v583, %v582
      %v608 = vunpack.c.l.b16 %v552
      %v609 = vunpack.c.l.b16 %v553
      %v610 = vunpack.c.l.b16 %v554
      %v611 = vunpack.c.l.b16 %v555
      %v612 = vunpack.c.l.b16 %v556
      %v613 = vunpack.c.l.b16 %v557
      %v614 = vunpack.c.l.b16 %v558
      %v615 = vunpack.c.l.b16 %v559
      %v616 = vunpack.c.l.b16 %v560
      %v617 = vunpack.c.l.b16 %v561
      %v618 = vunpack.c.l.b16 %v562
      %v619 = vunpack.c.l.b16 %v563
      %v620 = vunpack.c.l.b16 %v564
      %v621 = vunpack.c.l.b16 %v565
      %v622 = vunpack.c.l.b16 %v566
      %v623 = vunpack.c.l.b16 %v567
      %v624 = vpack.c.b16 %v609, %v608
      %v625 = vpack.c.b16 %v611, %v610
      %v626 = vpack.c.b16 %v613, %v612
      %v627 = vpack.c.b16 %v615, %v614
      %v628 = vpack.c.b16 %v617, %v616
      %v629 = vpack.c.b16 %v619, %v618
      %v630 = vpack.c.b16 %v621, %v620
      %v631 = vpack.c.b16 %v623, %v622
      %640 = vmatprep.subr.bf16.mxu0 0
      %641 = vmatpush1.bf16.msra.mxu0 %v624
      %642 = vmatprep.subr.bf16.mxu0 0
      %643 = vmatpush1.bf16.msra.mxu0 %v625
      %644 = vmatprep.subr.bf16.mxu0 0
      %645 = vmatpush1.bf16.msra.mxu0 %v626
      %646 = vmatprep.subr.bf16.mxu0 0
      %647 = vmatpush1.bf16.msra.mxu0 %v627
      %648 = vmatprep.subr.bf16.mxu0 0
      %649 = vmatpush1.bf16.msra.mxu0 %v628
      %650 = vmatprep.subr.bf16.mxu0 0
      %651 = vmatpush1.bf16.msra.mxu0 %v629
      %652 = vmatprep.subr.bf16.mxu0 0
      %653 = vmatpush1.bf16.msra.mxu0 %v630
      %654 = vmatprep.subr.bf16.mxu0 0
      %655 = vmatpush1.bf16.msra.mxu0 %v631
      %656 = vmatprep.subr.bf16.mxu0 0
      %657 = vmatpush1.bf16.msra.mxu0 0
      %658 = vmatprep.subr.bf16.mxu0 0
      %659 = vmatpush1.bf16.msra.mxu0 0
      %660 = vmatprep.subr.bf16.mxu0 0
      %661 = vmatpush1.bf16.msra.mxu0 0
      %662 = vmatprep.subr.bf16.mxu0 0
      %663 = vmatpush1.bf16.msra.mxu0 0
      %664 = vmatprep.subr.bf16.mxu0 0
      %665 = vmatpush1.bf16.msra.mxu0 0
      %666 = vmatprep.subr.bf16.mxu0 0
      %667 = vmatpush1.bf16.msra.mxu0 0
      %668 = vmatprep.subr.bf16.mxu0 0
      %669 = vmatpush1.bf16.msra.mxu0 0
      %670 = vmatprep.subr.bf16.mxu0 0
      %671 = vmatpush1.bf16.msra.mxu0 0
      %672 = vmatprep.mubr.bf16.mxu0 0
      %673 = vmatmul.mubr.bf16.gmra.mrb[0].mxu0 %v584
      %v674 = vpop.f32.mrb[0].mxu0
      %v675 = vadd.f32 0.0, %v674
      %v676 = vpop.f32.mrb[0].mxu0
      %v677 = vpop.f32.mrb[0].mxu0
      %v678 = vadd.f32 0.0, %v677
      %v679 = vpop.f32.mrb[0].mxu0
      %680 = vmatprep.mubr.bf16.mxu0 0
      %681 = vmatmul.mubr.bf16.gmra.mrb[0].mxu0 %v585
      %v682 = vpop.f32.mrb[0].mxu0
      %v683 = vadd.f32 0.0, %v682
      %v684 = vpop.f32.mrb[0].mxu0
      %v685 = vpop.f32.mrb[0].mxu0
      %v686 = vadd.f32 0.0, %v685
      %v687 = vpop.f32.mrb[0].mxu0
      %688 = vmatprep.mubr.bf16.mxu0 0
      %689 = vmatmul.mubr.bf16.gmra.mrb[0].mxu0 %v586
      %v690 = vpop.f32.mrb[0].mxu0
      %v691 = vadd.f32 0.0, %v690
      %v692 = vpop.f32.mrb[0].mxu0
      %v693 = vpop.f32.mrb[0].mxu0
      %v694 = vadd.f32 0.0, %v693
      %v695 = vpop.f32.mrb[0].mxu0
      %696 = vmatprep.mubr.bf16.mxu0 0
      %697 = vmatmul.mubr.bf16.gmra.mrb[0].mxu0 %v587
      %v698 = vpop.f32.mrb[0].mxu0
      %v699 = vadd.f32 0.0, %v698
      %v700 = vpop.f32.mrb[0].mxu0
      %v701 = vpop.f32.mrb[0].mxu0
      %v702 = vadd.f32 0.0, %v701
      %v703 = vpop.f32.mrb[0].mxu0
      %704 = vdwg.mxu0
      %v705 = vpack.c.bf16 %v678, %v675
      %v706 = vpack.c.bf16 %v686, %v683
      %v707 = vpack.c.bf16 %v694, %v691
      %v708 = vpack.c.bf16 %v702, %v699
      %v713 = vunpack.c.l.b16 %v705
      %v714 = vunpack.c.h.b16 %v705
      %v715 = vunpack.c.l.b16 %v706
      %v716 = vunpack.c.h.b16 %v706
      %v717 = vunpack.c.l.b16 %v707
      %v718 = vunpack.c.h.b16 %v707
      %v719 = vunpack.c.l.b16 %v708
      %v720 = vunpack.c.h.b16 %v708
      %v721 = vpack.c.b16 %v713, %v713
      %v722 = vpack.c.b16 %v714, %v714
      %v723 = vpack.c.b16 %v715, %v715
      %v724 = vpack.c.b16 %v716, %v716
      %v725 = vpack.c.b16 %v717, %v717
      %v726 = vpack.c.b16 %v718, %v718
      %v727 = vpack.c.b16 %v719, %v719
      %v728 = vpack.c.b16 %v720, %v720
      %737 = vst [vmem:[%s295] sm:$0xf] %v721
      %738 = vst [vmem:[%s295 + $0x4] sm:$0xf] %v722
      %739 = vst [vmem:[%s295 + $0x8] sm:$0xf] %v723
      %740 = vst [vmem:[%s295 + $0xc] sm:$0xf] %v724
      %741 = vst [vmem:[%s295 + $0x10] sm:$0xf] %v725
      %742 = vst [vmem:[%s295 + $0x14] sm:$0xf] %v726
      %743 = vst [vmem:[%s295 + $0x18] sm:$0xf] %v727
      %744 = vst [vmem:[%s295 + $0x1c] sm:$0xf] %v728
      %vm745 = vcmp.eq.s32.totalorder %v504, 2
      %v746 = vadd.f32 %v675, %v678
      %v747 = vadd.f32 %v746, %v683
      %v748 = vadd.f32 %v747, %v686
      %v749 = vadd.f32 %v748, %v691
      %v750 = vadd.f32 %v749, %v694
      %v751 = vadd.f32 %v750, %v699
      %v752 = vadd.f32 %v751, %v702
      %v753 = vrot.slane %v752, 4
      %v754 = vadd.f32 %v752, %v753
      %v755 = vrot.slane %v754, 2
      %v756 = vadd.f32 %v754, %v755
      %v757 = vrot.slane %v756, 1
      %v758 = vadd.f32 %v756, %v757
      %v759 = vsel %vm745, %v758, 0.0
      %v760 = vadd.f32 %v543, %v759
      %vm761 = vcmp.eq.s32.totalorder %v504, 3
      %v762 = vmul.f32 %v675, %v675
      %v763 = vmul.f32 %v678, %v678
      %v764 = vmul.f32 %v683, %v683
      %v765 = vmul.f32 %v686, %v686
      %v766 = vmul.f32 %v691, %v691
      %v767 = vmul.f32 %v694, %v694
      %v768 = vmul.f32 %v699, %v699
      %v769 = vmul.f32 %v702, %v702
      %v770 = vadd.f32 %v762, %v763
      %v771 = vadd.f32 %v770, %v764
      %v772 = vadd.f32 %v771, %v765
      %v773 = vadd.f32 %v772, %v766
      %v774 = vadd.f32 %v773, %v767
      %v775 = vadd.f32 %v774, %v768
      %v776 = vadd.f32 %v775, %v769
      %v777 = vrot.slane %v776, 4
      %v778 = vadd.f32 %v776, %v777
      %v779 = vrot.slane %v778, 2
      %v780 = vadd.f32 %v778, %v779
      %v781 = vrot.slane %v780, 1
      %v782 = vadd.f32 %v780, %v781
      %v783 = vsel %vm761, %v782, 0.0
      %v784 = vadd.f32 %v760, %v783
      %785 = vst [vmem:[%s300] sm:$0xff] %v784
      %s786 = smul.u32 8, %s18
      %p787 = scmp.lt.s32.totalorder %s786, 15
      %s788 = scalar_select %p787, %s786, 15
      %s789 = smul.addr %s788, 4
      %s790 = scalar_lea.vmem %s4, %s789
      %s791 = smul.u32 8, %s18
      %p792 = scmp.lt.s32.totalorder %s791, 15
      %s793 = scalar_select %p792, %s791, 15
      %s794 = smul.addr %s793, 4
      %s795 = scalar_lea.vmem %s5, %s794
      %p796 = scmp.lt.s32.totalorder %s18, 1
      %s797 = scalar_select %p796, %s18, 1
      %s798 = smul.addr %s797, 8
      %s799 = scalar_lea.vmem %s6, %s798
      // Predicated region
      $region37: #{basic_block_forward.3} parent=35 // pred_check
        %p800 = pneg %p130
      $region38: #{basic_block_forward.3} parent=35 // pred_check_branch
        %802 = sbr.rel (%p800) target = $region40
      $region39: #{basic_block_forward.3} parent=35 // pred_region
        %s803 = smul.u32 8, %s18
      $region40: #{basic_block_forward.3} parent=35 // pred_fallthru
        _
      // Predicated region
      $region41: #{basic_block_forward.3} parent=35 // pred_check
        %p804 = pneg %p156
      $region42: #{basic_block_forward.3} parent=35 // pred_check_branch
        %806 = sbr.rel (%p804) target = $region44
      $region43: #{basic_block_forward.3} parent=35 // pred_region
        %s807 = smul.u32 8, %s18
      $region44: #{basic_block_forward.3} parent=35 // pred_fallthru
        _
      // Predicated region
      $region45: #{basic_block_forward.3} parent=35 // pred_check
        %p808 = pneg %p182
      $region46: #{basic_block_forward.3} parent=35 // pred_check_branch
        %810 = sbr.rel (%p808) target = $region48
      $region47: #{basic_block_forward.3} parent=35 // pred_region
        _
      $region48: #{basic_block_forward.3} parent=35 // pred_fallthru
        _
    $region36: #{basic_block_forward.3} parent=5 // pred_fallthru
      _
    %p811 = scmp.le.s32.totalorder 2, %s13
    // Predicated region
    $region49: #{basic_block_forward.3} parent=5 // pred_check
      %p812 = pneg %p811
    $region50: #{basic_block_forward.3} parent=5 // pred_check_branch
      %814 = sbr.rel (%p812) target = $region52
    $region51: #{basic_block_forward.3} parent=5 // pred_region
      %s815 = ssub.s32 %s13, 2
      // Predicated region
      $region53: #{basic_block_forward.3} parent=51 // pred_check
        %p816 = pneg %p136
      $region54: #{basic_block_forward.3} parent=51 // pred_check_branch
        %818 = sbr.rel (%p816) target = $region56
      $region55: #{basic_block_forward.3} parent=51 // pred_region
        %s819 = smul.u32 8, %s19
        %p820 = scmp.lt.s32.totalorder %s819, 15
        %s821 = scalar_select %p820, %s819, 15
        %s822 = smul.addr %s821, 4
        %s823 = scalar_lea.vmem %s4, %s822
      $region56: #{basic_block_forward.3} parent=51 // pred_fallthru
        _
      // Predicated region
      $region57: #{basic_block_forward.3} parent=51 // pred_check
        %p824 = pneg %p162
      $region58: #{basic_block_forward.3} parent=51 // pred_check_branch
        %826 = sbr.rel (%p824) target = $region60
      $region59: #{basic_block_forward.3} parent=51 // pred_region
        %s827 = smul.u32 8, %s19
        %p828 = scmp.lt.s32.totalorder %s827, 15
        %s829 = scalar_select %p828, %s827, 15
        %s830 = smul.addr %s829, 4
        %s831 = scalar_lea.vmem %s5, %s830
      $region60: #{basic_block_forward.3} parent=51 // pred_fallthru
        _
      // Predicated region
      $region61: #{basic_block_forward.3} parent=51 // pred_check
        %p832 = pneg %p188
      $region62: #{basic_block_forward.3} parent=51 // pred_check_branch
        %834 = sbr.rel (%p832) target = $region64
      $region63: #{basic_block_forward.3} parent=51 // pred_region
        %p835 = scmp.lt.s32.totalorder %s19, 1
        %s836 = scalar_select %p835, %s19, 1
        %s837 = smul.addr %s836, 8
        %s838 = scalar_lea.vmem %s6, %s837
      $region64: #{basic_block_forward.3} parent=51 // pred_fallthru
        _
    $region52: #{basic_block_forward.3} parent=5 // pred_fallthru
      _
  $region6: #{basic_block_forward.3} parent=0 // loop_footer
    %s17 = sadd.s32 1, %s13
  $region7: #{basic_block_forward.3} parent=0 // loop_footer_branch
    %12 = sbr.rel target = $region3
  $region8: #{basic_block_forward.3} parent=0 // loop_exit
    _

// kernel: basic_block_forward.5
$region0: #{basic_block_forward.5}
  #allocation0 [shape = 'u32[]', space=smem, size = 0x4, offset = 0x4, fixed_abs, tag = 'smem constant byte address 0x4 - core index']
  #allocation1 [shape = 'u32[144,128]{1,0:T(1,128)}', space=vmem, size = 0x12000, scoped, tag = 'internal scratch']
  %s0 = inlined_call_operand.vmem [shape: bf16[2,64,128], index: 0, kind: input, shape index: {}]
  %s1 = inlined_call_operand.vmem [shape: bf16[2,64,128], index: 1, kind: input, shape index: {}]
  %s2 = inlined_call_operand.vmem [shape: f32[2,128], index: 2, kind: input, shape index: {}]
  %s3 = inlined_call_operand.vmem [shape: f32[2,128], index: 3, kind: input, shape index: {}]
  %s4 = inlined_call_operand.vmem [shape: f32[2,64,128], index: 4, kind: output, shape index: {}]
  %s5 = sld [smem:[#allocation0]]
  $region49: #{basic_block_forward.5} parent=0
    _
  %s7 = ssub.s32 1, %s5
  %s8 = scalar_select 0, %s7, %s5
  loop: start=0, step=1, limit=4
  $region2: #{basic_block_forward.5} parent=0 // loop_pre_header
    _
  $region3: #{basic_block_forward.5} parent=0 // loop_header
    %s10 = sphi 0, %s14
    %p11 = scmp.ge.s32.totalorder %s10, 4
    %s20 = sphi 0, %s22
    %s23 = sphi 0, %s20
    %s24 = sphi 0, %s23
    %s40 = sphi 0, %s24
    %s46 = sphi 0, %s48
    %s49 = sphi 0, %s46
    %s50 = sphi 0, %s49
    %s66 = sphi 0, %s50
    %s70 = sphi 0, %s70
    %s72 = sphi 0, %s70
    %s73 = sphi 0, %s72
    %s87 = sphi 0, %s73
    %s91 = sphi 0, %s91
    %s93 = sphi 0, %s91
    %s94 = sphi 0, %s93
    %s108 = sphi 0, %s94
    %s114 = sphi 0, %s116
    %s117 = sphi 0, %s114
    %s118 = sphi 0, %s117
    %s134 = sphi 0, %s118
  $region4: #{basic_block_forward.5} parent=0 // loop_header_branch
    %13 = sbr.rel (%p11) target = $region8
  $region5: #{basic_block_forward.5} parent=0 // loop_body
    %s15 = ssub.s32 %s10, 1
    %s16 = ssub.s32 %s10, 2
    %s17 = sadd.s32 %s10, 1
    %s18 = ssub.s32 %s10, %s17
    %p19 = scmp.eq.s32.totalorder %s18, 0
    %s21 = sadd.s32 %s20, 1
    %s22 = scalar_select %p19, %s20, %s21
    %p25 = pneg %p19
    %p26 = scmp.eq.s32.totalorder %s10, 1
    %p27 = por %p25, %p26
    %p28 = scmp.ne.s32.totalorder %s20, %s23
    %p29 = scmp.eq.s32.totalorder %s10, 0
    %p30 = por %p28, %p29
    %p31 = scmp.ne.s32.totalorder %s20, %s23
    %p32 = scmp.eq.s32.totalorder %s15, 1
    %p33 = por %p31, %p32
    %p34 = scmp.ne.s32.totalorder %s23, %s24
    %p35 = scmp.eq.s32.totalorder %s15, 0
    %p36 = por %p34, %p35
    %p37 = scmp.ne.s32.totalorder %s23, %s24
    %p38 = scmp.eq.s32.totalorder %s16, 1
    %p39 = por %p37, %p38
    %p41 = scmp.ne.s32.totalorder %s24, %s40
    %p42 = scmp.eq.s32.totalorder %s16, 0
    %p43 = por %p41, %p42
    %s44 = ssub.s32 %s10, %s17
    %p45 = scmp.eq.s32.totalorder %s44, 0
    %s47 = sadd.s32 %s46, 1
    %s48 = scalar_select %p45, %s46, %s47
    %p51 = pneg %p45
    %p52 = scmp.eq.s32.totalorder %s10, 1
    %p53 = por %p51, %p52
    %p54 = scmp.ne.s32.totalorder %s46, %s49
    %p55 = scmp.eq.s32.totalorder %s10, 0
    %p56 = por %p54, %p55
    %p57 = scmp.ne.s32.totalorder %s46, %s49
    %p58 = scmp.eq.s32.totalorder %s15, 1
    %p59 = por %p57, %p58
    %p60 = scmp.ne.s32.totalorder %s49, %s50
    %p61 = scmp.eq.s32.totalorder %s15, 0
    %p62 = por %p60, %p61
    %p63 = scmp.ne.s32.totalorder %s49, %s50
    %p64 = scmp.eq.s32.totalorder %s16, 1
    %p65 = por %p63, %p64
    %p67 = scmp.ne.s32.totalorder %s50, %s66
    %p68 = scmp.eq.s32.totalorder %s16, 0
    %p69 = por %p67, %p68
    %s71 = sadd.s32 %s70, 1
    %p74 = scmp.eq.s32.totalorder %s10, 1
    %p75 = scmp.ne.s32.totalorder %s70, %s72
    %p76 = scmp.eq.s32.totalorder %s10, 0
    %p77 = por %p75, %p76
    %p78 = scmp.ne.s32.totalorder %s70, %s72
    %p79 = scmp.eq.s32.totalorder %s15, 1
    %p80 = por %p78, %p79
    %p81 = scmp.ne.s32.totalorder %s72, %s73
    %p82 = scmp.eq.s32.totalorder %s15, 0
    %p83 = por %p81, %p82
    %p84 = scmp.ne.s32.totalorder %s72, %s73
    %p85 = scmp.eq.s32.totalorder %s16, 1
    %p86 = por %p84, %p85
    %p88 = scmp.ne.s32.totalorder %s73, %s87
    %p89 = scmp.eq.s32.totalorder %s16, 0
    %p90 = por %p88, %p89
    %s92 = sadd.s32 %s91, 1
    %p95 = scmp.eq.s32.totalorder %s10, 1
    %p96 = scmp.ne.s32.totalorder %s91, %s93
    %p97 = scmp.eq.s32.totalorder %s10, 0
    %p98 = por %p96, %p97
    %p99 = scmp.ne.s32.totalorder %s91, %s93
    %p100 = scmp.eq.s32.totalorder %s15, 1
    %p101 = por %p99, %p100
    %p102 = scmp.ne.s32.totalorder %s93, %s94
    %p103 = scmp.eq.s32.totalorder %s15, 0
    %p104 = por %p102, %p103
    %p105 = scmp.ne.s32.totalorder %s93, %s94
    %p106 = scmp.eq.s32.totalorder %s16, 1
    %p107 = por %p105, %p106
    %p109 = scmp.ne.s32.totalorder %s94, %s108
    %p110 = scmp.eq.s32.totalorder %s16, 0
    %p111 = por %p109, %p110
    %s112 = ssub.s32 %s10, %s17
    %p113 = scmp.eq.s32.totalorder %s112, 0
    %s115 = sadd.s32 %s114, 1
    %s116 = scalar_select %p113, %s114, %s115
    %p119 = pneg %p113
    %p120 = scmp.eq.s32.totalorder %s10, 1
    %p121 = por %p119, %p120
    %p122 = scmp.ne.s32.totalorder %s114, %s117
    %p123 = scmp.eq.s32.totalorder %s10, 0
    %p124 = por %p122, %p123
    %p125 = scmp.ne.s32.totalorder %s114, %s117
    %p126 = scmp.eq.s32.totalorder %s15, 1
    %p127 = por %p125, %p126
    %p128 = scmp.ne.s32.totalorder %s117, %s118
    %p129 = scmp.eq.s32.totalorder %s15, 0
    %p130 = por %p128, %p129
    %p131 = scmp.ne.s32.totalorder %s117, %s118
    %p132 = scmp.eq.s32.totalorder %s16, 1
    %p133 = por %p131, %p132
    %p135 = scmp.ne.s32.totalorder %s118, %s134
    %p136 = scmp.eq.s32.totalorder %s16, 0
    %p137 = por %p135, %p136
    %p138 = scmp.le.s32.totalorder 1, %s10
    %p139 = scmp.lt.s32.totalorder %s10, 3
    %p140 = pnand %p138, %p139
    %p141 = pneg %p140
    // Predicated region
    $region9: #{basic_block_forward.5} parent=5 // pred_check
      _
    $region10: #{basic_block_forward.5} parent=5 // pred_check_branch
      %143 = sbr.rel (%p140) target = $region12
    $region11: #{basic_block_forward.5} parent=5 // pred_region
      %s144 = ssub.s32 %s10, 1
      // Predicated region
      $region13: #{basic_block_forward.5} parent=11 // pred_check
        %p145 = pneg %p83
      $region14: #{basic_block_forward.5} parent=11 // pred_check_branch
        %147 = sbr.rel (%p145) target = $region16
      $region15: #{basic_block_forward.5} parent=11 // pred_region
        _
      $region16: #{basic_block_forward.5} parent=11 // pred_fallthru
        _
      // Predicated region
      $region17: #{basic_block_forward.5} parent=11 // pred_check
        %p148 = pneg %p104
      $region18: #{basic_block_forward.5} parent=11 // pred_check_branch
        %150 = sbr.rel (%p148) target = $region20
      $region19: #{basic_block_forward.5} parent=11 // pred_region
        _
      $region20: #{basic_block_forward.5} parent=11 // pred_fallthru
        _
    $region12: #{basic_block_forward.5} parent=5 // pred_fallthru
      _
    %p151 = scmp.lt.s32.totalorder %s10, 2
    // Predicated region
    $region21: #{basic_block_forward.5} parent=5 // pred_check
      %p152 = pneg %p151
    $region22: #{basic_block_forward.5} parent=5 // pred_check_branch
      %154 = sbr.rel (%p152) target = $region24
    $region23: #{basic_block_forward.5} parent=5 // pred_region
      // Predicated region
      $region25: #{basic_block_forward.5} parent=23 // pred_check
        %p155 = pneg %p30
      $region26: #{basic_block_forward.5} parent=23 // pred_check_branch
        %157 = sbr.rel (%p155) target = $region28
      $region27: #{basic_block_forward.5} parent=23 // pred_region
        %p158 = scmp.lt.s32.totalorder %s10, 1
        %s159 = scalar_select %p158, %s10, 1
        %s160 = smul.addr %s159, 8
        %s161 = smul.addr %s160, 4
        %s162 = scalar_lea.vmem %s0, %s161
      $region28: #{basic_block_forward.5} parent=23 // pred_fallthru
        _
      // Predicated region
      $region29: #{basic_block_forward.5} parent=23 // pred_check
        %p163 = pneg %p56
      $region30: #{basic_block_forward.5} parent=23 // pred_check_branch
        %165 = sbr.rel (%p163) target = $region32
      $region31: #{basic_block_forward.5} parent=23 // pred_region
        %p166 = scmp.lt.s32.totalorder %s10, 1
        %s167 = scalar_select %p166, %s10, 1
        %s168 = smul.addr %s167, 8
        %s169 = smul.addr %s168, 4
        %s170 = scalar_lea.vmem %s1, %s169
      $region32: #{basic_block_forward.5} parent=23 // pred_fallthru
        _
    $region24: #{basic_block_forward.5} parent=5 // pred_fallthru
      _
    %p171 = scmp.le.s32.totalorder 1, %s10
    %p172 = scmp.lt.s32.totalorder %s10, 3
    %p173 = pnand %p171, %p172
    %p174 = pneg %p173
    // Predicated region
    $region33: #{basic_block_forward.5} parent=5 // pred_check
      _
    $region34: #{basic_block_forward.5} parent=5 // pred_check_branch
      %176 = sbr.rel (%p173) target = $region36
    $region35: #{basic_block_forward.5} parent=5 // pred_region
      %s177 = ssub.s32 %s10, 1
      %p178 = scmp.lt.s32.totalorder %s15, 1
      %s179 = scalar_select %p178, %s15, 1
      %s180 = smul.addr %s179, 8
      %s181 = smul.addr %s180, 4
      %s182 = scalar_lea.vmem %s0, %s181
      %p183 = pneg %p36
      %p184 = pneg %p33
      %p185 = scmp.lt.s32.totalorder %s15, 1
      %s186 = scalar_select %p185, %s15, 1
      %s187 = smul.addr %s186, 8
      %s188 = smul.addr %s187, 4
      %s189 = scalar_lea.vmem %s1, %s188
      %p190 = pneg %p62
      %p191 = pneg %p59
      %p192 = pneg %p83
      %p193 = pneg %p80
      %p194 = pneg %p104
      %p195 = pneg %p101
      %p196 = pneg %p130
      %p197 = pneg %p127
      %p198 = scmp.lt.s32.totalorder %s15, 1
      %s199 = scalar_select %p198, %s15, 1
      %s200 = smul.addr %s199, 8
      %s201 = smul.addr %s200, 8
      %s202 = scalar_lea.vmem %s4, %s201
      %p203 = scmp.lt.s32.totalorder %s15, 1
      %s204 = scalar_select %p203, %s15, 1
      %s205 = smul.addr %s204, 8
      %s206 = smul.addr %s205, 4
      %s207 = scalar_lea.vmem %s0, %s206
      %p208 = scmp.lt.s32.totalorder %s15, 1
      %s209 = scalar_select %p208, %s15, 1
      %s210 = smul.addr %s209, 8
      %s211 = smul.addr %s210, 4
      %s212 = scalar_lea.vmem %s1, %s211
      %p213 = scmp.lt.s32.totalorder %s15, 1
      %s214 = scalar_select %p213, %s15, 1
      %s215 = smul.addr %s214, 8
      %s216 = smul.addr %s215, 8
      %s217 = scalar_lea.vmem %s4, %s216
      %v218 = vld [vmem:[%s212] sm:$0xf]
      %v219 = vld [vmem:[%s212 + $0x4] sm:$0xf]
      %v220 = vld [vmem:[%s212 + $0x8] sm:$0xf]
      %v221 = vld [vmem:[%s212 + $0xc] sm:$0xf]
      %v222 = vld [vmem:[%s212 + $0x10] sm:$0xf]
      %v223 = vld [vmem:[%s212 + $0x14] sm:$0xf]
      %v224 = vld [vmem:[%s212 + $0x18] sm:$0xf]
      %v225 = vld [vmem:[%s212 + $0x1c] sm:$0xf]
      %v226 = vunpack.c.l.bf16 %v218
      %v227 = vunpack.c.l.bf16 %v219
      %v228 = vunpack.c.l.bf16 %v220
      %v229 = vunpack.c.l.bf16 %v221
      %v230 = vunpack.c.l.bf16 %v222
      %v231 = vunpack.c.l.bf16 %v223
      %v232 = vunpack.c.l.bf16 %v224
      %v233 = vunpack.c.l.bf16 %v225
      %v234 = vld [vmem:[%s3] sm:$0x1]
      %v235 = vlaneseq
      %v236 = vshrl.u32 %v235, 7
      %v237 = vsub.s32 0, %v236
      %v238 = vrot.slane %v234, %v237
      %v239 = vmul.f32 %v226, %v238
      %v240 = vmul.f32 %v227, %v238
      %v241 = vmul.f32 %v228, %v238
      %v242 = vmul.f32 %v229, %v238
      %v243 = vmul.f32 %v230, %v238
      %v244 = vmul.f32 %v231, %v238
      %v245 = vmul.f32 %v232, %v238
      %v246 = vmul.f32 %v233, %v238
      %v247 = vld [vmem:[%s3 + $0x1] sm:$0x1]
      %v248 = vlaneseq
      %v249 = vshrl.u32 %v248, 7
      %v250 = vsub.s32 0, %v249
      %v251 = vrot.slane %v247, %v250
      %v252 = vadd.f32 %v239, %v251
      %v253 = vadd.f32 %v240, %v251
      %v254 = vadd.f32 %v241, %v251
      %v255 = vadd.f32 %v242, %v251
      %v256 = vadd.f32 %v243, %v251
      %v257 = vadd.f32 %v244, %v251
      %v258 = vadd.f32 %v245, %v251
      %v259 = vadd.f32 %v246, %v251
      %v260 = vld [vmem:[%s207] sm:$0xf]
      %v261 = vld [vmem:[%s207 + $0x4] sm:$0xf]
      %v262 = vld [vmem:[%s207 + $0x8] sm:$0xf]
      %v263 = vld [vmem:[%s207 + $0xc] sm:$0xf]
      %v264 = vld [vmem:[%s207 + $0x10] sm:$0xf]
      %v265 = vld [vmem:[%s207 + $0x14] sm:$0xf]
      %v266 = vld [vmem:[%s207 + $0x18] sm:$0xf]
      %v267 = vld [vmem:[%s207 + $0x1c] sm:$0xf]
      %v268 = vunpack.c.l.bf16 %v260
      %v269 = vunpack.c.l.bf16 %v261
      %v270 = vunpack.c.l.bf16 %v262
      %v271 = vunpack.c.l.bf16 %v263
      %v272 = vunpack.c.l.bf16 %v264
      %v273 = vunpack.c.l.bf16 %v265
      %v274 = vunpack.c.l.bf16 %v266
      %v275 = vunpack.c.l.bf16 %v267
      %v276 = vld [vmem:[%s2] sm:$0x1]
      %v277 = vlaneseq
      %v278 = vshrl.u32 %v277, 7
      %v279 = vsub.s32 0, %v278
      %v280 = vrot.slane %v276, %v279
      %v281 = vmul.f32 %v268, %v280
      %v282 = vmul.f32 %v269, %v280
      %v283 = vmul.f32 %v270, %v280
      %v284 = vmul.f32 %v271, %v280
      %v285 = vmul.f32 %v272, %v280
      %v286 = vmul.f32 %v273, %v280
      %v287 = vmul.f32 %v274, %v280
      %v288 = vmul.f32 %v275, %v280
      %v289 = vld [vmem:[%s2 + $0x1] sm:$0x1]
      %v290 = vlaneseq
      %v291 = vshrl.u32 %v290, 7
      %v292 = vsub.s32 0, %v291
      %v293 = vrot.slane %v289, %v292
      %v294 = vadd.f32 %v281, %v293
      %v295 = vadd.f32 %v282, %v293
      %v296 = vadd.f32 %v283, %v293
      %v297 = vadd.f32 %v284, %v293
      %v298 = vadd.f32 %v285, %v293
      %v299 = vadd.f32 %v286, %v293
      %v300 = vadd.f32 %v287, %v293
      %v301 = vadd.f32 %v288, %v293
      %v302 = vadd.f32 %v294, %v252
      %v303 = vadd.f32 %v295, %v253
      %v304 = vadd.f32 %v296, %v254
      %v305 = vadd.f32 %v297, %v255
      %v306 = vadd.f32 %v298, %v256
      %v307 = vadd.f32 %v299, %v257
      %v308 = vadd.f32 %v300, %v258
      %v309 = vadd.f32 %v301, %v259
      %v310 = vmax.f32 %v302, 0.0
      %v311 = vmax.f32 %v303, 0.0
      %v312 = vmax.f32 %v304, 0.0
      %v313 = vmax.f32 %v305, 0.0
      %v314 = vmax.f32 %v306, 0.0
      %v315 = vmax.f32 %v307, 0.0
      %v316 = vmax.f32 %v308, 0.0
      %v317 = vmax.f32 %v309, 0.0
      %318 = vst [vmem:[%s217] sm:$0xff] %v310
      %319 = vst [vmem:[%s217 + $0x8] sm:$0xff] %v311
      %320 = vst [vmem:[%s217 + $0x10] sm:$0xff] %v312
      %321 = vst [vmem:[%s217 + $0x18] sm:$0xff] %v313
      %322 = vst [vmem:[%s217 + $0x20] sm:$0xff] %v314
      %323 = vst [vmem:[%s217 + $0x28] sm:$0xff] %v315
      %324 = vst [vmem:[%s217 + $0x30] sm:$0xff] %v316
      %325 = vst [vmem:[%s217 + $0x38] sm:$0xff] %v317
      %p326 = scmp.lt.s32.totalorder %s15, 1
      %s327 = scalar_select %p326, %s15, 1
      %s328 = smul.addr %s327, 8
      %s329 = smul.addr %s328, 8
      %s330 = scalar_lea.vmem %s4, %s329
      // Predicated region
      $region37: #{basic_block_forward.5} parent=35 // pred_check
        %p331 = pneg %p127
      $region38: #{basic_block_forward.5} parent=35 // pred_check_branch
        %333 = sbr.rel (%p331) target = $region40
      $region39: #{basic_block_forward.5} parent=35 // pred_region
        _
      $region40: #{basic_block_forward.5} parent=35 // pred_fallthru
        _
    $region36: #{basic_block_forward.5} parent=5 // pred_fallthru
      _
    %p334 = scmp.le.s32.totalorder 2, %s10
    // Predicated region
    $region41: #{basic_block_forward.5} parent=5 // pred_check
      %p335 = pneg %p334
    $region42: #{basic_block_forward.5} parent=5 // pred_check_branch
      %337 = sbr.rel (%p335) target = $region44
    $region43: #{basic_block_forward.5} parent=5 // pred_region
      %s338 = ssub.s32 %s10, 2
      // Predicated region
      $region45: #{basic_block_forward.5} parent=43 // pred_check
        %p339 = pneg %p133
      $region46: #{basic_block_forward.5} parent=43 // pred_check_branch
        %341 = sbr.rel (%p339) target = $region48
      $region47: #{basic_block_forward.5} parent=43 // pred_region
        %p342 = scmp.lt.s32.totalorder %s16, 1
        %s343 = scalar_select %p342, %s16, 1
        %s344 = smul.addr %s343, 8
        %s345 = smul.addr %s344, 8
        %s346 = scalar_lea.vmem %s4, %s345
      $region48: #{basic_block_forward.5} parent=43 // pred_fallthru
        _
    $region44: #{basic_block_forward.5} parent=5 // pred_fallthru
      _
  $region6: #{basic_block_forward.5} parent=0 // loop_footer
    %s14 = sadd.s32 1, %s10
  $region7: #{basic_block_forward.5} parent=0 // loop_footer_branch
    %9 = sbr.rel target = $region3
  $region8: #{basic_block_forward.5} parent=0 // loop_exit
    _

// kernel: basic_block_forward.4
$region0: #{basic_block_forward.4}
  #allocation0 [shape = 'u32[]', space=smem, size = 0x4, offset = 0x4, fixed_abs, tag = 'smem constant byte address 0x4 - core index']
  #allocation1 [shape = 'u32[144,128]{1,0:T(1,128)}', space=vmem, size = 0x12000, scoped, tag = 'internal scratch']
  #allocation2 [shape = 'f32[64,128]{1,0:T(8,128)}', space=vmem, size = 0x8000, scoped, tag = 'scratch operand']
  %s0 = inlined_call_operand.vmem [shape: bf16[2,10,10,128], index: 0, kind: input, shape index: {}]
  %s1 = inlined_call_operand.vmem [shape: bf16[9,128,128], index: 1, kind: input, shape index: {}]
  %s2 = inlined_call_operand.vmem [shape: f32[2,128], index: 2, kind: input, shape index: {}]
  %s3 = inlined_call_operand.vmem [shape: bf16[2,64,128], index: 3, kind: output, shape index: {0}]
  %s4 = inlined_call_operand.vmem [shape: f32[2,8,128], index: 4, kind: output, shape index: {1}]
  %5 = xla_tuple %s3, %s4
  %s6 = sld [smem:[#allocation0]]
  $region53: #{basic_block_forward.4} parent=0
    _
  %s8 = ssub.s32 1, %s6
  %s9 = scalar_select 0, %s8, %s6
  loop: start=0, step=1, limit=4
  $region2: #{basic_block_forward.4} parent=0 // loop_pre_header
    _
  $region3: #{basic_block_forward.4} parent=0 // loop_header
    %s11 = sphi 0, %s15
    %p12 = scmp.ge.s32.totalorder %s11, 4
    %s21 = sphi 0, %s23
    %s24 = sphi 0, %s21
    %s25 = sphi 0, %s24
    %s41 = sphi 0, %s25
    %s45 = sphi 0, %s45
    %s47 = sphi 0, %s45
    %s48 = sphi 0, %s47
    %s62 = sphi 0, %s48
    %s66 = sphi 0, %s66
    %s68 = sphi 0, %s66
    %s69 = sphi 0, %s68
    %s83 = sphi 0, %s69
    %s89 = sphi 0, %s91
    %s92 = sphi 0, %s89
    %s93 = sphi 0, %s92
    %s109 = sphi 0, %s93
    %s115 = sphi 0, %s117
    %s118 = sphi 0, %s115
    %s119 = sphi 0, %s118
    %s135 = sphi 0, %s119
  $region4: #{basic_block_forward.4} parent=0 // loop_header_branch
    %14 = sbr.rel (%p12) target = $region8
  $region5: #{basic_block_forward.4} parent=0 // loop_body
    %s16 = ssub.s32 %s11, 1
    %s17 = ssub.s32 %s11, 2
    %s18 = sadd.s32 %s11, 1
    %s19 = ssub.s32 %s11, %s18
    %p20 = scmp.eq.s32.totalorder %s19, 0
    %s22 = sadd.s32 %s21, 1
    %s23 = scalar_select %p20, %s21, %s22
    %p26 = pneg %p20
    %p27 = scmp.eq.s32.totalorder %s11, 1
    %p28 = por %p26, %p27
    %p29 = scmp.ne.s32.totalorder %s21, %s24
    %p30 = scmp.eq.s32.totalorder %s11, 0
    %p31 = por %p29, %p30
    %p32 = scmp.ne.s32.totalorder %s21, %s24
    %p33 = scmp.eq.s32.totalorder %s16, 1
    %p34 = por %p32, %p33
    %p35 = scmp.ne.s32.totalorder %s24, %s25
    %p36 = scmp.eq.s32.totalorder %s16, 0
    %p37 = por %p35, %p36
    %p38 = scmp.ne.s32.totalorder %s24, %s25
    %p39 = scmp.eq.s32.totalorder %s17, 1
    %p40 = por %p38, %p39
    %p42 = scmp.ne.s32.totalorder %s25, %s41
    %p43 = scmp.eq.s32.totalorder %s17, 0
    %p44 = por %p42, %p43
    %s46 = sadd.s32 %s45, 1
    %p49 = scmp.eq.s32.totalorder %s11, 1
    %p50 = scmp.ne.s32.totalorder %s45, %s47
    %p51 = scmp.eq.s32.totalorder %s11, 0
    %p52 = por %p50, %p51
    %p53 = scmp.ne.s32.totalorder %s45, %s47
    %p54 = scmp.eq.s32.totalorder %s16, 1
    %p55 = por %p53, %p54
    %p56 = scmp.ne.s32.totalorder %s47, %s48
    %p57 = scmp.eq.s32.totalorder %s16, 0
    %p58 = por %p56, %p57
    %p59 = scmp.ne.s32.totalorder %s47, %s48
    %p60 = scmp.eq.s32.totalorder %s17, 1
    %p61 = por %p59, %p60
    %p63 = scmp.ne.s32.totalorder %s48, %s62
    %p64 = scmp.eq.s32.totalorder %s17, 0
    %p65 = por %p63, %p64
    %s67 = sadd.s32 %s66, 1
    %p70 = scmp.eq.s32.totalorder %s11, 1
    %p71 = scmp.ne.s32.totalorder %s66, %s68
    %p72 = scmp.eq.s32.totalorder %s11, 0
    %p73 = por %p71, %p72
    %p74 = scmp.ne.s32.totalorder %s66, %s68
    %p75 = scmp.eq.s32.totalorder %s16, 1
    %p76 = por %p74, %p75
    %p77 = scmp.ne.s32.totalorder %s68, %s69
    %p78 = scmp.eq.s32.totalorder %s16, 0
    %p79 = por %p77, %p78
    %p80 = scmp.ne.s32.totalorder %s68, %s69
    %p81 = scmp.eq.s32.totalorder %s17, 1
    %p82 = por %p80, %p81
    %p84 = scmp.ne.s32.totalorder %s69, %s83
    %p85 = scmp.eq.s32.totalorder %s17, 0
    %p86 = por %p84, %p85
    %s87 = ssub.s32 %s11, %s18
    %p88 = scmp.eq.s32.totalorder %s87, 0
    %s90 = sadd.s32 %s89, 1
    %s91 = scalar_select %p88, %s89, %s90
    %p94 = pneg %p88
    %p95 = scmp.eq.s32.totalorder %s11, 1
    %p96 = por %p94, %p95
    %p97 = scmp.ne.s32.totalorder %s89, %s92
    %p98 = scmp.eq.s32.totalorder %s11, 0
    %p99 = por %p97, %p98
    %p100 = scmp.ne.s32.totalorder %s89, %s92
    %p101 = scmp.eq.s32.totalorder %s16, 1
    %p102 = por %p100, %p101
    %p103 = scmp.ne.s32.totalorder %s92, %s93
    %p104 = scmp.eq.s32.totalorder %s16, 0
    %p105 = por %p103, %p104
    %p106 = scmp.ne.s32.totalorder %s92, %s93
    %p107 = scmp.eq.s32.totalorder %s17, 1
    %p108 = por %p106, %p107
    %p110 = scmp.ne.s32.totalorder %s93, %s109
    %p111 = scmp.eq.s32.totalorder %s17, 0
    %p112 = por %p110, %p111
    %s113 = ssub.s32 %s11, %s18
    %p114 = scmp.eq.s32.totalorder %s113, 0
    %s116 = sadd.s32 %s115, 1
    %s117 = scalar_select %p114, %s115, %s116
    %p120 = pneg %p114
    %p121 = scmp.eq.s32.totalorder %s11, 1
    %p122 = por %p120, %p121
    %p123 = scmp.ne.s32.totalorder %s115, %s118
    %p124 = scmp.eq.s32.totalorder %s11, 0
    %p125 = por %p123, %p124
    %p126 = scmp.ne.s32.totalorder %s115, %s118
    %p127 = scmp.eq.s32.totalorder %s16, 1
    %p128 = por %p126, %p127
    %p129 = scmp.ne.s32.totalorder %s118, %s119
    %p130 = scmp.eq.s32.totalorder %s16, 0
    %p131 = por %p129, %p130
    %p132 = scmp.ne.s32.totalorder %s118, %s119
    %p133 = scmp.eq.s32.totalorder %s17, 1
    %p134 = por %p132, %p133
    %p136 = scmp.ne.s32.totalorder %s119, %s135
    %p137 = scmp.eq.s32.totalorder %s17, 0
    %p138 = por %p136, %p137
    %p139 = scmp.le.s32.totalorder 1, %s11
    %p140 = scmp.lt.s32.totalorder %s11, 3
    %p141 = pnand %p139, %p140
    %p142 = pneg %p141
    // Predicated region
    $region9: #{basic_block_forward.4} parent=5 // pred_check
      _
    $region10: #{basic_block_forward.4} parent=5 // pred_check_branch
      %144 = sbr.rel (%p141) target = $region12
    $region11: #{basic_block_forward.4} parent=5 // pred_region
      %s145 = ssub.s32 %s11, 1
      // Predicated region
      $region13: #{basic_block_forward.4} parent=11 // pred_check
        %p146 = pneg %p58
      $region14: #{basic_block_forward.4} parent=11 // pred_check_branch
        %148 = sbr.rel (%p146) target = $region16
      $region15: #{basic_block_forward.4} parent=11 // pred_region
        _
      $region16: #{basic_block_forward.4} parent=11 // pred_fallthru
        _
      // Predicated region
      $region17: #{basic_block_forward.4} parent=11 // pred_check
        %p149 = pneg %p79
      $region18: #{basic_block_forward.4} parent=11 // pred_check_branch
        %151 = sbr.rel (%p149) target = $region20
      $region19: #{basic_block_forward.4} parent=11 // pred_region
        _
      $region20: #{basic_block_forward.4} parent=11 // pred_fallthru
        _
    $region12: #{basic_block_forward.4} parent=5 // pred_fallthru
      _
    %p152 = scmp.lt.s32.totalorder %s11, 2
    // Predicated region
    $region21: #{basic_block_forward.4} parent=5 // pred_check
      %p153 = pneg %p152
    $region22: #{basic_block_forward.4} parent=5 // pred_check_branch
      %155 = sbr.rel (%p153) target = $region24
    $region23: #{basic_block_forward.4} parent=5 // pred_region
      // Predicated region
      $region25: #{basic_block_forward.4} parent=23 // pred_check
        %p156 = pneg %p31
      $region26: #{basic_block_forward.4} parent=23 // pred_check_branch
        %158 = sbr.rel (%p156) target = $region28
      $region27: #{basic_block_forward.4} parent=23 // pred_region
        %p159 = scmp.lt.s32.totalorder %s11, 1
        %s160 = scalar_select %p159, %s11, 1
        %s161 = smul.addr %s160, 20
        %s162 = smul.addr %s161, 4
        %s163 = scalar_lea.vmem %s0, %s162
      $region28: #{basic_block_forward.4} parent=23 // pred_fallthru
        _
    $region24: #{basic_block_forward.4} parent=5 // pred_fallthru
      _
    %p164 = scmp.le.s32.totalorder 1, %s11
    %p165 = scmp.lt.s32.totalorder %s11, 3
    %p166 = pnand %p164, %p165
    %p167 = pneg %p166
    // Predicated region
    $region29: #{basic_block_forward.4} parent=5 // pred_check
      _
    $region30: #{basic_block_forward.4} parent=5 // pred_check_branch
      %169 = sbr.rel (%p166) target = $region32
    $region31: #{basic_block_forward.4} parent=5 // pred_region
      %s170 = ssub.s32 %s11, 1
      %p171 = scmp.lt.s32.totalorder %s16, 1
      %s172 = scalar_select %p171, %s16, 1
      %s173 = smul.addr %s172, 20
      %s174 = smul.addr %s173, 4
      %s175 = scalar_lea.vmem %s0, %s174
      %p176 = pneg %p37
      %p177 = pneg %p34
      %p178 = pneg %p58
      %p179 = pneg %p55
      %p180 = pneg %p79
      %p181 = pneg %p76
      %p182 = pneg %p105
      %p183 = pneg %p102
      %p184 = scmp.lt.s32.totalorder %s16, 1
      %s185 = scalar_select %p184, %s16, 1
      %s186 = smul.addr %s185, 8
      %s187 = smul.addr %s186, 4
      %s188 = scalar_lea.vmem %s3, %s187
      %p189 = pneg %p131
      %p190 = pneg %p128
      %p191 = scmp.lt.s32.totalorder %s16, 1
      %s192 = scalar_select %p191, %s16, 1
      %s193 = smul.addr %s192, 8
      %s194 = scalar_lea.vmem %s4, %s193
      %p195 = scmp.lt.s32.totalorder %s16, 1
      %s196 = scalar_select %p195, %s16, 1
      %s197 = smul.addr %s196, 20
      %s198 = smul.addr %s197, 4
      %s199 = scalar_lea.vmem %s0, %s198
      %p200 = scmp.lt.s32.totalorder %s16, 1
      %s201 = scalar_select %p200, %s16, 1
      %s202 = smul.addr %s201, 8
      %s203 = smul.addr %s202, 4
      %s204 = scalar_lea.vmem %s3, %s203
      %p205 = scmp.lt.s32.totalorder %s16, 1
      %s206 = scalar_select %p205, %s16, 1
      %s207 = smul.addr %s206, 8
      %s208 = scalar_lea.vmem %s4, %s207
      %v210 = vld [vmem:[%s2] sm:$0x1]
      %v211 = vld [vmem:[%s2 + $0x1] sm:$0x1]
      %v212 = vlaneseq
      %v213 = vshrl.u32 %v212, 7
      %v214 = vld [vmem:[%s199] sm:$0xf]
      %v215 = vld [vmem:[%s199 + $0x8] sm:$0xf]
      %v216 = vld [vmem:[%s199 + $0x10] sm:$0xf]
      %v217 = vld [vmem:[%s199 + $0x18] sm:$0xf]
      %v218 = vld [vmem:[%s199 + $0x20] sm:$0xf]
      %v219 = vld [vmem:[%s199 + $0x28] sm:$0xf]
      %v220 = vld [vmem:[%s199 + $0x30] sm:$0xf]
      %v221 = vld [vmem:[%s199 + $0x38] sm:$0xf]
      %v222 = vunpack.c.l.bf16 %v214
      %v223 = vunpack.c.l.bf16 %v215
      %v224 = vunpack.c.l.bf16 %v216
      %v225 = vunpack.c.l.bf16 %v217
      %v226 = vunpack.c.l.bf16 %v218
      %v227 = vunpack.c.l.bf16 %v219
      %v228 = vunpack.c.l.bf16 %v220
      %v229 = vunpack.c.l.bf16 %v221
      %v230 = vlaneseq
      %v231 = vshrl.u32 %v230, 7
      %v232 = vsub.s32 0, %v231
      %v233 = vrot.slane %v210, %v232
      %v234 = vmul.f32 %v222, %v233
      %v235 = vmul.f32 %v223, %v233
      %v236 = vmul.f32 %v224, %v233
      %v237 = vmul.f32 %v225, %v233
      %v238 = vmul.f32 %v226, %v233
      %v239 = vmul.f32 %v227, %v233
      %v240 = vmul.f32 %v228, %v233
      %v241 = vmul.f32 %v229, %v233
      %v242 = vlaneseq
      %v243 = vshrl.u32 %v242, 7
      %v244 = vsub.s32 0, %v243
      %v245 = vrot.slane %v211, %v244
      %v246 = vadd.f32 %v234, %v245
      %v247 = vadd.f32 %v235, %v245
      %v248 = vadd.f32 %v236, %v245
      %v249 = vadd.f32 %v237, %v245
      %v250 = vadd.f32 %v238, %v245
      %v251 = vadd.f32 %v239, %v245
      %v252 = vadd.f32 %v240, %v245
      %v253 = vadd.f32 %v241, %v245
      %v254 = vmax.f32 %v246, 0.0
      %v255 = vmax.f32 %v247, 0.0
      %v256 = vmax.f32 %v248, 0.0
      %v257 = vmax.f32 %v249, 0.0
      %v258 = vmax.f32 %v250, 0.0
      %v259 = vmax.f32 %v251, 0.0
      %v260 = vmax.f32 %v252, 0.0
      %v261 = vmax.f32 %v253, 0.0
      %vm262 = vcmp.ge.s32.totalorder %v213, 1
      %vm263 = vmand 0, %vm262
      %vm264 = vmand 1, %vm262
      %vm265 = vcmp.le.s32.totalorder %v213, 8
      %vm266 = vmand %vm263, %vm265
      %vm267 = vmand %vm264, %vm265
      %v268 = vsel %vm266, %v254, 0.0
      %v269 = vsel %vm267, %v255, 0.0
      %v270 = vsel %vm267, %v256, 0.0
      %v271 = vsel %vm267, %v257, 0.0
      %v272 = vsel %vm267, %v258, 0.0
      %v273 = vsel %vm267, %v259, 0.0
      %v274 = vsel %vm267, %v260, 0.0
      %v275 = vsel %vm267, %v261, 0.0
      %v276 = vpack.c.bf16 %v269, %v268
      %v277 = vpack.c.bf16 %v271, %v270
      %v278 = vpack.c.bf16 %v273, %v272
      %v279 = vpack.c.bf16 %v275, %v274
      %v280 = vld [vmem:[%s1] sm:$0xf]
      %v281 = vld [vmem:[%s1 + $0x4] sm:$0xf]
      %v282 = vld [vmem:[%s1 + $0x8] sm:$0xf]
      %v283 = vld [vmem:[%s1 + $0xc] sm:$0xf]
      %v284 = vld [vmem:[%s1 + $0x10] sm:$0xf]
      %v285 = vld [vmem:[%s1 + $0x14] sm:$0xf]
      %v286 = vld [vmem:[%s1 + $0x18] sm:$0xf]
      %v287 = vld [vmem:[%s1 + $0x1c] sm:$0xf]
      %v288 = vld [vmem:[%s1 + $0x20] sm:$0xf]
      %v289 = vld [vmem:[%s1 + $0x24] sm:$0xf]
      %v290 = vld [vmem:[%s1 + $0x28] sm:$0xf]
      %v291 = vld [vmem:[%s1 + $0x2c] sm:$0xf]
      %v292 = vld [vmem:[%s1 + $0x30] sm:$0xf]
      %v293 = vld [vmem:[%s1 + $0x34] sm:$0xf]
      %v294 = vld [vmem:[%s1 + $0x38] sm:$0xf]
      %v295 = vld [vmem:[%s1 + $0x3c] sm:$0xf]
      %v312 = vunpack.c.l.b16 %v280
      %v313 = vunpack.c.l.b16 %v281
      %v314 = vunpack.c.l.b16 %v282
      %v315 = vunpack.c.l.b16 %v283
      %v316 = vunpack.c.l.b16 %v284
      %v317 = vunpack.c.l.b16 %v285
      %v318 = vunpack.c.l.b16 %v286
      %v319 = vunpack.c.l.b16 %v287
      %v320 = vunpack.c.l.b16 %v288
      %v321 = vunpack.c.l.b16 %v289
      %v322 = vunpack.c.l.b16 %v290
      %v323 = vunpack.c.l.b16 %v291
      %v324 = vunpack.c.l.b16 %v292
      %v325 = vunpack.c.l.b16 %v293
      %v326 = vunpack.c.l.b16 %v294
      %v327 = vunpack.c.l.b16 %v295
      %v328 = vpack.c.b16 %v313, %v312
      %v329 = vpack.c.b16 %v315, %v314
      %v330 = vpack.c.b16 %v317, %v316
      %v331 = vpack.c.b16 %v319, %v318
      %v332 = vpack.c.b16 %v321, %v320
      %v333 = vpack.c.b16 %v323, %v322
      %v334 = vpack.c.b16 %v325, %v324
      %v335 = vpack.c.b16 %v327, %v326
      %344 = vmatprep.subr.bf16.mxu0 0
      %345 = vmatpush1.bf16.msra.mxu0 %v328
      %346 = vmatprep.subr.bf16.mxu0 0
      %347 = vmatpush1.bf16.msra.mxu0 %v329
      %348 = vmatprep.subr.bf16.mxu0 0
      %349 = vmatpush1.bf16.msra.mxu0 %v330
      %350 = vmatprep.subr.bf16.mxu0 0
      %351 = vmatpush1.bf16.msra.mxu0 %v331
      %352 = vmatprep.subr.bf16.mxu0 0
      %353 = vmatpush1.bf16.msra.mxu0 %v332
      %354 = vmatprep.subr.bf16.mxu0 0
      %355 = vmatpush1.bf16.msra.mxu0 %v333
      %356 = vmatprep.subr.bf16.mxu0 0
      %357 = vmatpush1.bf16.msra.mxu0 %v334
      %358 = vmatprep.subr.bf16.mxu0 0
      %359 = vmatpush1.bf16.msra.mxu0 %v335
      %360 = vmatprep.subr.bf16.mxu0 0
      %361 = vmatpush1.bf16.msra.mxu0 0
      %362 = vmatprep.subr.bf16.mxu0 0
      %363 = vmatpush1.bf16.msra.mxu0 0
      %364 = vmatprep.subr.bf16.mxu0 0
      %365 = vmatpush1.bf16.msra.mxu0 0
      %366 = vmatprep.subr.bf16.mxu0 0
      %367 = vmatpush1.bf16.msra.mxu0 0
      %368 = vmatprep.subr.bf16.mxu0 0
      %369 = vmatpush1.bf16.msra.mxu0 0
      %370 = vmatprep.subr.bf16.mxu0 0
      %371 = vmatpush1.bf16.msra.mxu0 0
      %372 = vmatprep.subr.bf16.mxu0 0
      %373 = vmatpush1.bf16.msra.mxu0 0
      %374 = vmatprep.subr.bf16.mxu0 0
      %375 = vmatpush1.bf16.msra.mxu0 0
      %376 = vmatprep.mubr.bf16.mxu0 0
      %377 = vmatmul.mubr.bf16.gmra.mrb[0].mxu0 %v276
      %v378 = vpop.f32.mrb[0].mxu0
      %v379 = vadd.f32 0.0, %v378
      %v380 = vpop.f32.mrb[0].mxu0
      %v381 = vpop.f32.mrb[0].mxu0
      %v382 = vadd.f32 0.0, %v381
      %v383 = vpop.f32.mrb[0].mxu0
      %384 = vmatprep.mubr.bf16.mxu0 0
      %385 = vmatmul.mubr.bf16.gmra.mrb[0].mxu0 %v277
      %v386 = vpop.f32.mrb[0].mxu0
      %v387 = vadd.f32 0.0, %v386
      %v388 = vpop.f32.mrb[0].mxu0
      %v389 = vpop.f32.mrb[0].mxu0
      %v390 = vadd.f32 0.0, %v389
      %v391 = vpop.f32.mrb[0].mxu0
      %392 = vmatprep.mubr.bf16.mxu0 0
      %393 = vmatmul.mubr.bf16.gmra.mrb[0].mxu0 %v278
      %v394 = vpop.f32.mrb[0].mxu0
      %v395 = vadd.f32 0.0, %v394
      %v396 = vpop.f32.mrb[0].mxu0
      %v397 = vpop.f32.mrb[0].mxu0
      %v398 = vadd.f32 0.0, %v397
      %v399 = vpop.f32.mrb[0].mxu0
      %400 = vmatprep.mubr.bf16.mxu0 0
      %401 = vmatmul.mubr.bf16.gmra.mrb[0].mxu0 %v279
      %v402 = vpop.f32.mrb[0].mxu0
      %v403 = vadd.f32 0.0, %v402
      %v404 = vpop.f32.mrb[0].mxu0
      %v405 = vpop.f32.mrb[0].mxu0
      %v406 = vadd.f32 0.0, %v405
      %v407 = vpop.f32.mrb[0].mxu0
      %408 = vdwg.mxu0
      %409 = vst [vmem:[#allocation2] sm:$0xff] %v379
      %410 = vst [vmem:[#allocation2 + $0x8] sm:$0xff] %v382
      %411 = vst [vmem:[#allocation2 + $0x10] sm:$0xff] %v387
      %412 = vst [vmem:[#allocation2 + $0x18] sm:$0xff] %v390
      %413 = vst [vmem:[#allocation2 + $0x20] sm:$0xff] %v395
      %414 = vst [vmem:[#allocation2 + $0x28] sm:$0xff] %v398
      %415 = vst [vmem:[#allocation2 + $0x30] sm:$0xff] %v403
      %416 = vst [vmem:[#allocation2 + $0x38] sm:$0xff] %v406
      %v417 = vld [vmem:[%s199] sm:$0xf]
      %v418 = vld [vmem:[%s199 + $0x4] sm:$0x1]
      %v419 = vld [vmem:[%s199 + $0x8] sm:$0xf]
      %v420 = vld [vmem:[%s199 + $0xc] sm:$0x1]
      %v421 = vld [vmem:[%s199 + $0x10] sm:$0xf]
      %v422 = vld [vmem:[%s199 + $0x14] sm:$0x1]
      %v423 = vld [vmem:[%s199 + $0x18] sm:$0xf]
      %v424 = vld [vmem:[%s199 + $0x1c] sm:$0x1]
      %v425 = vld [vmem:[%s199 + $0x20] sm:$0xf]
      %v426 = vld [vmem:[%s199 + $0x24] sm:$0x1]
      %v427 = vld [vmem:[%s199 + $0x28] sm:$0xf]
      %v428 = vld [vmem:[%s199 + $0x2c] sm:$0x1]
      %v429 = vld [vmem:[%s199 + $0x30] sm:$0xf]
      %v430 = vld [vmem:[%s199 + $0x34] sm:$0x1]
      %v431 = vld [vmem:[%s199 + $0x38] sm:$0xf]
      %v432 = vld [vmem:[%s199 + $0x3c] sm:$0x1]
      %v433 = vunpack.c.l.bf16 %v417
      %v434 = vunpack.c.l.bf16 %v418
      %v435 = vunpack.c.l.bf16 %v419
      %v436 = vunpack.c.l.bf16 %v420
      %v437 = vunpack.c.l.bf16 %v421
      %v438 = vunpack.c.l.bf16 %v422
      %v439 = vunpack.c.l.bf16 %v423
      %v440 = vunpack.c.l.bf16 %v424
      %v441 = vunpack.c.l.bf16 %v425
      %v442 = vunpack.c.l.bf16 %v426
      %v443 = vunpack.c.l.bf16 %v427
      %v444 = vunpack.c.l.bf16 %v428
      %v445 = vunpack.c.l.bf16 %v429
      %v446 = vunpack.c.l.bf16 %v430
      %v447 = vunpack.c.l.bf16 %v431
      %v448 = vunpack.c.l.bf16 %v432
      %v449 = vmul.f32 %v433, %v233
      %v450 = vmul.f32 %v434, %v233
      %v451 = vmul.f32 %v435, %v233
      %v452 = vmul.f32 %v436, %v233
      %v453 = vmul.f32 %v437, %v233
      %v454 = vmul.f32 %v438, %v233
      %v455 = vmul.f32 %v439, %v233
      %v456 = vmul.f32 %v440, %v233
      %v457 = vmul.f32 %v441, %v233
      %v458 = vmul.f32 %v442, %v233
      %v459 = vmul.f32 %v443, %v233
      %v460 = vmul.f32 %v444, %v233
      %v461 = vmul.f32 %v445, %v233
      %v462 = vmul.f32 %v446, %v233
      %v463 = vmul.f32 %v447, %v233
      %v464 = vmul.f32 %v448, %v233
      %v465 = vadd.f32 %v449, %v245
      %v466 = vadd.f32 %v450, %v245
      %v467 = vadd.f32 %v451, %v245
      %v468 = vadd.f32 %v452, %v245
      %v469 = vadd.f32 %v453, %v245
      %v470 = vadd.f32 %v454, %v245
      %v471 = vadd.f32 %v455, %v245
      %v472 = vadd.f32 %v456, %v245
      %v473 = vadd.f32 %v457, %v245
      %v474 = vadd.f32 %v458, %v245
      %v475 = vadd.f32 %v459, %v245
      %v476 = vadd.f32 %v460, %v245
      %v477 = vadd.f32 %v461, %v245
      %v478 = vadd.f32 %v462, %v245
      %v479 = vadd.f32 %v463, %v245
      %v480 = vadd.f32 %v464, %v245
      %v481 = vmax.f32 %v465, 0.0
      %v482 = vmax.f32 %v466, 0.0
      %v483 = vmax.f32 %v467, 0.0
      %v484 = vmax.f32 %v468, 0.0
      %v485 = vmax.f32 %v469, 0.0
      %v486 = vmax.f32 %v470, 0.0
      %v487 = vmax.f32 %v471, 0.0
      %v488 = vmax.f32 %v472, 0.0
      %v489 = vmax.f32 %v473, 0.0
      %v490 = vmax.f32 %v474, 0.0
      %v491 = vmax.f32 %v475, 0.0
      %v492 = vmax.f32 %v476, 0.0
      %v493 = vmax.f32 %v477, 0.0
      %v494 = vmax.f32 %v478, 0.0
      %v495 = vmax.f32 %v479, 0.0
      %v496 = vmax.f32 %v480, 0.0
      %v497 = vadd.s32 %v213, 1
      %vm498 = vcmp.ge.s32.totalorder %v497, 1
      %vm499 = vmand 0, %vm498
      %vm500 = vmand 1, %vm498
      %vm501 = vcmp.le.s32.totalorder %v497, 8
      %vm502 = vmand %vm499, %vm501
      %vm503 = vmand %vm500, %vm501
      %vm520 = vcmask 1046528
      %v521 = vrot.slane %v481, 1
      %v522 = vrot.slane %v482, 1
      %v523 = vsel %vm520, %v521, %v522
      %v524 = vrot.slane %v483, 1
      %v525 = vrot.slane %v484, 1
      %v526 = vsel %vm520, %v524, %v525
      %v527 = vrot.slane %v485, 1
      %v528 = vrot.slane %v486, 1
      %v529 = vsel %vm520, %v527, %v528
      %v530 = vrot.slane %v487, 1
      %v531 = vrot.slane %v488, 1
      %v532 = vsel %vm520, %v530, %v531
      %v533 = vrot.slane %v489, 1
      %v534 = vrot.slane %v490, 1
      %v535 = vsel %vm520, %v533, %v534
      %v536 = vrot.slane %v491, 1
      %v537 = vrot.slane %v492, 1
      %v538 = vsel %vm520, %v536, %v537
      %v539 = vrot.slane %v493, 1
      %v540 = vrot.slane %v494, 1
      %v541 = vsel %vm520, %v539, %v540
      %v542 = vrot.slane %v495, 1
      %v543 = vrot.slane %v496, 1
      %v544 = vsel %vm520, %v542, %v543
      %v553 = vsel %vm502, %v523, 0.0
      %v554 = vsel %vm503, %v526, 0.0
      %v555 = vsel %vm503, %v529, 0.0
      %v556 = vsel %vm503, %v532, 0.0
      %v557 = vsel %vm503, %v535, 0.0
      %v558 = vsel %vm503, %v538, 0.0
      %v559 = vsel %vm503, %v541, 0.0
      %v560 = vsel %vm503, %v544, 0.0
      %v561 = vpack.c.bf16 %v554, %v553
      %v562 = vpack.c.bf16 %v556, %v555
      %v563 = vpack.c.bf16 %v558, %v557
      %v564 = vpack.c.bf16 %v560, %v559
      %s565 = scalar_lea.vmem %s1, 64
      %v566 = vld [vmem:[%s565] sm:$0xf]
      %v567 = vld [vmem:[%s565 + $0x4] sm:$0xf]
      %v568 = vld [vmem:[%s565 + $0x8] sm:$0xf]
      %v569 = vld [vmem:[%s565 + $0xc] sm:$0xf]
      %v570 = vld [vmem:[%s565 + $0x10] sm:$0xf]
      %v571 = vld [vmem:[%s565 + $0x14] sm:$0xf]
      %v572 = vld [vmem:[%s565 + $0x18] sm:$0xf]
      %v573 = vld [vmem:[%s565 + $0x1c] sm:$0xf]
      %v574 = vld [vmem:[%s565 + $0x20] sm:$0xf]
      %v575 = vld [vmem:[%s565 + $0x24] sm:$0xf]
      %v576 = vld [vmem:[%s565 + $0x28] sm:$0xf]
      %v577 = vld [vmem:[%s565 + $0x2c] sm:$0xf]
      %v578 = vld [vmem:[%s565 + $0x30] sm:$0xf]
      %v579 = vld [vmem:[%s565 + $0x34] sm:$0xf]
      %v580 = vld [vmem:[%s565 + $0x38] sm:$0xf]
      %v581 = vld [vmem:[%s565 + $0x3c] sm:$0xf]
      %v598 = vunpack.c.l.b16 %v566
      %v599 = vunpack.c.l.b16 %v567
      %v600 = vunpack.c.l.b16 %v568
      %v601 = vunpack.c.l.b16 %v569
      %v602 = vunpack.c.l.b16 %v570
      %v603 = vunpack.c.l.b16 %v571
      %v604 = vunpack.c.l.b16 %v572
      %v605 = vunpack.c.l.b16 %v573
      %v606 = vunpack.c.l.b16 %v574
      %v607 = vunpack.c.l.b16 %v575
      %v608 = vunpack.c.l.b16 %v576
      %v609 = vunpack.c.l.b16 %v577
      %v610 = vunpack.c.l.b16 %v578
      %v611 = vunpack.c.l.b16 %v579
      %v612 = vunpack.c.l.b16 %v580
      %v613 = vunpack.c.l.b16 %v581
      %v614 = vpack.c.b16 %v599, %v598
      %v615 = vpack.c.b16 %v601, %v600
      %v616 = vpack.c.b16 %v603, %v602
      %v617 = vpack.c.b16 %v605, %v604
      %v618 = vpack.c.b16 %v607, %v606
      %v619 = vpack.c.b16 %v609, %v608
      %v620 = vpack.c.b16 %v611, %v610
      %v621 = vpack.c.b16 %v613, %v612
      %630 = vmatprep.subr.bf16.mxu0 0
      %631 = vmatpush1.bf16.msra.mxu0 %v614
      %632 = vmatprep.subr.bf16.mxu0 0
      %633 = vmatpush1.bf16.msra.mxu0 %v615
      %634 = vmatprep.subr.bf16.mxu0 0
      %635 = vmatpush1.bf16.msra.mxu0 %v616
      %636 = vmatprep.subr.bf16.mxu0 0
      %637 = vmatpush1.bf16.msra.mxu0 %v617
      %638 = vmatprep.subr.bf16.mxu0 0
      %639 = vmatpush1.bf16.msra.mxu0 %v618
      %640 = vmatprep.subr.bf16.mxu0 0
      %641 = vmatpush1.bf16.msra.mxu0 %v619
      %642 = vmatprep.subr.bf16.mxu0 0
      %643 = vmatpush1.bf16.msra.mxu0 %v620
      %644 = vmatprep.subr.bf16.mxu0 0
      %645 = vmatpush1.bf16.msra.mxu0 %v621
      %646 = vmatprep.subr.bf16.mxu0 0
      %647 = vmatpush1.bf16.msra.mxu0 0
      %648 = vmatprep.subr.bf16.mxu0 0
      %649 = vmatpush1.bf16.msra.mxu0 0
      %650 = vmatprep.subr.bf16.mxu0 0
      %651 = vmatpush1.bf16.msra.mxu0 0
      %652 = vmatprep.subr.bf16.mxu0 0
      %653 = vmatpush1.bf16.msra.mxu0 0
      %654 = vmatprep.subr.bf16.mxu0 0
      %655 = vmatpush1.bf16.msra.mxu0 0
      %656 = vmatprep.subr.bf16.mxu0 0
      %657 = vmatpush1.bf16.msra.mxu0 0
      %658 = vmatprep.subr.bf16.mxu0 0
      %659 = vmatpush1.bf16.msra.mxu0 0
      %660 = vmatprep.subr.bf16.mxu0 0
      %661 = vmatpush1.bf16.msra.mxu0 0
      %662 = vmatprep.mubr.bf16.mxu0 0
      %663 = vmatmul.mubr.bf16.gmra.mrb[0].mxu0 %v561
      %v664 = vpop.f32.mrb[0].mxu0
      %v665 = vadd.f32 0.0, %v664
      %v666 = vpop.f32.mrb[0].mxu0
      %v667 = vpop.f32.mrb[0].mxu0
      %v668 = vadd.f32 0.0, %v667
      %v669 = vpop.f32.mrb[0].mxu0
      %670 = vmatprep.mubr.bf16.mxu0 0
      %671 = vmatmul.mubr.bf16.gmra.mrb[0].mxu0 %v562
      %v672 = vpop.f32.mrb[0].mxu0
      %v673 = vadd.f32 0.0, %v672
      %v674 = vpop.f32.mrb[0].mxu0
      %v675 = vpop.f32.mrb[0].mxu0
      %v676 = vadd.f32 0.0, %v675
      %v677 = vpop.f32.mrb[0].mxu0
      %678 = vmatprep.mubr.bf16.mxu0 0
      %679 = vmatmul.mubr.bf16.gmra.mrb[0].mxu0 %v563
      %v680 = vpop.f32.mrb[0].mxu0
      %v681 = vadd.f32 0.0, %v680
      %v682 = vpop.f32.mrb[0].mxu0
      %v683 = vpop.f32.mrb[0].mxu0
      %v684 = vadd.f32 0.0, %v683
      %v685 = vpop.f32.mrb[0].mxu0
      %686 = vmatprep.mubr.bf16.mxu0 0
      %687 = vmatmul.mubr.bf16.gmra.mrb[0].mxu0 %v564
      %v688 = vpop.f32.mrb[0].mxu0
      %v689 = vadd.f32 0.0, %v688
      %v690 = vpop.f32.mrb[0].mxu0
      %v691 = vpop.f32.mrb[0].mxu0
      %v692 = vadd.f32 0.0, %v691
      %v693 = vpop.f32.mrb[0].mxu0
      %694 = vdwg.mxu0
      %v695 = vld [vmem:[#allocation2] sm:$0xff]
      %v696 = vld [vmem:[#allocation2 + $0x8] sm:$0xff]
      %v697 = vld [vmem:[#allocation2 + $0x10] sm:$0xff]
      %v698 = vld [vmem:[#allocation2 + $0x18] sm:$0xff]
      %v699 = vld [vmem:[#allocation2 + $0x20] sm:$0xff]
      %v700 = vld [vmem:[#allocation2 + $0x28] sm:$0xff]
      %v701 = vld [vmem:[#allocation2 + $0x30] sm:$0xff]
      %v702 = vld [vmem:[#allocation2 + $0x38] sm:$0xff]
      %v703 = vadd.f32 %v695, %v665
      %v704 = vadd.f32 %v696, %v668
      %v705 = vadd.f32 %v697, %v673
      %v706 = vadd.f32 %v698, %v676
      %v707 = vadd.f32 %v699, %v681
      %v708 = vadd.f32 %v700, %v684
      %v709 = vadd.f32 %v701, %v689
      %v710 = vadd.f32 %v702, %v692
      %711 = vst [vmem:[#allocation2] sm:$0xff] %v703
      %712 = vst [vmem:[#allocation2 + $0x8] sm:$0xff] %v704
      %713 = vst [vmem:[#allocation2 + $0x10] sm:$0xff] %v705
      %714 = vst [vmem:[#allocation2 + $0x18] sm:$0xff] %v706
      %715 = vst [vmem:[#allocation2 + $0x20] sm:$0xff] %v707
      %716 = vst [vmem:[#allocation2 + $0x28] sm:$0xff] %v708
      %717 = vst [vmem:[#allocation2 + $0x30] sm:$0xff] %v709
      %718 = vst [vmem:[#allocation2 + $0x38] sm:$0xff] %v710
      %v719 = vld [vmem:[%s199] sm:$0xe]
      %v720 = vld [vmem:[%s199 + $0x4] sm:$0x1]
      %v721 = vld [vmem:[%s199 + $0x8] sm:$0xe]
      %v722 = vld [vmem:[%s199 + $0xc] sm:$0x1]
      %v723 = vld [vmem:[%s199 + $0x10] sm:$0xe]
      %v724 = vld [vmem:[%s199 + $0x14] sm:$0x1]
      %v725 = vld [vmem:[%s199 + $0x18] sm:$0xe]
      %v726 = vld [vmem:[%s199 + $0x1c] sm:$0x1]
      %v727 = vld [vmem:[%s199 + $0x20] sm:$0xe]
      %v728 = vld [vmem:[%s199 + $0x24] sm:$0x1]
      %v729 = vld [vmem:[%s199 + $0x28] sm:$0xe]
      %v730 = vld [vmem:[%s199 + $0x2c] sm:$0x1]
      %v731 = vld [vmem:[%s199 + $0x30] sm:$0xe]
      %v732 = vld [vmem:[%s199 + $0x34] sm:$0x1]
      %v733 = vld [vmem:[%s199 + $0x38] sm:$0xe]
      %v734 = vld [vmem:[%s199 + $0x3c] sm:$0x1]
      %v735 = vunpack.c.l.bf16 %v719
      %v736 = vunpack.c.l.bf16 %v720
      %v737 = vunpack.c.l.bf16 %v721
      %v738 = vunpack.c.l.bf16 %v722
      %v739 = vunpack.c.l.bf16 %v723
      %v740 = vunpack.c.l.bf16 %v724
      %v741 = vunpack.c.l.bf16 %v725
      %v742 = vunpack.c.l.bf16 %v726
      %v743 = vunpack.c.l.bf16 %v727
      %v744 = vunpack.c.l.bf16 %v728
      %v745 = vunpack.c.l.bf16 %v729
      %v746 = vunpack.c.l.bf16 %v730
      %v747 = vunpack.c.l.bf16 %v731
      %v748 = vunpack.c.l.bf16 %v732
      %v749 = vunpack.c.l.bf16 %v733
      %v750 = vunpack.c.l.bf16 %v734
      %v751 = vmul.f32 %v735, %v233
      %v752 = vmul.f32 %v736, %v233
      %v753 = vmul.f32 %v737, %v233
      %v754 = vmul.f32 %v738, %v233
      %v755 = vmul.f32 %v739, %v233
      %v756 = vmul.f32 %v740, %v233
      %v757 = vmul.f32 %v741, %v233
      %v758 = vmul.f32 %v742, %v233
      %v759 = vmul.f32 %v743, %v233
      %v760 = vmul.f32 %v744, %v233
      %v761 = vmul.f32 %v745, %v233
      %v762 = vmul.f32 %v746, %v233
      %v763 = vmul.f32 %v747, %v233
      %v764 = vmul.f32 %v748, %v233
      %v765 = vmul.f32 %v749, %v233
      %v766 = vmul.f32 %v750, %v233
      %v767 = vadd.f32 %v751, %v245
      %v768 = vadd.f32 %v752, %v245
      %v769 = vadd.f32 %v753, %v245
      %v770 = vadd.f32 %v754, %v245
      %v771 = vadd.f32 %v755, %v245
      %v772 = vadd.f32 %v756, %v245
      %v773 = vadd.f32 %v757, %v245
      %v774 = vadd.f32 %v758, %v245
      %v775 = vadd.f32 %v759, %v245
      %v776 = vadd.f32 %v760, %v245
      %v777 = vadd.f32 %v761, %v245
      %v778 = vadd.f32 %v762, %v245
      %v779 = vadd.f32 %v763, %v245
      %v780 = vadd.f32 %v764, %v245
      %v781 = vadd.f32 %v765, %v245
      %v782 = vadd.f32 %v766, %v245
      %v783 = vmax.f32 %v767, 0.0
      %v784 = vmax.f32 %v768, 0.0
      %v785 = vmax.f32 %v769, 0.0
      %v786 = vmax.f32 %v770, 0.0
      %v787 = vmax.f32 %v771, 0.0
      %v788 = vmax.f32 %v772, 0.0
      %v789 = vmax.f32 %v773, 0.0
      %v790 = vmax.f32 %v774, 0.0
      %v791 = vmax.f32 %v775, 0.0
      %v792 = vmax.f32 %v776, 0.0
      %v793 = vmax.f32 %v777, 0.0
      %v794 = vmax.f32 %v778, 0.0
      %v795 = vmax.f32 %v779, 0.0
      %v796 = vmax.f32 %v780, 0.0
      %v797 = vmax.f32 %v781, 0.0
      %v798 = vmax.f32 %v782, 0.0
      %v799 = vadd.s32 %v213, 2
      %vm800 = vcmp.ge.s32.totalorder %v799, 1
      %vm801 = vmand 0, %vm800
      %vm802 = vmand 1, %vm800
      %vm803 = vcmp.le.s32.totalorder %v799, 8
      %vm804 = vmand %vm801, %vm803
      %vm805 = vmand %vm802, %vm803
      %vm822 = vcmask 1045504
      %v823 = vrot.slane %v783, 2
      %v824 = vrot.slane %v784, 2
      %v825 = vsel %vm822, %v823, %v824
      %v826 = vrot.slane %v785, 2
      %v827 = vrot.slane %v786, 2
      %v828 = vsel %vm822, %v826, %v827
      %v829 = vrot.slane %v787, 2
      %v830 = vrot.slane %v788, 2
      %v831 = vsel %vm822, %v829, %v830
      %v832 = vrot.slane %v789, 2
      %v833 = vrot.slane %v790, 2
      %v834 = vsel %vm822, %v832, %v833
      %v835 = vrot.slane %v791, 2
      %v836 = vrot.slane %v792, 2
      %v837 = vsel %vm822, %v835, %v836
      %v838 = vrot.slane %v793, 2
      %v839 = vrot.slane %v794, 2
      %v840 = vsel %vm822, %v838, %v839
      %v841 = vrot.slane %v795, 2
      %v842 = vrot.slane %v796, 2
      %v843 = vsel %vm822, %v841, %v842
      %v844 = vrot.slane %v797, 2
      %v845 = vrot.slane %v798, 2
      %v846 = vsel %vm822, %v844, %v845
      %v855 = vsel %vm804, %v825, 0.0
      %v856 = vsel %vm805, %v828, 0.0
      %v857 = vsel %vm805, %v831, 0.0
      %v858 = vsel %vm805, %v834, 0.0
      %v859 = vsel %vm805, %v837, 0.0
      %v860 = vsel %vm805, %v840, 0.0
      %v861 = vsel %vm805, %v843, 0.0
      %v862 = vsel %vm805, %v846, 0.0
      %v863 = vpack.c.bf16 %v856, %v855
      %v864 = vpack.c.bf16 %v858, %v857
      %v865 = vpack.c.bf16 %v860, %v859
      %v866 = vpack.c.bf16 %v862, %v861
      %s867 = scalar_lea.vmem %s1, 128
      %v868 = vld [vmem:[%s867] sm:$0xf]
      %v869 = vld [vmem:[%s867 + $0x4] sm:$0xf]
      %v870 = vld [vmem:[%s867 + $0x8] sm:$0xf]
      %v871 = vld [vmem:[%s867 + $0xc] sm:$0xf]
      %v872 = vld [vmem:[%s867 + $0x10] sm:$0xf]
      %v873 = vld [vmem:[%s867 + $0x14] sm:$0xf]
      %v874 = vld [vmem:[%s867 + $0x18] sm:$0xf]
      %v875 = vld [vmem:[%s867 + $0x1c] sm:$0xf]
      %v876 = vld [vmem:[%s867 + $0x20] sm:$0xf]
      %v877 = vld [vmem:[%s867 + $0x24] sm:$0xf]
      %v878 = vld [vmem:[%s867 + $0x28] sm:$0xf]
      %v879 = vld [vmem:[%s867 + $0x2c] sm:$0xf]
      %v880 = vld [vmem:[%s867 + $0x30] sm:$0xf]
      %v881 = vld [vmem:[%s867 + $0x34] sm:$0xf]
      %v882 = vld [vmem:[%s867 + $0x38] sm:$0xf]
      %v883 = vld [vmem:[%s867 + $0x3c] sm:$0xf]
      %v900 = vunpack.c.l.b16 %v868
      %v901 = vunpack.c.l.b16 %v869
      %v902 = vunpack.c.l.b16 %v870
      %v903 = vunpack.c.l.b16 %v871
      %v904 = vunpack.c.l.b16 %v872
      %v905 = vunpack.c.l.b16 %v873
      %v906 = vunpack.c.l.b16 %v874
      %v907 = vunpack.c.l.b16 %v875
      %v908 = vunpack.c.l.b16 %v876
      %v909 = vunpack.c.l.b16 %v877
      %v910 = vunpack.c.l.b16 %v878
      %v911 = vunpack.c.l.b16 %v879
      %v912 = vunpack.c.l.b16 %v880
      %v913 = vunpack.c.l.b16 %v881
      %v914 = vunpack.c.l.b16 %v882
      %v915 = vunpack.c.l.b16 %v883
      %v916 = vpack.c.b16 %v901, %v900
      %v917 = vpack.c.b16 %v903, %v902
      %v918 = vpack.c.b16 %v905, %v904
      %v919 = vpack.c.b16 %v907, %v906
      %v920 = vpack.c.b16 %v909, %v908
      %v921 = vpack.c.b16 %v911, %v910
      %v922 = vpack.c.b16 %v913, %v912
      %v923 = vpack.c.b16 %v915, %v914
      %932 = vmatprep.subr.bf16.mxu0 0
      %933 = vmatpush1.bf16.msra.mxu0 %v916
      %934 = vmatprep.subr.bf16.mxu0 0
      %935 = vmatpush1.bf16.msra.mxu0 %v917
      %936 = vmatprep.subr.bf16.mxu0 0
      %937 = vmatpush1.bf16.msra.mxu0 %v918
      %938 = vmatprep.subr.bf16.mxu0 0
      %939 = vmatpush1.bf16.msra.mxu0 %v919
      %940 = vmatprep.subr.bf16.mxu0 0
      %941 = vmatpush1.bf16.msra.mxu0 %v920
      %942 = vmatprep.subr.bf16.mxu0 0
      %943 = vmatpush1.bf16.msra.mxu0 %v921
      %944 = vmatprep.subr.bf16.mxu0 0
      %945 = vmatpush1.bf16.msra.mxu0 %v922
      %946 = vmatprep.subr.bf16.mxu0 0
      %947 = vmatpush1.bf16.msra.mxu0 %v923
      %948 = vmatprep.subr.bf16.mxu0 0
      %949 = vmatpush1.bf16.msra.mxu0 0
      %950 = vmatprep.subr.bf16.mxu0 0
      %951 = vmatpush1.bf16.msra.mxu0 0
      %952 = vmatprep.subr.bf16.mxu0 0
      %953 = vmatpush1.bf16.msra.mxu0 0
      %954 = vmatprep.subr.bf16.mxu0 0
      %955 = vmatpush1.bf16.msra.mxu0 0
      %956 = vmatprep.subr.bf16.mxu0 0
      %957 = vmatpush1.bf16.msra.mxu0 0
      %958 = vmatprep.subr.bf16.mxu0 0
      %959 = vmatpush1.bf16.msra.mxu0 0
      %960 = vmatprep.subr.bf16.mxu0 0
      %961 = vmatpush1.bf16.msra.mxu0 0
      %962 = vmatprep.subr.bf16.mxu0 0
      %963 = vmatpush1.bf16.msra.mxu0 0
      %964 = vmatprep.mubr.bf16.mxu0 0
      %965 = vmatmul.mubr.bf16.gmra.mrb[0].mxu0 %v863
      %v966 = vpop.f32.mrb[0].mxu0
      %v967 = vadd.f32 0.0, %v966
      %v968 = vpop.f32.mrb[0].mxu0
      %v969 = vpop.f32.mrb[0].mxu0
      %v970 = vadd.f32 0.0, %v969
      %v971 = vpop.f32.mrb[0].mxu0
      %972 = vmatprep.mubr.bf16.mxu0 0
      %973 = vmatmul.mubr.bf16.gmra.mrb[0].mxu0 %v864
      %v974 = vpop.f32.mrb[0].mxu0
      %v975 = vadd.f32 0.0, %v974
      %v976 = vpop.f32.mrb[0].mxu0
      %v977 = vpop.f32.mrb[0].mxu0
      %v978 = vadd.f32 0.0, %v977
      %v979 = vpop.f32.mrb[0].mxu0
      %980 = vmatprep.mubr.bf16.mxu0 0
      %981 = vmatmul.mubr.bf16.gmra.mrb[0].mxu0 %v865
      %v982 = vpop.f32.mrb[0].mxu0
      %v983 = vadd.f32 0.0, %v982
      %v984 = vpop.f32.mrb[0].mxu0
      %v985 = vpop.f32.mrb[0].mxu0
      %v986 = vadd.f32 0.0, %v985
      %v987 = vpop.f32.mrb[0].mxu0
      %988 = vmatprep.mubr.bf16.mxu0 0
      %989 = vmatmul.mubr.bf16.gmra.mrb[0].mxu0 %v866
      %v990 = vpop.f32.mrb[0].mxu0
      %v991 = vadd.f32 0.0, %v990
      %v992 = vpop.f32.mrb[0].mxu0
      %v993 = vpop.f32.mrb[0].mxu0
      %v994 = vadd.f32 0.0, %v993
      %v995 = vpop.f32.mrb[0].mxu0
      %996 = vdwg.mxu0
      %v997 = vld [vmem:[#allocation2] sm:$0xff]
      %v998 = vld [vmem:[#allocation2 + $0x8] sm:$0xff]
      %v999 = vld [vmem:[#allocation2 + $0x10] sm:$0xff]
      %v1000 = vld [vmem:[#allocation2 + $0x18] sm:$0xff]
      %v1001 = vld [vmem:[#allocation2 + $0x20] sm:$0xff]
      %v1002 = vld [vmem:[#allocation2 + $0x28] sm:$0xff]
      %v1003 = vld [vmem:[#allocation2 + $0x30] sm:$0xff]
      %v1004 = vld [vmem:[#allocation2 + $0x38] sm:$0xff]
      %v1005 = vadd.f32 %v997, %v967
      %v1006 = vadd.f32 %v998, %v970
      %v1007 = vadd.f32 %v999, %v975
      %v1008 = vadd.f32 %v1000, %v978
      %v1009 = vadd.f32 %v1001, %v983
      %v1010 = vadd.f32 %v1002, %v986
      %v1011 = vadd.f32 %v1003, %v991
      %v1012 = vadd.f32 %v1004, %v994
      %1013 = vst [vmem:[#allocation2] sm:$0xff] %v1005
      %1014 = vst [vmem:[#allocation2 + $0x8] sm:$0xff] %v1006
      %1015 = vst [vmem:[#allocation2 + $0x10] sm:$0xff] %v1007
      %1016 = vst [vmem:[#allocation2 + $0x18] sm:$0xff] %v1008
      %1017 = vst [vmem:[#allocation2 + $0x20] sm:$0xff] %v1009
      %1018 = vst [vmem:[#allocation2 + $0x28] sm:$0xff] %v1010
      %1019 = vst [vmem:[#allocation2 + $0x30] sm:$0xff] %v1011
      %1020 = vst [vmem:[#allocation2 + $0x38] sm:$0xff] %v1012
      %s1021 = scalar_lea.vmem %s199, 8
      %v1022 = vld [vmem:[%s1021] sm:$0xf]
      %v1023 = vld [vmem:[%s1021 + $0x8] sm:$0xf]
      %v1024 = vld [vmem:[%s1021 + $0x10] sm:$0xf]
      %v1025 = vld [vmem:[%s1021 + $0x18] sm:$0xf]
      %v1026 = vld [vmem:[%s1021 + $0x20] sm:$0xf]
      %v1027 = vld [vmem:[%s1021 + $0x28] sm:$0xf]
      %v1028 = vld [vmem:[%s1021 + $0x30] sm:$0xf]
      %v1029 = vld [vmem:[%s1021 + $0x38] sm:$0xf]
      %v1030 = vunpack.c.l.bf16 %v1022
      %v1031 = vunpack.c.l.bf16 %v1023
      %v1032 = vunpack.c.l.bf16 %v1024
      %v1033 = vunpack.c.l.bf16 %v1025
      %v1034 = vunpack.c.l.bf16 %v1026
      %v1035 = vunpack.c.l.bf16 %v1027
      %v1036 = vunpack.c.l.bf16 %v1028
      %v1037 = vunpack.c.l.bf16 %v1029
      %v1038 = vmul.f32 %v1030, %v233
      %v1039 = vmul.f32 %v1031, %v233
      %v1040 = vmul.f32 %v1032, %v233
      %v1041 = vmul.f32 %v1033, %v233
      %v1042 = vmul.f32 %v1034, %v233
      %v1043 = vmul.f32 %v1035, %v233
      %v1044 = vmul.f32 %v1036, %v233
      %v1045 = vmul.f32 %v1037, %v233
      %v1046 = vadd.f32 %v1038, %v245
      %v1047 = vadd.f32 %v1039, %v245
      %v1048 = vadd.f32 %v1040, %v245
      %v1049 = vadd.f32 %v1041, %v245
      %v1050 = vadd.f32 %v1042, %v245
      %v1051 = vadd.f32 %v1043, %v245
      %v1052 = vadd.f32 %v1044, %v245
      %v1053 = vadd.f32 %v1045, %v245
      %v1054 = vmax.f32 %v1046, 0.0
      %v1055 = vmax.f32 %v1047, 0.0
      %v1056 = vmax.f32 %v1048, 0.0
      %v1057 = vmax.f32 %v1049, 0.0
      %v1058 = vmax.f32 %v1050, 0.0
      %v1059 = vmax.f32 %v1051, 0.0
      %v1060 = vmax.f32 %v1052, 0.0
      %v1061 = vmax.f32 %v1053, 0.0
      %v1062 = vsel %vm267, %v1054, 0.0
      %v1063 = vsel %vm267, %v1055, 0.0
      %v1064 = vsel %vm267, %v1056, 0.0
      %v1065 = vsel %vm267, %v1057, 0.0
      %v1066 = vsel %vm267, %v1058, 0.0
      %v1067 = vsel %vm267, %v1059, 0.0
      %v1068 = vsel %vm267, %v1060, 0.0
      %v1069 = vsel %vm267, %v1061, 0.0
      %v1070 = vpack.c.bf16 %v1063, %v1062
      %v1071 = vpack.c.bf16 %v1065, %v1064
      %v1072 = vpack.c.bf16 %v1067, %v1066
      %v1073 = vpack.c.bf16 %v1069, %v1068
      %s1074 = scalar_lea.vmem %s1, 192
      %v1075 = vld [vmem:[%s1074] sm:$0xf]
      %v1076 = vld [vmem:[%s1074 + $0x4] sm:$0xf]
      %v1077 = vld [vmem:[%s1074 + $0x8] sm:$0xf]
      %v1078 = vld [vmem:[%s1074 + $0xc] sm:$0xf]
      %v1079 = vld [vmem:[%s1074 + $0x10] sm:$0xf]
      %v1080 = vld [vmem:[%s1074 + $0x14] sm:$0xf]
      %v1081 = vld [vmem:[%s1074 + $0x18] sm:$0xf]
      %v1082 = vld [vmem:[%s1074 + $0x1c] sm:$0xf]
      %v1083 = vld [vmem:[%s1074 + $0x20] sm:$0xf]
      %v1084 = vld [vmem:[%s1074 + $0x24] sm:$0xf]
      %v1085 = vld [vmem:[%s1074 + $0x28] sm:$0xf]
      %v1086 = vld [vmem:[%s1074 + $0x2c] sm:$0xf]
      %v1087 = vld [vmem:[%s1074 + $0x30] sm:$0xf]
      %v1088 = vld [vmem:[%s1074 + $0x34] sm:$0xf]
      %v1089 = vld [vmem:[%s1074 + $0x38] sm:$0xf]
      %v1090 = vld [vmem:[%s1074 + $0x3c] sm:$0xf]
      %v1107 = vunpack.c.l.b16 %v1075
      %v1108 = vunpack.c.l.b16 %v1076
      %v1109 = vunpack.c.l.b16 %v1077
      %v1110 = vunpack.c.l.b16 %v1078
      %v1111 = vunpack.c.l.b16 %v1079
      %v1112 = vunpack.c.l.b16 %v1080
      %v1113 = vunpack.c.l.b16 %v1081
      %v1114 = vunpack.c.l.b16 %v1082
      %v1115 = vunpack.c.l.b16 %v1083
      %v1116 = vunpack.c.l.b16 %v1084
      %v1117 = vunpack.c.l.b16 %v1085
      %v1118 = vunpack.c.l.b16 %v1086
      %v1119 = vunpack.c.l.b16 %v1087
      %v1120 = vunpack.c.l.b16 %v1088
      %v1121 = vunpack.c.l.b16 %v1089
      %v1122 = vunpack.c.l.b16 %v1090
      %v1123 = vpack.c.b16 %v1108, %v1107
      %v1124 = vpack.c.b16 %v1110, %v1109
      %v1125 = vpack.c.b16 %v1112, %v1111
      %v1126 = vpack.c.b16 %v1114, %v1113
      %v1127 = vpack.c.b16 %v1116, %v1115
      %v1128 = vpack.c.b16 %v1118, %v1117
      %v1129 = vpack.c.b16 %v1120, %v1119
      %v1130 = vpack.c.b16 %v1122, %v1121
      %1139 = vmatprep.subr.bf16.mxu0 0
      %1140 = vmatpush1.bf16.msra.mxu0 %v1123
      %1141 = vmatprep.subr.bf16.mxu0 0
      %1142 = vmatpush1.bf16.msra.mxu0 %v1124
      %1143 = vmatprep.subr.bf16.mxu0 0
      %1144 = vmatpush1.bf16.msra.mxu0 %v1125
      %1145 = vmatprep.subr.bf16.mxu0 0
      %1146 = vmatpush1.bf16.msra.mxu0 %v1126
      %1147 = vmatprep.subr.bf16.mxu0 0
      %1148 = vmatpush1.bf16.msra.mxu0 %v1127
      %1149 = vmatprep.subr.bf16.mxu0 0
      %1150 = vmatpush1.bf16.msra.mxu0 %v1128
      %1151 = vmatprep.subr.bf16.mxu0 0
      %1152 = vmatpush1.bf16.msra.mxu0 %v1129
      %1153 = vmatprep.subr.bf16.mxu0 0
      %1154 = vmatpush1.bf16.msra.mxu0 %v1130
      %1155 = vmatprep.subr.bf16.mxu0 0
      %1156 = vmatpush1.bf16.msra.mxu0 0
      %1157 = vmatprep.subr.bf16.mxu0 0
      %1158 = vmatpush1.bf16.msra.mxu0 0
      %1159 = vmatprep.subr.bf16.mxu0 0
      %1160 = vmatpush1.bf16.msra.mxu0 0
      %1161 = vmatprep.subr.bf16.mxu0 0
      %1162 = vmatpush1.bf16.msra.mxu0 0
      %1163 = vmatprep.subr.bf16.mxu0 0
      %1164 = vmatpush1.bf16.msra.mxu0 0
      %1165 = vmatprep.subr.bf16.mxu0 0
      %1166 = vmatpush1.bf16.msra.mxu0 0
      %1167 = vmatprep.subr.bf16.mxu0 0
      %1168 = vmatpush1.bf16.msra.mxu0 0
      %1169 = vmatprep.subr.bf16.mxu0 0
      %1170 = vmatpush1.bf16.msra.mxu0 0
      %1171 = vmatprep.mubr.bf16.mxu0 0
      %1172 = vmatmul.mubr.bf16.gmra.mrb[0].mxu0 %v1070
      %v1173 = vpop.f32.mrb[0].mxu0
      %v1174 = vadd.f32 0.0, %v1173
      %v1175 = vpop.f32.mrb[0].mxu0
      %v1176 = vpop.f32.mrb[0].mxu0
      %v1177 = vadd.f32 0.0, %v1176
      %v1178 = vpop.f32.mrb[0].mxu0
      %1179 = vmatprep.mubr.bf16.mxu0 0
      %1180 = vmatmul.mubr.bf16.gmra.mrb[0].mxu0 %v1071
      %v1181 = vpop.f32.mrb[0].mxu0
      %v1182 = vadd.f32 0.0, %v1181
      %v1183 = vpop.f32.mrb[0].mxu0
      %v1184 = vpop.f32.mrb[0].mxu0
      %v1185 = vadd.f32 0.0, %v1184
      %v1186 = vpop.f32.mrb[0].mxu0
      %1187 = vmatprep.mubr.bf16.mxu0 0
      %1188 = vmatmul.mubr.bf16.gmra.mrb[0].mxu0 %v1072
      %v1189 = vpop.f32.mrb[0].mxu0
      %v1190 = vadd.f32 0.0, %v1189
      %v1191 = vpop.f32.mrb[0].mxu0
      %v1192 = vpop.f32.mrb[0].mxu0
      %v1193 = vadd.f32 0.0, %v1192
      %v1194 = vpop.f32.mrb[0].mxu0
      %1195 = vmatprep.mubr.bf16.mxu0 0
      %1196 = vmatmul.mubr.bf16.gmra.mrb[0].mxu0 %v1073
      %v1197 = vpop.f32.mrb[0].mxu0
      %v1198 = vadd.f32 0.0, %v1197
      %v1199 = vpop.f32.mrb[0].mxu0
      %v1200 = vpop.f32.mrb[0].mxu0
      %v1201 = vadd.f32 0.0, %v1200
      %v1202 = vpop.f32.mrb[0].mxu0
      %1203 = vdwg.mxu0
      %v1204 = vld [vmem:[#allocation2] sm:$0xff]
      %v1205 = vld [vmem:[#allocation2 + $0x8] sm:$0xff]
      %v1206 = vld [vmem:[#allocation2 + $0x10] sm:$0xff]
      %v1207 = vld [vmem:[#allocation2 + $0x18] sm:$0xff]
      %v1208 = vld [vmem:[#allocation2 + $0x20] sm:$0xff]
      %v1209 = vld [vmem:[#allocation2 + $0x28] sm:$0xff]
      %v1210 = vld [vmem:[#allocation2 + $0x30] sm:$0xff]
      %v1211 = vld [vmem:[#allocation2 + $0x38] sm:$0xff]
      %v1212 = vadd.f32 %v1204, %v1174
      %v1213 = vadd.f32 %v1205, %v1177
      %v1214 = vadd.f32 %v1206, %v1182
      %v1215 = vadd.f32 %v1207, %v1185
      %v1216 = vadd.f32 %v1208, %v1190
      %v1217 = vadd.f32 %v1209, %v1193
      %v1218 = vadd.f32 %v1210, %v1198
      %v1219 = vadd.f32 %v1211, %v1201
      %1220 = vst [vmem:[#allocation2] sm:$0xff] %v1212
      %1221 = vst [vmem:[#allocation2 + $0x8] sm:$0xff] %v1213
      %1222 = vst [vmem:[#allocation2 + $0x10] sm:$0xff] %v1214
      %1223 = vst [vmem:[#allocation2 + $0x18] sm:$0xff] %v1215
      %1224 = vst [vmem:[#allocation2 + $0x20] sm:$0xff] %v1216
      %1225 = vst [vmem:[#allocation2 + $0x28] sm:$0xff] %v1217
      %1226 = vst [vmem:[#allocation2 + $0x30] sm:$0xff] %v1218
      %1227 = vst [vmem:[#allocation2 + $0x38] sm:$0xff] %v1219
      %v1228 = vld [vmem:[%s1021] sm:$0xf]
      %v1229 = vld [vmem:[%s1021 + $0x4] sm:$0x1]
      %v1230 = vld [vmem:[%s1021 + $0x8] sm:$0xf]
      %v1231 = vld [vmem:[%s1021 + $0xc] sm:$0x1]
      %v1232 = vld [vmem:[%s1021 + $0x10] sm:$0xf]
      %v1233 = vld [vmem:[%s1021 + $0x14] sm:$0x1]
      %v1234 = vld [vmem:[%s1021 + $0x18] sm:$0xf]
      %v1235 = vld [vmem:[%s1021 + $0x1c] sm:$0x1]
      %v1236 = vld [vmem:[%s1021 + $0x20] sm:$0xf]
      %v1237 = vld [vmem:[%s1021 + $0x24] sm:$0x1]
      %v1238 = vld [vmem:[%s1021 + $0x28] sm:$0xf]
      %v1239 = vld [vmem:[%s1021 + $0x2c] sm:$0x1]
      %v1240 = vld [vmem:[%s1021 + $0x30] sm:$0xf]
      %v1241 = vld [vmem:[%s1021 + $0x34] sm:$0x1]
      %v1242 = vld [vmem:[%s1021 + $0x38] sm:$0xf]
      %v1243 = vld [vmem:[%s1021 + $0x3c] sm:$0x1]
      %v1244 = vunpack.c.l.bf16 %v1228
      %v1245 = vunpack.c.l.bf16 %v1229
      %v1246 = vunpack.c.l.bf16 %v1230
      %v1247 = vunpack.c.l.bf16 %v1231
      %v1248 = vunpack.c.l.bf16 %v1232
      %v1249 = vunpack.c.l.bf16 %v1233
      %v1250 = vunpack.c.l.bf16 %v1234
      %v1251 = vunpack.c.l.bf16 %v1235
      %v1252 = vunpack.c.l.bf16 %v1236
      %v1253 = vunpack.c.l.bf16 %v1237
      %v1254 = vunpack.c.l.bf16 %v1238
      %v1255 = vunpack.c.l.bf16 %v1239
      %v1256 = vunpack.c.l.bf16 %v1240
      %v1257 = vunpack.c.l.bf16 %v1241
      %v1258 = vunpack.c.l.bf16 %v1242
      %v1259 = vunpack.c.l.bf16 %v1243
      %v1260 = vmul.f32 %v1244, %v233
      %v1261 = vmul.f32 %v1245, %v233
      %v1262 = vmul.f32 %v1246, %v233
      %v1263 = vmul.f32 %v1247, %v233
      %v1264 = vmul.f32 %v1248, %v233
      %v1265 = vmul.f32 %v1249, %v233
      %v1266 = vmul.f32 %v1250, %v233
      %v1267 = vmul.f32 %v1251, %v233
      %v1268 = vmul.f32 %v1252, %v233
      %v1269 = vmul.f32 %v1253, %v233
      %v1270 = vmul.f32 %v1254, %v233
      %v1271 = vmul.f32 %v1255, %v233
      %v1272 = vmul.f32 %v1256, %v233
      %v1273 = vmul.f32 %v1257, %v233
      %v1274 = vmul.f32 %v1258, %v233
      %v1275 = vmul.f32 %v1259, %v233
      %v1276 = vadd.f32 %v1260, %v245
      %v1277 = vadd.f32 %v1261, %v245
      %v1278 = vadd.f32 %v1262, %v245
      %v1279 = vadd.f32 %v1263, %v245
      %v1280 = vadd.f32 %v1264, %v245
      %v1281 = vadd.f32 %v1265, %v245
      %v1282 = vadd.f32 %v1266, %v245
      %v1283 = vadd.f32 %v1267, %v245
      %v1284 = vadd.f32 %v1268, %v245
      %v1285 = vadd.f32 %v1269, %v245
      %v1286 = vadd.f32 %v1270, %v245
      %v1287 = vadd.f32 %v1271, %v245
      %v1288 = vadd.f32 %v1272, %v245
      %v1289 = vadd.f32 %v1273, %v245
      %v1290 = vadd.f32 %v1274, %v245
      %v1291 = vadd.f32 %v1275, %v245
      %v1292 = vmax.f32 %v1276, 0.0
      %v1293 = vmax.f32 %v1277, 0.0
      %v1294 = vmax.f32 %v1278, 0.0
      %v1295 = vmax.f32 %v1279, 0.0
      %v1296 = vmax.f32 %v1280, 0.0
      %v1297 = vmax.f32 %v1281, 0.0
      %v1298 = vmax.f32 %v1282, 0.0
      %v1299 = vmax.f32 %v1283, 0.0
      %v1300 = vmax.f32 %v1284, 0.0
      %v1301 = vmax.f32 %v1285, 0.0
      %v1302 = vmax.f32 %v1286, 0.0
      %v1303 = vmax.f32 %v1287, 0.0
      %v1304 = vmax.f32 %v1288, 0.0
      %v1305 = vmax.f32 %v1289, 0.0
      %v1306 = vmax.f32 %v1290, 0.0
      %v1307 = vmax.f32 %v1291, 0.0
      %v1324 = vrot.slane %v1292, 1
      %v1325 = vrot.slane %v1293, 1
      %v1326 = vsel %vm520, %v1324, %v1325
      %v1327 = vrot.slane %v1294, 1
      %v1328 = vrot.slane %v1295, 1
      %v1329 = vsel %vm520, %v1327, %v1328
      %v1330 = vrot.slane %v1296, 1
      %v1331 = vrot.slane %v1297, 1
      %v1332 = vsel %vm520, %v1330, %v1331
      %v1333 = vrot.slane %v1298, 1
      %v1334 = vrot.slane %v1299, 1
      %v1335 = vsel %vm520, %v1333, %v1334
      %v1336 = vrot.slane %v1300, 1
      %v1337 = vrot.slane %v1301, 1
      %v1338 = vsel %vm520, %v1336, %v1337
      %v1339 = vrot.slane %v1302, 1
      %v1340 = vrot.slane %v1303, 1
      %v1341 = vsel %vm520, %v1339, %v1340
      %v1342 = vrot.slane %v1304, 1
      %v1343 = vrot.slane %v1305, 1
      %v1344 = vsel %vm520, %v1342, %v1343
      %v1345 = vrot.slane %v1306, 1
      %v1346 = vrot.slane %v1307, 1
      %v1347 = vsel %vm520, %v1345, %v1346
      %v1356 = vsel %vm503, %v1326, 0.0
      %v1357 = vsel %vm503, %v1329, 0.0
      %v1358 = vsel %vm503, %v1332, 0.0
      %v1359 = vsel %vm503, %v1335, 0.0
      %v1360 = vsel %vm503, %v1338, 0.0
      %v1361 = vsel %vm503, %v1341, 0.0
      %v1362 = vsel %vm503, %v1344, 0.0
      %v1363 = vsel %vm503, %v1347, 0.0
      %v1364 = vpack.c.bf16 %v1357, %v1356
      %v1365 = vpack.c.bf16 %v1359, %v1358
      %v1366 = vpack.c.bf16 %v1361, %v1360
      %v1367 = vpack.c.bf16 %v1363, %v1362
      %s1368 = scalar_lea.vmem %s1, 256
      %v1369 = vld [vmem:[%s1368] sm:$0xf]
      %v1370 = vld [vmem:[%s1368 + $0x4] sm:$0xf]
      %v1371 = vld [vmem:[%s1368 + $0x8] sm:$0xf]
      %v1372 = vld [vmem:[%s1368 + $0xc] sm:$0xf]
      %v1373 = vld [vmem:[%s1368 + $0x10] sm:$0xf]
      %v1374 = vld [vmem:[%s1368 + $0x14] sm:$0xf]
      %v1375 = vld [vmem:[%s1368 + $0x18] sm:$0xf]
      %v1376 = vld [vmem:[%s1368 + $0x1c] sm:$0xf]
      %v1377 = vld [vmem:[%s1368 + $0x20] sm:$0xf]
      %v1378 = vld [vmem:[%s1368 + $0x24] sm:$0xf]
      %v1379 = vld [vmem:[%s1368 + $0x28] sm:$0xf]
      %v1380 = vld [vmem:[%s1368 + $0x2c] sm:$0xf]
      %v1381 = vld [vmem:[%s1368 + $0x30] sm:$0xf]
      %v1382 = vld [vmem:[%s1368 + $0x34] sm:$0xf]
      %v1383 = vld [vmem:[%s1368 + $0x38] sm:$0xf]
      %v1384 = vld [vmem:[%s1368 + $0x3c] sm:$0xf]
      %v1401 = vunpack.c.l.b16 %v1369
      %v1402 = vunpack.c.l.b16 %v1370
      %v1403 = vunpack.c.l.b16 %v1371
      %v1404 = vunpack.c.l.b16 %v1372
      %v1405 = vunpack.c.l.b16 %v1373
      %v1406 = vunpack.c.l.b16 %v1374
      %v1407 = vunpack.c.l.b16 %v1375
      %v1408 = vunpack.c.l.b16 %v1376
      %v1409 = vunpack.c.l.b16 %v1377
      %v1410 = vunpack.c.l.b16 %v1378
      %v1411 = vunpack.c.l.b16 %v1379
      %v1412 = vunpack.c.l.b16 %v1380
      %v1413 = vunpack.c.l.b16 %v1381
      %v1414 = vunpack.c.l.b16 %v1382
      %v1415 = vunpack.c.l.b16 %v1383
      %v1416 = vunpack.c.l.b16 %v1384
      %v1417 = vpack.c.b16 %v1402, %v1401
      %v1418 = vpack.c.b16 %v1404, %v1403
      %v1419 = vpack.c.b16 %v1406, %v1405
      %v1420 = vpack.c.b16 %v1408, %v1407
      %v1421 = vpack.c.b16 %v1410, %v1409
      %v1422 = vpack.c.b16 %v1412, %v1411
      %v1423 = vpack.c.b16 %v1414, %v1413
      %v1424 = vpack.c.b16 %v1416, %v1415
      %1433 = vmatprep.subr.bf16.mxu0 0
      %1434 = vmatpush1.bf16.msra.mxu0 %v1417
      %1435 = vmatprep.subr.bf16.mxu0 0
      %1436 = vmatpush1.bf16.msra.mxu0 %v1418
      %1437 = vmatprep.subr.bf16.mxu0 0
      %1438 = vmatpush1.bf16.msra.mxu0 %v1419
      %1439 = vmatprep.subr.bf16.mxu0 0
      %1440 = vmatpush1.bf16.msra.mxu0 %v1420
      %1441 = vmatprep.subr.bf16.mxu0 0
      %1442 = vmatpush1.bf16.msra.mxu0 %v1421
      %1443 = vmatprep.subr.bf16.mxu0 0
      %1444 = vmatpush1.bf16.msra.mxu0 %v1422
      %1445 = vmatprep.subr.bf16.mxu0 0
      %1446 = vmatpush1.bf16.msra.mxu0 %v1423
      %1447 = vmatprep.subr.bf16.mxu0 0
      %1448 = vmatpush1.bf16.msra.mxu0 %v1424
      %1449 = vmatprep.subr.bf16.mxu0 0
      %1450 = vmatpush1.bf16.msra.mxu0 0
      %1451 = vmatprep.subr.bf16.mxu0 0
      %1452 = vmatpush1.bf16.msra.mxu0 0
      %1453 = vmatprep.subr.bf16.mxu0 0
      %1454 = vmatpush1.bf16.msra.mxu0 0
      %1455 = vmatprep.subr.bf16.mxu0 0
      %1456 = vmatpush1.bf16.msra.mxu0 0
      %1457 = vmatprep.subr.bf16.mxu0 0
      %1458 = vmatpush1.bf16.msra.mxu0 0
      %1459 = vmatprep.subr.bf16.mxu0 0
      %1460 = vmatpush1.bf16.msra.mxu0 0
      %1461 = vmatprep.subr.bf16.mxu0 0
      %1462 = vmatpush1.bf16.msra.mxu0 0
      %1463 = vmatprep.subr.bf16.mxu0 0
      %1464 = vmatpush1.bf16.msra.mxu0 0
      %1465 = vmatprep.mubr.bf16.mxu0 0
      %1466 = vmatmul.mubr.bf16.gmra.mrb[0].mxu0 %v1364
      %v1467 = vpop.f32.mrb[0].mxu0
      %v1468 = vadd.f32 0.0, %v1467
      %v1469 = vpop.f32.mrb[0].mxu0
      %v1470 = vpop.f32.mrb[0].mxu0
      %v1471 = vadd.f32 0.0, %v1470
      %v1472 = vpop.f32.mrb[0].mxu0
      %1473 = vmatprep.mubr.bf16.mxu0 0
      %1474 = vmatmul.mubr.bf16.gmra.mrb[0].mxu0 %v1365
      %v1475 = vpop.f32.mrb[0].mxu0
      %v1476 = vadd.f32 0.0, %v1475
      %v1477 = vpop.f32.mrb[0].mxu0
      %v1478 = vpop.f32.mrb[0].mxu0
      %v1479 = vadd.f32 0.0, %v1478
      %v1480 = vpop.f32.mrb[0].mxu0
      %1481 = vmatprep.mubr.bf16.mxu0 0
      %1482 = vmatmul.mubr.bf16.gmra.mrb[0].mxu0 %v1366
      %v1483 = vpop.f32.mrb[0].mxu0
      %v1484 = vadd.f32 0.0, %v1483
      %v1485 = vpop.f32.mrb[0].mxu0
      %v1486 = vpop.f32.mrb[0].mxu0
      %v1487 = vadd.f32 0.0, %v1486
      %v1488 = vpop.f32.mrb[0].mxu0
      %1489 = vmatprep.mubr.bf16.mxu0 0
      %1490 = vmatmul.mubr.bf16.gmra.mrb[0].mxu0 %v1367
      %v1491 = vpop.f32.mrb[0].mxu0
      %v1492 = vadd.f32 0.0, %v1491
      %v1493 = vpop.f32.mrb[0].mxu0
      %v1494 = vpop.f32.mrb[0].mxu0
      %v1495 = vadd.f32 0.0, %v1494
      %v1496 = vpop.f32.mrb[0].mxu0
      %1497 = vdwg.mxu0
      %v1498 = vld [vmem:[#allocation2] sm:$0xff]
      %v1499 = vld [vmem:[#allocation2 + $0x8] sm:$0xff]
      %v1500 = vld [vmem:[#allocation2 + $0x10] sm:$0xff]
      %v1501 = vld [vmem:[#allocation2 + $0x18] sm:$0xff]
      %v1502 = vld [vmem:[#allocation2 + $0x20] sm:$0xff]
      %v1503 = vld [vmem:[#allocation2 + $0x28] sm:$0xff]
      %v1504 = vld [vmem:[#allocation2 + $0x30] sm:$0xff]
      %v1505 = vld [vmem:[#allocation2 + $0x38] sm:$0xff]
      %v1506 = vadd.f32 %v1498, %v1468
      %v1507 = vadd.f32 %v1499, %v1471
      %v1508 = vadd.f32 %v1500, %v1476
      %v1509 = vadd.f32 %v1501, %v1479
      %v1510 = vadd.f32 %v1502, %v1484
      %v1511 = vadd.f32 %v1503, %v1487
      %v1512 = vadd.f32 %v1504, %v1492
      %v1513 = vadd.f32 %v1505, %v1495
      %1514 = vst [vmem:[#allocation2] sm:$0xff] %v1506
      %1515 = vst [vmem:[#allocation2 + $0x8] sm:$0xff] %v1507
      %1516 = vst [vmem:[#allocation2 + $0x10] sm:$0xff] %v1508
      %1517 = vst [vmem:[#allocation2 + $0x18] sm:$0xff] %v1509
      %1518 = vst [vmem:[#allocation2 + $0x20] sm:$0xff] %v1510
      %1519 = vst [vmem:[#allocation2 + $0x28] sm:$0xff] %v1511
      %1520 = vst [vmem:[#allocation2 + $0x30] sm:$0xff] %v1512
      %1521 = vst [vmem:[#allocation2 + $0x38] sm:$0xff] %v1513
      %v1522 = vld [vmem:[%s1021] sm:$0xe]
      %v1523 = vld [vmem:[%s1021 + $0x4] sm:$0x1]
      %v1524 = vld [vmem:[%s1021 + $0x8] sm:$0xe]
      %v1525 = vld [vmem:[%s1021 + $0xc] sm:$0x1]
      %v1526 = vld [vmem:[%s1021 + $0x10] sm:$0xe]
      %v1527 = vld [vmem:[%s1021 + $0x14] sm:$0x1]
      %v1528 = vld [vmem:[%s1021 + $0x18] sm:$0xe]
      %v1529 = vld [vmem:[%s1021 + $0x1c] sm:$0x1]
      %v1530 = vld [vmem:[%s1021 + $0x20] sm:$0xe]
      %v1531 = vld [vmem:[%s1021 + $0x24] sm:$0x1]
      %v1532 = vld [vmem:[%s1021 + $0x28] sm:$0xe]
      %v1533 = vld [vmem:[%s1021 + $0x2c] sm:$0x1]
      %v1534 = vld [vmem:[%s1021 + $0x30] sm:$0xe]
      %v1535 = vld [vmem:[%s1021 + $0x34] sm:$0x1]
      %v1536 = vld [vmem:[%s1021 + $0x38] sm:$0xe]
      %v1537 = vld [vmem:[%s1021 + $0x3c] sm:$0x1]
      %v1538 = vunpack.c.l.bf16 %v1522
      %v1539 = vunpack.c.l.bf16 %v1523
      %v1540 = vunpack.c.l.bf16 %v1524
      %v1541 = vunpack.c.l.bf16 %v1525
      %v1542 = vunpack.c.l.bf16 %v1526
      %v1543 = vunpack.c.l.bf16 %v1527
      %v1544 = vunpack.c.l.bf16 %v1528
      %v1545 = vunpack.c.l.bf16 %v1529
      %v1546 = vunpack.c.l.bf16 %v1530
      %v1547 = vunpack.c.l.bf16 %v1531
      %v1548 = vunpack.c.l.bf16 %v1532
      %v1549 = vunpack.c.l.bf16 %v1533
      %v1550 = vunpack.c.l.bf16 %v1534
      %v1551 = vunpack.c.l.bf16 %v1535
      %v1552 = vunpack.c.l.bf16 %v1536
      %v1553 = vunpack.c.l.bf16 %v1537
      %v1554 = vmul.f32 %v1538, %v233
      %v1555 = vmul.f32 %v1539, %v233
      %v1556 = vmul.f32 %v1540, %v233
      %v1557 = vmul.f32 %v1541, %v233
      %v1558 = vmul.f32 %v1542, %v233
      %v1559 = vmul.f32 %v1543, %v233
      %v1560 = vmul.f32 %v1544, %v233
      %v1561 = vmul.f32 %v1545, %v233
      %v1562 = vmul.f32 %v1546, %v233
      %v1563 = vmul.f32 %v1547, %v233
      %v1564 = vmul.f32 %v1548, %v233
      %v1565 = vmul.f32 %v1549, %v233
      %v1566 = vmul.f32 %v1550, %v233
      %v1567 = vmul.f32 %v1551, %v233
      %v1568 = vmul.f32 %v1552, %v233
      %v1569 = vmul.f32 %v1553, %v233
      %v1570 = vadd.f32 %v1554, %v245
      %v1571 = vadd.f32 %v1555, %v245
      %v1572 = vadd.f32 %v1556, %v245
      %v1573 = vadd.f32 %v1557, %v245
      %v1574 = vadd.f32 %v1558, %v245
      %v1575 = vadd.f32 %v1559, %v245
      %v1576 = vadd.f32 %v1560, %v245
      %v1577 = vadd.f32 %v1561, %v245
      %v1578 = vadd.f32 %v1562, %v245
      %v1579 = vadd.f32 %v1563, %v245
      %v1580 = vadd.f32 %v1564, %v245
      %v1581 = vadd.f32 %v1565, %v245
      %v1582 = vadd.f32 %v1566, %v245
      %v1583 = vadd.f32 %v1567, %v245
      %v1584 = vadd.f32 %v1568, %v245
      %v1585 = vadd.f32 %v1569, %v245
      %v1586 = vmax.f32 %v1570, 0.0
      %v1587 = vmax.f32 %v1571, 0.0
      %v1588 = vmax.f32 %v1572, 0.0
      %v1589 = vmax.f32 %v1573, 0.0
      %v1590 = vmax.f32 %v1574, 0.0
      %v1591 = vmax.f32 %v1575, 0.0
      %v1592 = vmax.f32 %v1576, 0.0
      %v1593 = vmax.f32 %v1577, 0.0
      %v1594 = vmax.f32 %v1578, 0.0
      %v1595 = vmax.f32 %v1579, 0.0
      %v1596 = vmax.f32 %v1580, 0.0
      %v1597 = vmax.f32 %v1581, 0.0
      %v1598 = vmax.f32 %v1582, 0.0
      %v1599 = vmax.f32 %v1583, 0.0
      %v1600 = vmax.f32 %v1584, 0.0
      %v1601 = vmax.f32 %v1585, 0.0
      %v1618 = vrot.slane %v1586, 2
      %v1619 = vrot.slane %v1587, 2
      %v1620 = vsel %vm822, %v1618, %v1619
      %v1621 = vrot.slane %v1588, 2
      %v1622 = vrot.slane %v1589, 2
      %v1623 = vsel %vm822, %v1621, %v1622
      %v1624 = vrot.slane %v1590, 2
      %v1625 = vrot.slane %v1591, 2
      %v1626 = vsel %vm822, %v1624, %v1625
      %v1627 = vrot.slane %v1592, 2
      %v1628 = vrot.slane %v1593, 2
      %v1629 = vsel %vm822, %v1627, %v1628
      %v1630 = vrot.slane %v1594, 2
      %v1631 = vrot.slane %v1595, 2
      %v1632 = vsel %vm822, %v1630, %v1631
      %v1633 = vrot.slane %v1596, 2
      %v1634 = vrot.slane %v1597, 2
      %v1635 = vsel %vm822, %v1633, %v1634
      %v1636 = vrot.slane %v1598, 2
      %v1637 = vrot.slane %v1599, 2
      %v1638 = vsel %vm822, %v1636, %v1637
      %v1639 = vrot.slane %v1600, 2
      %v1640 = vrot.slane %v1601, 2
      %v1641 = vsel %vm822, %v1639, %v1640
      %v1650 = vsel %vm805, %v1620, 0.0
      %v1651 = vsel %vm805, %v1623, 0.0
      %v1652 = vsel %vm805, %v1626, 0.0
      %v1653 = vsel %vm805, %v1629, 0.0
      %v1654 = vsel %vm805, %v1632, 0.0
      %v1655 = vsel %vm805, %v1635, 0.0
      %v1656 = vsel %vm805, %v1638, 0.0
      %v1657 = vsel %vm805, %v1641, 0.0
      %v1658 = vpack.c.bf16 %v1651, %v1650
      %v1659 = vpack.c.bf16 %v1653, %v1652
      %v1660 = vpack.c.bf16 %v1655, %v1654
      %v1661 = vpack.c.bf16 %v1657, %v1656
      %s1662 = scalar_lea.vmem %s1, 320
      %v1663 = vld [vmem:[%s1662] sm:$0xf]
      %v1664 = vld [vmem:[%s1662 + $0x4] sm:$0xf]
      %v1665 = vld [vmem:[%s1662 + $0x8] sm:$0xf]
      %v1666 = vld [vmem:[%s1662 + $0xc] sm:$0xf]
      %v1667 = vld [vmem:[%s1662 + $0x10] sm:$0xf]
      %v1668 = vld [vmem:[%s1662 + $0x14] sm:$0xf]
      %v1669 = vld [vmem:[%s1662 + $0x18] sm:$0xf]
      %v1670 = vld [vmem:[%s1662 + $0x1c] sm:$0xf]
      %v1671 = vld [vmem:[%s1662 + $0x20] sm:$0xf]
      %v1672 = vld [vmem:[%s1662 + $0x24] sm:$0xf]
      %v1673 = vld [vmem:[%s1662 + $0x28] sm:$0xf]
      %v1674 = vld [vmem:[%s1662 + $0x2c] sm:$0xf]
      %v1675 = vld [vmem:[%s1662 + $0x30] sm:$0xf]
      %v1676 = vld [vmem:[%s1662 + $0x34] sm:$0xf]
      %v1677 = vld [vmem:[%s1662 + $0x38] sm:$0xf]
      %v1678 = vld [vmem:[%s1662 + $0x3c] sm:$0xf]
      %v1695 = vunpack.c.l.b16 %v1663
      %v1696 = vunpack.c.l.b16 %v1664
      %v1697 = vunpack.c.l.b16 %v1665
      %v1698 = vunpack.c.l.b16 %v1666
      %v1699 = vunpack.c.l.b16 %v1667
      %v1700 = vunpack.c.l.b16 %v1668
      %v1701 = vunpack.c.l.b16 %v1669
      %v1702 = vunpack.c.l.b16 %v1670
      %v1703 = vunpack.c.l.b16 %v1671
      %v1704 = vunpack.c.l.b16 %v1672
      %v1705 = vunpack.c.l.b16 %v1673
      %v1706 = vunpack.c.l.b16 %v1674
      %v1707 = vunpack.c.l.b16 %v1675
      %v1708 = vunpack.c.l.b16 %v1676
      %v1709 = vunpack.c.l.b16 %v1677
      %v1710 = vunpack.c.l.b16 %v1678
      %v1711 = vpack.c.b16 %v1696, %v1695
      %v1712 = vpack.c.b16 %v1698, %v1697
      %v1713 = vpack.c.b16 %v1700, %v1699
      %v1714 = vpack.c.b16 %v1702, %v1701
      %v1715 = vpack.c.b16 %v1704, %v1703
      %v1716 = vpack.c.b16 %v1706, %v1705
      %v1717 = vpack.c.b16 %v1708, %v1707
      %v1718 = vpack.c.b16 %v1710, %v1709
      %1727 = vmatprep.subr.bf16.mxu0 0
      %1728 = vmatpush1.bf16.msra.mxu0 %v1711
      %1729 = vmatprep.subr.bf16.mxu0 0
      %1730 = vmatpush1.bf16.msra.mxu0 %v1712
      %1731 = vmatprep.subr.bf16.mxu0 0
      %1732 = vmatpush1.bf16.msra.mxu0 %v1713
      %1733 = vmatprep.subr.bf16.mxu0 0
      %1734 = vmatpush1.bf16.msra.mxu0 %v1714
      %1735 = vmatprep.subr.bf16.mxu0 0
      %1736 = vmatpush1.bf16.msra.mxu0 %v1715
      %1737 = vmatprep.subr.bf16.mxu0 0
      %1738 = vmatpush1.bf16.msra.mxu0 %v1716
      %1739 = vmatprep.subr.bf16.mxu0 0
      %1740 = vmatpush1.bf16.msra.mxu0 %v1717
      %1741 = vmatprep.subr.bf16.mxu0 0
      %1742 = vmatpush1.bf16.msra.mxu0 %v1718
      %1743 = vmatprep.subr.bf16.mxu0 0
      %1744 = vmatpush1.bf16.msra.mxu0 0
      %1745 = vmatprep.subr.bf16.mxu0 0
      %1746 = vmatpush1.bf16.msra.mxu0 0
      %1747 = vmatprep.subr.bf16.mxu0 0
      %1748 = vmatpush1.bf16.msra.mxu0 0
      %1749 = vmatprep.subr.bf16.mxu0 0
      %1750 = vmatpush1.bf16.msra.mxu0 0
      %1751 = vmatprep.subr.bf16.mxu0 0
      %1752 = vmatpush1.bf16.msra.mxu0 0
      %1753 = vmatprep.subr.bf16.mxu0 0
      %1754 = vmatpush1.bf16.msra.mxu0 0
      %1755 = vmatprep.subr.bf16.mxu0 0
      %1756 = vmatpush1.bf16.msra.mxu0 0
      %1757 = vmatprep.subr.bf16.mxu0 0
      %1758 = vmatpush1.bf16.msra.mxu0 0
      %1759 = vmatprep.mubr.bf16.mxu0 0
      %1760 = vmatmul.mubr.bf16.gmra.mrb[0].mxu0 %v1658
      %v1761 = vpop.f32.mrb[0].mxu0
      %v1762 = vadd.f32 0.0, %v1761
      %v1763 = vpop.f32.mrb[0].mxu0
      %v1764 = vpop.f32.mrb[0].mxu0
      %v1765 = vadd.f32 0.0, %v1764
      %v1766 = vpop.f32.mrb[0].mxu0
      %1767 = vmatprep.mubr.bf16.mxu0 0
      %1768 = vmatmul.mubr.bf16.gmra.mrb[0].mxu0 %v1659
      %v1769 = vpop.f32.mrb[0].mxu0
      %v1770 = vadd.f32 0.0, %v1769
      %v1771 = vpop.f32.mrb[0].mxu0
      %v1772 = vpop.f32.mrb[0].mxu0
      %v1773 = vadd.f32 0.0, %v1772
      %v1774 = vpop.f32.mrb[0].mxu0
      %1775 = vmatprep.mubr.bf16.mxu0 0
      %1776 = vmatmul.mubr.bf16.gmra.mrb[0].mxu0 %v1660
      %v1777 = vpop.f32.mrb[0].mxu0
      %v1778 = vadd.f32 0.0, %v1777
      %v1779 = vpop.f32.mrb[0].mxu0
      %v1780 = vpop.f32.mrb[0].mxu0
      %v1781 = vadd.f32 0.0, %v1780
      %v1782 = vpop.f32.mrb[0].mxu0
      %1783 = vmatprep.mubr.bf16.mxu0 0
      %1784 = vmatmul.mubr.bf16.gmra.mrb[0].mxu0 %v1661
      %v1785 = vpop.f32.mrb[0].mxu0
      %v1786 = vadd.f32 0.0, %v1785
      %v1787 = vpop.f32.mrb[0].mxu0
      %v1788 = vpop.f32.mrb[0].mxu0
      %v1789 = vadd.f32 0.0, %v1788
      %v1790 = vpop.f32.mrb[0].mxu0
      %1791 = vdwg.mxu0
      %v1792 = vld [vmem:[#allocation2] sm:$0xff]
      %v1793 = vld [vmem:[#allocation2 + $0x8] sm:$0xff]
      %v1794 = vld [vmem:[#allocation2 + $0x10] sm:$0xff]
      %v1795 = vld [vmem:[#allocation2 + $0x18] sm:$0xff]
      %v1796 = vld [vmem:[#allocation2 + $0x20] sm:$0xff]
      %v1797 = vld [vmem:[#allocation2 + $0x28] sm:$0xff]
      %v1798 = vld [vmem:[#allocation2 + $0x30] sm:$0xff]
      %v1799 = vld [vmem:[#allocation2 + $0x38] sm:$0xff]
      %v1800 = vadd.f32 %v1792, %v1762
      %v1801 = vadd.f32 %v1793, %v1765
      %v1802 = vadd.f32 %v1794, %v1770
      %v1803 = vadd.f32 %v1795, %v1773
      %v1804 = vadd.f32 %v1796, %v1778
      %v1805 = vadd.f32 %v1797, %v1781
      %v1806 = vadd.f32 %v1798, %v1786
      %v1807 = vadd.f32 %v1799, %v1789
      %1808 = vst [vmem:[#allocation2] sm:$0xff] %v1800
      %1809 = vst [vmem:[#allocation2 + $0x8] sm:$0xff] %v1801
      %1810 = vst [vmem:[#allocation2 + $0x10] sm:$0xff] %v1802
      %1811 = vst [vmem:[#allocation2 + $0x18] sm:$0xff] %v1803
      %1812 = vst [vmem:[#allocation2 + $0x20] sm:$0xff] %v1804
      %1813 = vst [vmem:[#allocation2 + $0x28] sm:$0xff] %v1805
      %1814 = vst [vmem:[#allocation2 + $0x30] sm:$0xff] %v1806
      %1815 = vst [vmem:[#allocation2 + $0x38] sm:$0xff] %v1807
      %s1816 = scalar_lea.vmem %s199, 16
      %v1817 = vld [vmem:[%s1816] sm:$0xf]
      %v1818 = vld [vmem:[%s1816 + $0x8] sm:$0xf]
      %v1819 = vld [vmem:[%s1816 + $0x10] sm:$0xf]
      %v1820 = vld [vmem:[%s1816 + $0x18] sm:$0xf]
      %v1821 = vld [vmem:[%s1816 + $0x20] sm:$0xf]
      %v1822 = vld [vmem:[%s1816 + $0x28] sm:$0xf]
      %v1823 = vld [vmem:[%s1816 + $0x30] sm:$0xf]
      %v1824 = vld [vmem:[%s1816 + $0x38] sm:$0xf]
      %v1825 = vunpack.c.l.bf16 %v1817
      %v1826 = vunpack.c.l.bf16 %v1818
      %v1827 = vunpack.c.l.bf16 %v1819
      %v1828 = vunpack.c.l.bf16 %v1820
      %v1829 = vunpack.c.l.bf16 %v1821
      %v1830 = vunpack.c.l.bf16 %v1822
      %v1831 = vunpack.c.l.bf16 %v1823
      %v1832 = vunpack.c.l.bf16 %v1824
      %v1833 = vmul.f32 %v1825, %v233
      %v1834 = vmul.f32 %v1826, %v233
      %v1835 = vmul.f32 %v1827, %v233
      %v1836 = vmul.f32 %v1828, %v233
      %v1837 = vmul.f32 %v1829, %v233
      %v1838 = vmul.f32 %v1830, %v233
      %v1839 = vmul.f32 %v1831, %v233
      %v1840 = vmul.f32 %v1832, %v233
      %v1841 = vadd.f32 %v1833, %v245
      %v1842 = vadd.f32 %v1834, %v245
      %v1843 = vadd.f32 %v1835, %v245
      %v1844 = vadd.f32 %v1836, %v245
      %v1845 = vadd.f32 %v1837, %v245
      %v1846 = vadd.f32 %v1838, %v245
      %v1847 = vadd.f32 %v1839, %v245
      %v1848 = vadd.f32 %v1840, %v245
      %v1849 = vmax.f32 %v1841, 0.0
      %v1850 = vmax.f32 %v1842, 0.0
      %v1851 = vmax.f32 %v1843, 0.0
      %v1852 = vmax.f32 %v1844, 0.0
      %v1853 = vmax.f32 %v1845, 0.0
      %v1854 = vmax.f32 %v1846, 0.0
      %v1855 = vmax.f32 %v1847, 0.0
      %v1856 = vmax.f32 %v1848, 0.0
      %v1857 = vsel %vm267, %v1849, 0.0
      %v1858 = vsel %vm267, %v1850, 0.0
      %v1859 = vsel %vm267, %v1851, 0.0
      %v1860 = vsel %vm267, %v1852, 0.0
      %v1861 = vsel %vm267, %v1853, 0.0
      %v1862 = vsel %vm267, %v1854, 0.0
      %v1863 = vsel %vm267, %v1855, 0.0
      %v1864 = vsel %vm266, %v1856, 0.0
      %v1865 = vpack.c.bf16 %v1858, %v1857
      %v1866 = vpack.c.bf16 %v1860, %v1859
      %v1867 = vpack.c.bf16 %v1862, %v1861
      %v1868 = vpack.c.bf16 %v1864, %v1863
      %s1869 = scalar_lea.vmem %s1, 384
      %v1870 = vld [vmem:[%s1869] sm:$0xf]
      %v1871 = vld [vmem:[%s1869 + $0x4] sm:$0xf]
      %v1872 = vld [vmem:[%s1869 + $0x8] sm:$0xf]
      %v1873 = vld [vmem:[%s1869 + $0xc] sm:$0xf]
      %v1874 = vld [vmem:[%s1869 + $0x10] sm:$0xf]
      %v1875 = vld [vmem:[%s1869 + $0x14] sm:$0xf]
      %v1876 = vld [vmem:[%s1869 + $0x18] sm:$0xf]
      %v1877 = vld [vmem:[%s1869 + $0x1c] sm:$0xf]
      %v1878 = vld [vmem:[%s1869 + $0x20] sm:$0xf]
      %v1879 = vld [vmem:[%s1869 + $0x24] sm:$0xf]
      %v1880 = vld [vmem:[%s1869 + $0x28] sm:$0xf]
      %v1881 = vld [vmem:[%s1869 + $0x2c] sm:$0xf]
      %v1882 = vld [vmem:[%s1869 + $0x30] sm:$0xf]
      %v1883 = vld [vmem:[%s1869 + $0x34] sm:$0xf]
      %v1884 = vld [vmem:[%s1869 + $0x38] sm:$0xf]
      %v1885 = vld [vmem:[%s1869 + $0x3c] sm:$0xf]
      %v1902 = vunpack.c.l.b16 %v1870
      %v1903 = vunpack.c.l.b16 %v1871
      %v1904 = vunpack.c.l.b16 %v1872
      %v1905 = vunpack.c.l.b16 %v1873
      %v1906 = vunpack.c.l.b16 %v1874
      %v1907 = vunpack.c.l.b16 %v1875
      %v1908 = vunpack.c.l.b16 %v1876
      %v1909 = vunpack.c.l.b16 %v1877
      %v1910 = vunpack.c.l.b16 %v1878
      %v1911 = vunpack.c.l.b16 %v1879
      %v1912 = vunpack.c.l.b16 %v1880
      %v1913 = vunpack.c.l.b16 %v1881
      %v1914 = vunpack.c.l.b16 %v1882
      %v1915 = vunpack.c.l.b16 %v1883
      %v1916 = vunpack.c.l.b16 %v1884
      %v1917 = vunpack.c.l.b16 %v1885
      %v1918 = vpack.c.b16 %v1903, %v1902
      %v1919 = vpack.c.b16 %v1905, %v1904
      %v1920 = vpack.c.b16 %v1907, %v1906
      %v1921 = vpack.c.b16 %v1909, %v1908
      %v1922 = vpack.c.b16 %v1911, %v1910
      %v1923 = vpack.c.b16 %v1913, %v1912
      %v1924 = vpack.c.b16 %v1915, %v1914
      %v1925 = vpack.c.b16 %v1917, %v1916
      %1934 = vmatprep.subr.bf16.mxu0 0
      %1935 = vmatpush1.bf16.msra.mxu0 %v1918
      %1936 = vmatprep.subr.bf16.mxu0 0
      %1937 = vmatpush1.bf16.msra.mxu0 %v1919
      %1938 = vmatprep.subr.bf16.mxu0 0
      %1939 = vmatpush1.bf16.msra.mxu0 %v1920
      %1940 = vmatprep.subr.bf16.mxu0 0
      %1941 = vmatpush1.bf16.msra.mxu0 %v1921
      %1942 = vmatprep.subr.bf16.mxu0 0
      %1943 = vmatpush1.bf16.msra.mxu0 %v1922
      %1944 = vmatprep.subr.bf16.mxu0 0
      %1945 = vmatpush1.bf16.msra.mxu0 %v1923
      %1946 = vmatprep.subr.bf16.mxu0 0
      %1947 = vmatpush1.bf16.msra.mxu0 %v1924
      %1948 = vmatprep.subr.bf16.mxu0 0
      %1949 = vmatpush1.bf16.msra.mxu0 %v1925
      %1950 = vmatprep.subr.bf16.mxu0 0
      %1951 = vmatpush1.bf16.msra.mxu0 0
      %1952 = vmatprep.subr.bf16.mxu0 0
      %1953 = vmatpush1.bf16.msra.mxu0 0
      %1954 = vmatprep.subr.bf16.mxu0 0
      %1955 = vmatpush1.bf16.msra.mxu0 0
      %1956 = vmatprep.subr.bf16.mxu0 0
      %1957 = vmatpush1.bf16.msra.mxu0 0
      %1958 = vmatprep.subr.bf16.mxu0 0
      %1959 = vmatpush1.bf16.msra.mxu0 0
      %1960 = vmatprep.subr.bf16.mxu0 0
      %1961 = vmatpush1.bf16.msra.mxu0 0
      %1962 = vmatprep.subr.bf16.mxu0 0
      %1963 = vmatpush1.bf16.msra.mxu0 0
      %1964 = vmatprep.subr.bf16.mxu0 0
      %1965 = vmatpush1.bf16.msra.mxu0 0
      %1966 = vmatprep.mubr.bf16.mxu0 0
      %1967 = vmatmul.mubr.bf16.gmra.mrb[0].mxu0 %v1865
      %v1968 = vpop.f32.mrb[0].mxu0
      %v1969 = vadd.f32 0.0, %v1968
      %v1970 = vpop.f32.mrb[0].mxu0
      %v1971 = vpop.f32.mrb[0].mxu0
      %v1972 = vadd.f32 0.0, %v1971
      %v1973 = vpop.f32.mrb[0].mxu0
      %1974 = vmatprep.mubr.bf16.mxu0 0
      %1975 = vmatmul.mubr.bf16.gmra.mrb[0].mxu0 %v1866
      %v1976 = vpop.f32.mrb[0].mxu0
      %v1977 = vadd.f32 0.0, %v1976
      %v1978 = vpop.f32.mrb[0].mxu0
      %v1979 = vpop.f32.mrb[0].mxu0
      %v1980 = vadd.f32 0.0, %v1979
      %v1981 = vpop.f32.mrb[0].mxu0
      %1982 = vmatprep.mubr.bf16.mxu0 0
      %1983 = vmatmul.mubr.bf16.gmra.mrb[0].mxu0 %v1867
      %v1984 = vpop.f32.mrb[0].mxu0
      %v1985 = vadd.f32 0.0, %v1984
      %v1986 = vpop.f32.mrb[0].mxu0
      %v1987 = vpop.f32.mrb[0].mxu0
      %v1988 = vadd.f32 0.0, %v1987
      %v1989 = vpop.f32.mrb[0].mxu0
      %1990 = vmatprep.mubr.bf16.mxu0 0
      %1991 = vmatmul.mubr.bf16.gmra.mrb[0].mxu0 %v1868
      %v1992 = vpop.f32.mrb[0].mxu0
      %v1993 = vadd.f32 0.0, %v1992
      %v1994 = vpop.f32.mrb[0].mxu0
      %v1995 = vpop.f32.mrb[0].mxu0
      %v1996 = vadd.f32 0.0, %v1995
      %v1997 = vpop.f32.mrb[0].mxu0
      %1998 = vdwg.mxu0
      %v1999 = vld [vmem:[#allocation2] sm:$0xff]
      %v2000 = vld [vmem:[#allocation2 + $0x8] sm:$0xff]
      %v2001 = vld [vmem:[#allocation2 + $0x10] sm:$0xff]
      %v2002 = vld [vmem:[#allocation2 + $0x18] sm:$0xff]
      %v2003 = vld [vmem:[#allocation2 + $0x20] sm:$0xff]
      %v2004 = vld [vmem:[#allocation2 + $0x28] sm:$0xff]
      %v2005 = vld [vmem:[#allocation2 + $0x30] sm:$0xff]
      %v2006 = vld [vmem:[#allocation2 + $0x38] sm:$0xff]
      %v2007 = vadd.f32 %v1999, %v1969
      %v2008 = vadd.f32 %v2000, %v1972
      %v2009 = vadd.f32 %v2001, %v1977
      %v2010 = vadd.f32 %v2002, %v1980
      %v2011 = vadd.f32 %v2003, %v1985
      %v2012 = vadd.f32 %v2004, %v1988
      %v2013 = vadd.f32 %v2005, %v1993
      %v2014 = vadd.f32 %v2006, %v1996
      %2015 = vst [vmem:[#allocation2] sm:$0xff] %v2007
      %2016 = vst [vmem:[#allocation2 + $0x8] sm:$0xff] %v2008
      %2017 = vst [vmem:[#allocation2 + $0x10] sm:$0xff] %v2009
      %2018 = vst [vmem:[#allocation2 + $0x18] sm:$0xff] %v2010
      %2019 = vst [vmem:[#allocation2 + $0x20] sm:$0xff] %v2011
      %2020 = vst [vmem:[#allocation2 + $0x28] sm:$0xff] %v2012
      %2021 = vst [vmem:[#allocation2 + $0x30] sm:$0xff] %v2013
      %2022 = vst [vmem:[#allocation2 + $0x38] sm:$0xff] %v2014
      %v2023 = vld [vmem:[%s1816] sm:$0xf]
      %v2024 = vld [vmem:[%s1816 + $0x4] sm:$0x1]
      %v2025 = vld [vmem:[%s1816 + $0x8] sm:$0xf]
      %v2026 = vld [vmem:[%s1816 + $0xc] sm:$0x1]
      %v2027 = vld [vmem:[%s1816 + $0x10] sm:$0xf]
      %v2028 = vld [vmem:[%s1816 + $0x14] sm:$0x1]
      %v2029 = vld [vmem:[%s1816 + $0x18] sm:$0xf]
      %v2030 = vld [vmem:[%s1816 + $0x1c] sm:$0x1]
      %v2031 = vld [vmem:[%s1816 + $0x20] sm:$0xf]
      %v2032 = vld [vmem:[%s1816 + $0x24] sm:$0x1]
      %v2033 = vld [vmem:[%s1816 + $0x28] sm:$0xf]
      %v2034 = vld [vmem:[%s1816 + $0x2c] sm:$0x1]
      %v2035 = vld [vmem:[%s1816 + $0x30] sm:$0xf]
      %v2036 = vld [vmem:[%s1816 + $0x34] sm:$0x1]
      %v2037 = vld [vmem:[%s1816 + $0x38] sm:$0xf]
      %v2038 = vld [vmem:[%s1816 + $0x3c] sm:$0x1]
      %v2039 = vunpack.c.l.bf16 %v2023
      %v2040 = vunpack.c.l.bf16 %v2024
      %v2041 = vunpack.c.l.bf16 %v2025
      %v2042 = vunpack.c.l.bf16 %v2026
      %v2043 = vunpack.c.l.bf16 %v2027
      %v2044 = vunpack.c.l.bf16 %v2028
      %v2045 = vunpack.c.l.bf16 %v2029
      %v2046 = vunpack.c.l.bf16 %v2030
      %v2047 = vunpack.c.l.bf16 %v2031
      %v2048 = vunpack.c.l.bf16 %v2032
      %v2049 = vunpack.c.l.bf16 %v2033
      %v2050 = vunpack.c.l.bf16 %v2034
      %v2051 = vunpack.c.l.bf16 %v2035
      %v2052 = vunpack.c.l.bf16 %v2036
      %v2053 = vunpack.c.l.bf16 %v2037
      %v2054 = vunpack.c.l.bf16 %v2038
      %v2055 = vmul.f32 %v2039, %v233
      %v2056 = vmul.f32 %v2040, %v233
      %v2057 = vmul.f32 %v2041, %v233
      %v2058 = vmul.f32 %v2042, %v233
      %v2059 = vmul.f32 %v2043, %v233
      %v2060 = vmul.f32 %v2044, %v233
      %v2061 = vmul.f32 %v2045, %v233
      %v2062 = vmul.f32 %v2046, %v233
      %v2063 = vmul.f32 %v2047, %v233
      %v2064 = vmul.f32 %v2048, %v233
      %v2065 = vmul.f32 %v2049, %v233
      %v2066 = vmul.f32 %v2050, %v233
      %v2067 = vmul.f32 %v2051, %v233
      %v2068 = vmul.f32 %v2052, %v233
      %v2069 = vmul.f32 %v2053, %v233
      %v2070 = vmul.f32 %v2054, %v233
      %v2071 = vadd.f32 %v2055, %v245
      %v2072 = vadd.f32 %v2056, %v245
      %v2073 = vadd.f32 %v2057, %v245
      %v2074 = vadd.f32 %v2058, %v245
      %v2075 = vadd.f32 %v2059, %v245
      %v2076 = vadd.f32 %v2060, %v245
      %v2077 = vadd.f32 %v2061, %v245
      %v2078 = vadd.f32 %v2062, %v245
      %v2079 = vadd.f32 %v2063, %v245
      %v2080 = vadd.f32 %v2064, %v245
      %v2081 = vadd.f32 %v2065, %v245
      %v2082 = vadd.f32 %v2066, %v245
      %v2083 = vadd.f32 %v2067, %v245
      %v2084 = vadd.f32 %v2068, %v245
      %v2085 = vadd.f32 %v2069, %v245
      %v2086 = vadd.f32 %v2070, %v245
      %v2087 = vmax.f32 %v2071, 0.0
      %v2088 = vmax.f32 %v2072, 0.0
      %v2089 = vmax.f32 %v2073, 0.0
      %v2090 = vmax.f32 %v2074, 0.0
      %v2091 = vmax.f32 %v2075, 0.0
      %v2092 = vmax.f32 %v2076, 0.0
      %v2093 = vmax.f32 %v2077, 0.0
      %v2094 = vmax.f32 %v2078, 0.0
      %v2095 = vmax.f32 %v2079, 0.0
      %v2096 = vmax.f32 %v2080, 0.0
      %v2097 = vmax.f32 %v2081, 0.0
      %v2098 = vmax.f32 %v2082, 0.0
      %v2099 = vmax.f32 %v2083, 0.0
      %v2100 = vmax.f32 %v2084, 0.0
      %v2101 = vmax.f32 %v2085, 0.0
      %v2102 = vmax.f32 %v2086, 0.0
      %v2119 = vrot.slane %v2087, 1
      %v2120 = vrot.slane %v2088, 1
      %v2121 = vsel %vm520, %v2119, %v2120
      %v2122 = vrot.slane %v2089, 1
      %v2123 = vrot.slane %v2090, 1
      %v2124 = vsel %vm520, %v2122, %v2123
      %v2125 = vrot.slane %v2091, 1
      %v2126 = vrot.slane %v2092, 1
      %v2127 = vsel %vm520, %v2125, %v2126
      %v2128 = vrot.slane %v2093, 1
      %v2129 = vrot.slane %v2094, 1
      %v2130 = vsel %vm520, %v2128, %v2129
      %v2131 = vrot.slane %v2095, 1
      %v2132 = vrot.slane %v2096, 1
      %v2133 = vsel %vm520, %v2131, %v2132
      %v2134 = vrot.slane %v2097, 1
      %v2135 = vrot.slane %v2098, 1
      %v2136 = vsel %vm520, %v2134, %v2135
      %v2137 = vrot.slane %v2099, 1
      %v2138 = vrot.slane %v2100, 1
      %v2139 = vsel %vm520, %v2137, %v2138
      %v2140 = vrot.slane %v2101, 1
      %v2141 = vrot.slane %v2102, 1
      %v2142 = vsel %vm520, %v2140, %v2141
      %v2151 = vsel %vm503, %v2121, 0.0
      %v2152 = vsel %vm503, %v2124, 0.0
      %v2153 = vsel %vm503, %v2127, 0.0
      %v2154 = vsel %vm503, %v2130, 0.0
      %v2155 = vsel %vm503, %v2133, 0.0
      %v2156 = vsel %vm503, %v2136, 0.0
      %v2157 = vsel %vm503, %v2139, 0.0
      %v2158 = vsel %vm502, %v2142, 0.0
      %v2159 = vpack.c.bf16 %v2152, %v2151
      %v2160 = vpack.c.bf16 %v2154, %v2153
      %v2161 = vpack.c.bf16 %v2156, %v2155
      %v2162 = vpack.c.bf16 %v2158, %v2157
      %s2163 = scalar_lea.vmem %s1, 448
      %v2164 = vld [vmem:[%s2163] sm:$0xf]
      %v2165 = vld [vmem:[%s2163 + $0x4] sm:$0xf]
      %v2166 = vld [vmem:[%s2163 + $0x8] sm:$0xf]
      %v2167 = vld [vmem:[%s2163 + $0xc] sm:$0xf]
      %v2168 = vld [vmem:[%s2163 + $0x10] sm:$0xf]
      %v2169 = vld [vmem:[%s2163 + $0x14] sm:$0xf]
      %v2170 = vld [vmem:[%s2163 + $0x18] sm:$0xf]
      %v2171 = vld [vmem:[%s2163 + $0x1c] sm:$0xf]
      %v2172 = vld [vmem:[%s2163 + $0x20] sm:$0xf]
      %v2173 = vld [vmem:[%s2163 + $0x24] sm:$0xf]
      %v2174 = vld [vmem:[%s2163 + $0x28] sm:$0xf]
      %v2175 = vld [vmem:[%s2163 + $0x2c] sm:$0xf]
      %v2176 = vld [vmem:[%s2163 + $0x30] sm:$0xf]
      %v2177 = vld [vmem:[%s2163 + $0x34] sm:$0xf]
      %v2178 = vld [vmem:[%s2163 + $0x38] sm:$0xf]
      %v2179 = vld [vmem:[%s2163 + $0x3c] sm:$0xf]
      %v2196 = vunpack.c.l.b16 %v2164
      %v2197 = vunpack.c.l.b16 %v2165
      %v2198 = vunpack.c.l.b16 %v2166
      %v2199 = vunpack.c.l.b16 %v2167
      %v2200 = vunpack.c.l.b16 %v2168
      %v2201 = vunpack.c.l.b16 %v2169
      %v2202 = vunpack.c.l.b16 %v2170
      %v2203 = vunpack.c.l.b16 %v2171
      %v2204 = vunpack.c.l.b16 %v2172
      %v2205 = vunpack.c.l.b16 %v2173
      %v2206 = vunpack.c.l.b16 %v2174
      %v2207 = vunpack.c.l.b16 %v2175
      %v2208 = vunpack.c.l.b16 %v2176
      %v2209 = vunpack.c.l.b16 %v2177
      %v2210 = vunpack.c.l.b16 %v2178
      %v2211 = vunpack.c.l.b16 %v2179
      %v2212 = vpack.c.b16 %v2197, %v2196
      %v2213 = vpack.c.b16 %v2199, %v2198
      %v2214 = vpack.c.b16 %v2201, %v2200
      %v2215 = vpack.c.b16 %v2203, %v2202
      %v2216 = vpack.c.b16 %v2205, %v2204
      %v2217 = vpack.c.b16 %v2207, %v2206
      %v2218 = vpack.c.b16 %v2209, %v2208
      %v2219 = vpack.c.b16 %v2211, %v2210
      %2228 = vmatprep.subr.bf16.mxu0 0
      %2229 = vmatpush1.bf16.msra.mxu0 %v2212
      %2230 = vmatprep.subr.bf16.mxu0 0
      %2231 = vmatpush1.bf16.msra.mxu0 %v2213
      %2232 = vmatprep.subr.bf16.mxu0 0
      %2233 = vmatpush1.bf16.msra.mxu0 %v2214
      %2234 = vmatprep.subr.bf16.mxu0 0
      %2235 = vmatpush1.bf16.msra.mxu0 %v2215
      %2236 = vmatprep.subr.bf16.mxu0 0
      %2237 = vmatpush1.bf16.msra.mxu0 %v2216
      %2238 = vmatprep.subr.bf16.mxu0 0
      %2239 = vmatpush1.bf16.msra.mxu0 %v2217
      %2240 = vmatprep.subr.bf16.mxu0 0
      %2241 = vmatpush1.bf16.msra.mxu0 %v2218
      %2242 = vmatprep.subr.bf16.mxu0 0
      %2243 = vmatpush1.bf16.msra.mxu0 %v2219
      %2244 = vmatprep.subr.bf16.mxu0 0
      %2245 = vmatpush1.bf16.msra.mxu0 0
      %2246 = vmatprep.subr.bf16.mxu0 0
      %2247 = vmatpush1.bf16.msra.mxu0 0
      %2248 = vmatprep.subr.bf16.mxu0 0
      %2249 = vmatpush1.bf16.msra.mxu0 0
      %2250 = vmatprep.subr.bf16.mxu0 0
      %2251 = vmatpush1.bf16.msra.mxu0 0
      %2252 = vmatprep.subr.bf16.mxu0 0
      %2253 = vmatpush1.bf16.msra.mxu0 0
      %2254 = vmatprep.subr.bf16.mxu0 0
      %2255 = vmatpush1.bf16.msra.mxu0 0
      %2256 = vmatprep.subr.bf16.mxu0 0
      %2257 = vmatpush1.bf16.msra.mxu0 0
      %2258 = vmatprep.subr.bf16.mxu0 0
      %2259 = vmatpush1.bf16.msra.mxu0 0
      %2260 = vmatprep.mubr.bf16.mxu0 0
      %2261 = vmatmul.mubr.bf16.gmra.mrb[0].mxu0 %v2159
      %v2262 = vpop.f32.mrb[0].mxu0
      %v2263 = vadd.f32 0.0, %v2262
      %v2264 = vpop.f32.mrb[0].mxu0
      %v2265 = vpop.f32.mrb[0].mxu0
      %v2266 = vadd.f32 0.0, %v2265
      %v2267 = vpop.f32.mrb[0].mxu0
      %2268 = vmatprep.mubr.bf16.mxu0 0
      %2269 = vmatmul.mubr.bf16.gmra.mrb[0].mxu0 %v2160
      %v2270 = vpop.f32.mrb[0].mxu0
      %v2271 = vadd.f32 0.0, %v2270
      %v2272 = vpop.f32.mrb[0].mxu0
      %v2273 = vpop.f32.mrb[0].mxu0
      %v2274 = vadd.f32 0.0, %v2273
      %v2275 = vpop.f32.mrb[0].mxu0
      %2276 = vmatprep.mubr.bf16.mxu0 0
      %2277 = vmatmul.mubr.bf16.gmra.mrb[0].mxu0 %v2161
      %v2278 = vpop.f32.mrb[0].mxu0
      %v2279 = vadd.f32 0.0, %v2278
      %v2280 = vpop.f32.mrb[0].mxu0
      %v2281 = vpop.f32.mrb[0].mxu0
      %v2282 = vadd.f32 0.0, %v2281
      %v2283 = vpop.f32.mrb[0].mxu0
      %2284 = vmatprep.mubr.bf16.mxu0 0
      %2285 = vmatmul.mubr.bf16.gmra.mrb[0].mxu0 %v2162
      %v2286 = vpop.f32.mrb[0].mxu0
      %v2287 = vadd.f32 0.0, %v2286
      %v2288 = vpop.f32.mrb[0].mxu0
      %v2289 = vpop.f32.mrb[0].mxu0
      %v2290 = vadd.f32 0.0, %v2289
      %v2291 = vpop.f32.mrb[0].mxu0
      %2292 = vdwg.mxu0
      %v2293 = vld [vmem:[#allocation2] sm:$0xff]
      %v2294 = vld [vmem:[#allocation2 + $0x8] sm:$0xff]
      %v2295 = vld [vmem:[#allocation2 + $0x10] sm:$0xff]
      %v2296 = vld [vmem:[#allocation2 + $0x18] sm:$0xff]
      %v2297 = vld [vmem:[#allocation2 + $0x20] sm:$0xff]
      %v2298 = vld [vmem:[#allocation2 + $0x28] sm:$0xff]
      %v2299 = vld [vmem:[#allocation2 + $0x30] sm:$0xff]
      %v2300 = vld [vmem:[#allocation2 + $0x38] sm:$0xff]
      %v2301 = vadd.f32 %v2293, %v2263
      %v2302 = vadd.f32 %v2294, %v2266
      %v2303 = vadd.f32 %v2295, %v2271
      %v2304 = vadd.f32 %v2296, %v2274
      %v2305 = vadd.f32 %v2297, %v2279
      %v2306 = vadd.f32 %v2298, %v2282
      %v2307 = vadd.f32 %v2299, %v2287
      %v2308 = vadd.f32 %v2300, %v2290
      %2309 = vst [vmem:[#allocation2] sm:$0xff] %v2301
      %2310 = vst [vmem:[#allocation2 + $0x8] sm:$0xff] %v2302
      %2311 = vst [vmem:[#allocation2 + $0x10] sm:$0xff] %v2303
      %2312 = vst [vmem:[#allocation2 + $0x18] sm:$0xff] %v2304
      %2313 = vst [vmem:[#allocation2 + $0x20] sm:$0xff] %v2305
      %2314 = vst [vmem:[#allocation2 + $0x28] sm:$0xff] %v2306
      %2315 = vst [vmem:[#allocation2 + $0x30] sm:$0xff] %v2307
      %2316 = vst [vmem:[#allocation2 + $0x38] sm:$0xff] %v2308
      %v2317 = vld [vmem:[%s1816] sm:$0xe]
      %v2318 = vld [vmem:[%s1816 + $0x4] sm:$0x1]
      %v2319 = vld [vmem:[%s1816 + $0x8] sm:$0xe]
      %v2320 = vld [vmem:[%s1816 + $0xc] sm:$0x1]
      %v2321 = vld [vmem:[%s1816 + $0x10] sm:$0xe]
      %v2322 = vld [vmem:[%s1816 + $0x14] sm:$0x1]
      %v2323 = vld [vmem:[%s1816 + $0x18] sm:$0xe]
      %v2324 = vld [vmem:[%s1816 + $0x1c] sm:$0x1]
      %v2325 = vld [vmem:[%s1816 + $0x20] sm:$0xe]
      %v2326 = vld [vmem:[%s1816 + $0x24] sm:$0x1]
      %v2327 = vld [vmem:[%s1816 + $0x28] sm:$0xe]
      %v2328 = vld [vmem:[%s1816 + $0x2c] sm:$0x1]
      %v2329 = vld [vmem:[%s1816 + $0x30] sm:$0xe]
      %v2330 = vld [vmem:[%s1816 + $0x34] sm:$0x1]
      %v2331 = vld [vmem:[%s1816 + $0x38] sm:$0xe]
      %v2332 = vld [vmem:[%s1816 + $0x3c] sm:$0x1]
      %v2333 = vunpack.c.l.bf16 %v2317
      %v2334 = vunpack.c.l.bf16 %v2318
      %v2335 = vunpack.c.l.bf16 %v2319
      %v2336 = vunpack.c.l.bf16 %v2320
      %v2337 = vunpack.c.l.bf16 %v2321
      %v2338 = vunpack.c.l.bf16 %v2322
      %v2339 = vunpack.c.l.bf16 %v2323
      %v2340 = vunpack.c.l.bf16 %v2324
      %v2341 = vunpack.c.l.bf16 %v2325
      %v2342 = vunpack.c.l.bf16 %v2326
      %v2343 = vunpack.c.l.bf16 %v2327
      %v2344 = vunpack.c.l.bf16 %v2328
      %v2345 = vunpack.c.l.bf16 %v2329
      %v2346 = vunpack.c.l.bf16 %v2330
      %v2347 = vunpack.c.l.bf16 %v2331
      %v2348 = vunpack.c.l.bf16 %v2332
      %v2349 = vmul.f32 %v2333, %v233
      %v2350 = vmul.f32 %v2334, %v233
      %v2351 = vmul.f32 %v2335, %v233
      %v2352 = vmul.f32 %v2336, %v233
      %v2353 = vmul.f32 %v2337, %v233
      %v2354 = vmul.f32 %v2338, %v233
      %v2355 = vmul.f32 %v2339, %v233
      %v2356 = vmul.f32 %v2340, %v233
      %v2357 = vmul.f32 %v2341, %v233
      %v2358 = vmul.f32 %v2342, %v233
      %v2359 = vmul.f32 %v2343, %v233
      %v2360 = vmul.f32 %v2344, %v233
      %v2361 = vmul.f32 %v2345, %v233
      %v2362 = vmul.f32 %v2346, %v233
      %v2363 = vmul.f32 %v2347, %v233
      %v2364 = vmul.f32 %v2348, %v233
      %v2365 = vadd.f32 %v2349, %v245
      %v2366 = vadd.f32 %v2350, %v245
      %v2367 = vadd.f32 %v2351, %v245
      %v2368 = vadd.f32 %v2352, %v245
      %v2369 = vadd.f32 %v2353, %v245
      %v2370 = vadd.f32 %v2354, %v245
      %v2371 = vadd.f32 %v2355, %v245
      %v2372 = vadd.f32 %v2356, %v245
      %v2373 = vadd.f32 %v2357, %v245
      %v2374 = vadd.f32 %v2358, %v245
      %v2375 = vadd.f32 %v2359, %v245
      %v2376 = vadd.f32 %v2360, %v245
      %v2377 = vadd.f32 %v2361, %v245
      %v2378 = vadd.f32 %v2362, %v245
      %v2379 = vadd.f32 %v2363, %v245
      %v2380 = vadd.f32 %v2364, %v245
      %v2381 = vmax.f32 %v2365, 0.0
      %v2382 = vmax.f32 %v2366, 0.0
      %v2383 = vmax.f32 %v2367, 0.0
      %v2384 = vmax.f32 %v2368, 0.0
      %v2385 = vmax.f32 %v2369, 0.0
      %v2386 = vmax.f32 %v2370, 0.0
      %v2387 = vmax.f32 %v2371, 0.0
      %v2388 = vmax.f32 %v2372, 0.0
      %v2389 = vmax.f32 %v2373, 0.0
      %v2390 = vmax.f32 %v2374, 0.0
      %v2391 = vmax.f32 %v2375, 0.0
      %v2392 = vmax.f32 %v2376, 0.0
      %v2393 = vmax.f32 %v2377, 0.0
      %v2394 = vmax.f32 %v2378, 0.0
      %v2395 = vmax.f32 %v2379, 0.0
      %v2396 = vmax.f32 %v2380, 0.0
      %v2413 = vrot.slane %v2381, 2
      %v2414 = vrot.slane %v2382, 2
      %v2415 = vsel %vm822, %v2413, %v2414
      %v2416 = vrot.slane %v2383, 2
      %v2417 = vrot.slane %v2384, 2
      %v2418 = vsel %vm822, %v2416, %v2417
      %v2419 = vrot.slane %v2385, 2
      %v2420 = vrot.slane %v2386, 2
      %v2421 = vsel %vm822, %v2419, %v2420
      %v2422 = vrot.slane %v2387, 2
      %v2423 = vrot.slane %v2388, 2
      %v2424 = vsel %vm822, %v2422, %v2423
      %v2425 = vrot.slane %v2389, 2
      %v2426 = vrot.slane %v2390, 2
      %v2427 = vsel %vm822, %v2425, %v2426
      %v2428 = vrot.slane %v2391, 2
      %v2429 = vrot.slane %v2392, 2
      %v2430 = vsel %vm822, %v2428, %v2429
      %v2431 = vrot.slane %v2393, 2
      %v2432 = vrot.slane %v2394, 2
      %v2433 = vsel %vm822, %v2431, %v2432
      %v2434 = vrot.slane %v2395, 2
      %v2435 = vrot.slane %v2396, 2
      %v2436 = vsel %vm822, %v2434, %v2435
      %v2445 = vsel %vm805, %v2415, 0.0
      %v2446 = vsel %vm805, %v2418, 0.0
      %v2447 = vsel %vm805, %v2421, 0.0
      %v2448 = vsel %vm805, %v2424, 0.0
      %v2449 = vsel %vm805, %v2427, 0.0
      %v2450 = vsel %vm805, %v2430, 0.0
      %v2451 = vsel %vm805, %v2433, 0.0
      %v2452 = vsel %vm804, %v2436, 0.0
      %v2453 = vpack.c.bf16 %v2446, %v2445
      %v2454 = vpack.c.bf16 %v2448, %v2447
      %v2455 = vpack.c.bf16 %v2450, %v2449
      %v2456 = vpack.c.bf16 %v2452, %v2451
      %s2457 = scalar_lea.vmem %s1, 512
      %v2458 = vld [vmem:[%s2457] sm:$0xf]
      %v2459 = vld [vmem:[%s2457 + $0x4] sm:$0xf]
      %v2460 = vld [vmem:[%s2457 + $0x8] sm:$0xf]
      %v2461 = vld [vmem:[%s2457 + $0xc] sm:$0xf]
      %v2462 = vld [vmem:[%s2457 + $0x10] sm:$0xf]
      %v2463 = vld [vmem:[%s2457 + $0x14] sm:$0xf]
      %v2464 = vld [vmem:[%s2457 + $0x18] sm:$0xf]
      %v2465 = vld [vmem:[%s2457 + $0x1c] sm:$0xf]
      %v2466 = vld [vmem:[%s2457 + $0x20] sm:$0xf]
      %v2467 = vld [vmem:[%s2457 + $0x24] sm:$0xf]
      %v2468 = vld [vmem:[%s2457 + $0x28] sm:$0xf]
      %v2469 = vld [vmem:[%s2457 + $0x2c] sm:$0xf]
      %v2470 = vld [vmem:[%s2457 + $0x30] sm:$0xf]
      %v2471 = vld [vmem:[%s2457 + $0x34] sm:$0xf]
      %v2472 = vld [vmem:[%s2457 + $0x38] sm:$0xf]
      %v2473 = vld [vmem:[%s2457 + $0x3c] sm:$0xf]
      %v2490 = vunpack.c.l.b16 %v2458
      %v2491 = vunpack.c.l.b16 %v2459
      %v2492 = vunpack.c.l.b16 %v2460
      %v2493 = vunpack.c.l.b16 %v2461
      %v2494 = vunpack.c.l.b16 %v2462
      %v2495 = vunpack.c.l.b16 %v2463
      %v2496 = vunpack.c.l.b16 %v2464
      %v2497 = vunpack.c.l.b16 %v2465
      %v2498 = vunpack.c.l.b16 %v2466
      %v2499 = vunpack.c.l.b16 %v2467
      %v2500 = vunpack.c.l.b16 %v2468
      %v2501 = vunpack.c.l.b16 %v2469
      %v2502 = vunpack.c.l.b16 %v2470
      %v2503 = vunpack.c.l.b16 %v2471
      %v2504 = vunpack.c.l.b16 %v2472
      %v2505 = vunpack.c.l.b16 %v2473
      %v2506 = vpack.c.b16 %v2491, %v2490
      %v2507 = vpack.c.b16 %v2493, %v2492
      %v2508 = vpack.c.b16 %v2495, %v2494
      %v2509 = vpack.c.b16 %v2497, %v2496
      %v2510 = vpack.c.b16 %v2499, %v2498
      %v2511 = vpack.c.b16 %v2501, %v2500
      %v2512 = vpack.c.b16 %v2503, %v2502
      %v2513 = vpack.c.b16 %v2505, %v2504
      %2522 = vmatprep.subr.bf16.mxu0 0
      %2523 = vmatpush1.bf16.msra.mxu0 %v2506
      %2524 = vmatprep.subr.bf16.mxu0 0
      %2525 = vmatpush1.bf16.msra.mxu0 %v2507
      %2526 = vmatprep.subr.bf16.mxu0 0
      %2527 = vmatpush1.bf16.msra.mxu0 %v2508
      %2528 = vmatprep.subr.bf16.mxu0 0
      %2529 = vmatpush1.bf16.msra.mxu0 %v2509
      %2530 = vmatprep.subr.bf16.mxu0 0
      %2531 = vmatpush1.bf16.msra.mxu0 %v2510
      %2532 = vmatprep.subr.bf16.mxu0 0
      %2533 = vmatpush1.bf16.msra.mxu0 %v2511
      %2534 = vmatprep.subr.bf16.mxu0 0
      %2535 = vmatpush1.bf16.msra.mxu0 %v2512
      %2536 = vmatprep.subr.bf16.mxu0 0
      %2537 = vmatpush1.bf16.msra.mxu0 %v2513
      %2538 = vmatprep.subr.bf16.mxu0 0
      %2539 = vmatpush1.bf16.msra.mxu0 0
      %2540 = vmatprep.subr.bf16.mxu0 0
      %2541 = vmatpush1.bf16.msra.mxu0 0
      %2542 = vmatprep.subr.bf16.mxu0 0
      %2543 = vmatpush1.bf16.msra.mxu0 0
      %2544 = vmatprep.subr.bf16.mxu0 0
      %2545 = vmatpush1.bf16.msra.mxu0 0
      %2546 = vmatprep.subr.bf16.mxu0 0
      %2547 = vmatpush1.bf16.msra.mxu0 0
      %2548 = vmatprep.subr.bf16.mxu0 0
      %2549 = vmatpush1.bf16.msra.mxu0 0
      %2550 = vmatprep.subr.bf16.mxu0 0
      %2551 = vmatpush1.bf16.msra.mxu0 0
      %2552 = vmatprep.subr.bf16.mxu0 0
      %2553 = vmatpush1.bf16.msra.mxu0 0
      %2554 = vmatprep.mubr.bf16.mxu0 0
      %2555 = vmatmul.mubr.bf16.gmra.mrb[0].mxu0 %v2453
      %v2556 = vpop.f32.mrb[0].mxu0
      %v2557 = vadd.f32 0.0, %v2556
      %v2558 = vpop.f32.mrb[0].mxu0
      %v2559 = vpop.f32.mrb[0].mxu0
      %v2560 = vadd.f32 0.0, %v2559
      %v2561 = vpop.f32.mrb[0].mxu0
      %2562 = vmatprep.mubr.bf16.mxu0 0
      %2563 = vmatmul.mubr.bf16.gmra.mrb[0].mxu0 %v2454
      %v2564 = vpop.f32.mrb[0].mxu0
      %v2565 = vadd.f32 0.0, %v2564
      %v2566 = vpop.f32.mrb[0].mxu0
      %v2567 = vpop.f32.mrb[0].mxu0
      %v2568 = vadd.f32 0.0, %v2567
      %v2569 = vpop.f32.mrb[0].mxu0
      %2570 = vmatprep.mubr.bf16.mxu0 0
      %2571 = vmatmul.mubr.bf16.gmra.mrb[0].mxu0 %v2455
      %v2572 = vpop.f32.mrb[0].mxu0
      %v2573 = vadd.f32 0.0, %v2572
      %v2574 = vpop.f32.mrb[0].mxu0
      %v2575 = vpop.f32.mrb[0].mxu0
      %v2576 = vadd.f32 0.0, %v2575
      %v2577 = vpop.f32.mrb[0].mxu0
      %2578 = vmatprep.mubr.bf16.mxu0 0
      %2579 = vmatmul.mubr.bf16.gmra.mrb[0].mxu0 %v2456
      %v2580 = vpop.f32.mrb[0].mxu0
      %v2581 = vadd.f32 0.0, %v2580
      %v2582 = vpop.f32.mrb[0].mxu0
      %v2583 = vpop.f32.mrb[0].mxu0
      %v2584 = vadd.f32 0.0, %v2583
      %v2585 = vpop.f32.mrb[0].mxu0
      %2586 = vdwg.mxu0
      %v2587 = vld [vmem:[#allocation2] sm:$0xff]
      %v2588 = vld [vmem:[#allocation2 + $0x8] sm:$0xff]
      %v2589 = vld [vmem:[#allocation2 + $0x10] sm:$0xff]
      %v2590 = vld [vmem:[#allocation2 + $0x18] sm:$0xff]
      %v2591 = vld [vmem:[#allocation2 + $0x20] sm:$0xff]
      %v2592 = vld [vmem:[#allocation2 + $0x28] sm:$0xff]
      %v2593 = vld [vmem:[#allocation2 + $0x30] sm:$0xff]
      %v2594 = vld [vmem:[#allocation2 + $0x38] sm:$0xff]
      %v2595 = vadd.f32 %v2587, %v2557
      %v2596 = vadd.f32 %v2588, %v2560
      %v2597 = vadd.f32 %v2589, %v2565
      %v2598 = vadd.f32 %v2590, %v2568
      %v2599 = vadd.f32 %v2591, %v2573
      %v2600 = vadd.f32 %v2592, %v2576
      %v2601 = vadd.f32 %v2593, %v2581
      %v2602 = vadd.f32 %v2594, %v2584
      %2603 = vst [vmem:[#allocation2] sm:$0xff] %v2595
      %2604 = vst [vmem:[#allocation2 + $0x8] sm:$0xff] %v2596
      %2605 = vst [vmem:[#allocation2 + $0x10] sm:$0xff] %v2597
      %2606 = vst [vmem:[#allocation2 + $0x18] sm:$0xff] %v2598
      %2607 = vst [vmem:[#allocation2 + $0x20] sm:$0xff] %v2599
      %2608 = vst [vmem:[#allocation2 + $0x28] sm:$0xff] %v2600
      %2609 = vst [vmem:[#allocation2 + $0x30] sm:$0xff] %v2601
      %2610 = vst [vmem:[#allocation2 + $0x38] sm:$0xff] %v2602
      %v2611 = vld [vmem:[#allocation2] sm:$0xff]
      %v2612 = vld [vmem:[#allocation2 + $0x8] sm:$0xff]
      %v2613 = vld [vmem:[#allocation2 + $0x10] sm:$0xff]
      %v2614 = vld [vmem:[#allocation2 + $0x18] sm:$0xff]
      %v2615 = vld [vmem:[#allocation2 + $0x20] sm:$0xff]
      %v2616 = vld [vmem:[#allocation2 + $0x28] sm:$0xff]
      %v2617 = vld [vmem:[#allocation2 + $0x30] sm:$0xff]
      %v2618 = vld [vmem:[#allocation2 + $0x38] sm:$0xff]
      %v2619 = vpack.c.bf16 %v2612, %v2611
      %v2620 = vpack.c.bf16 %v2614, %v2613
      %v2621 = vpack.c.bf16 %v2616, %v2615
      %v2622 = vpack.c.bf16 %v2618, %v2617
      %v2627 = vunpack.c.l.b16 %v2619
      %v2628 = vunpack.c.h.b16 %v2619
      %v2629 = vunpack.c.l.b16 %v2620
      %v2630 = vunpack.c.h.b16 %v2620
      %v2631 = vunpack.c.l.b16 %v2621
      %v2632 = vunpack.c.h.b16 %v2621
      %v2633 = vunpack.c.l.b16 %v2622
      %v2634 = vunpack.c.h.b16 %v2622
      %v2635 = vpack.c.b16 %v2627, %v2627
      %v2636 = vpack.c.b16 %v2628, %v2628
      %v2637 = vpack.c.b16 %v2629, %v2629
      %v2638 = vpack.c.b16 %v2630, %v2630
      %v2639 = vpack.c.b16 %v2631, %v2631
      %v2640 = vpack.c.b16 %v2632, %v2632
      %v2641 = vpack.c.b16 %v2633, %v2633
      %v2642 = vpack.c.b16 %v2634, %v2634
      %2651 = vst [vmem:[%s204] sm:$0xf] %v2635
      %2652 = vst [vmem:[%s204 + $0x4] sm:$0xf] %v2636
      %2653 = vst [vmem:[%s204 + $0x8] sm:$0xf] %v2637
      %2654 = vst [vmem:[%s204 + $0xc] sm:$0xf] %v2638
      %2655 = vst [vmem:[%s204 + $0x10] sm:$0xf] %v2639
      %2656 = vst [vmem:[%s204 + $0x14] sm:$0xf] %v2640
      %2657 = vst [vmem:[%s204 + $0x18] sm:$0xf] %v2641
      %2658 = vst [vmem:[%s204 + $0x1c] sm:$0xf] %v2642
      %vm2659 = vcmp.eq.s32.totalorder %v213, 0
      %v2660 = vadd.f32 %v2611, %v2612
      %v2661 = vadd.f32 %v2660, %v2613
      %v2662 = vadd.f32 %v2661, %v2614
      %v2663 = vadd.f32 %v2662, %v2615
      %v2664 = vadd.f32 %v2663, %v2616
      %v2665 = vadd.f32 %v2664, %v2617
      %v2666 = vadd.f32 %v2665, %v2618
      %v2667 = vrot.slane %v2666, 4
      %v2668 = vadd.f32 %v2666, %v2667
      %v2669 = vrot.slane %v2668, 2
      %v2670 = vadd.f32 %v2668, %v2669
      %v2671 = vrot.slane %v2670, 1
      %v2672 = vadd.f32 %v2670, %v2671
      %v2673 = vsel %vm2659, %v2672, 0.0
      %vm2674 = vcmp.eq.s32.totalorder %v213, 1
      %v2675 = vmul.f32 %v2611, %v2611
      %v2676 = vmul.f32 %v2612, %v2612
      %v2677 = vmul.f32 %v2613, %v2613
      %v2678 = vmul.f32 %v2614, %v2614
      %v2679 = vmul.f32 %v2615, %v2615
      %v2680 = vmul.f32 %v2616, %v2616
      %v2681 = vmul.f32 %v2617, %v2617
      %v2682 = vmul.f32 %v2618, %v2618
      %v2683 = vadd.f32 %v2675, %v2676
      %v2684 = vadd.f32 %v2683, %v2677
      %v2685 = vadd.f32 %v2684, %v2678
      %v2686 = vadd.f32 %v2685, %v2679
      %v2687 = vadd.f32 %v2686, %v2680
      %v2688 = vadd.f32 %v2687, %v2681
      %v2689 = vadd.f32 %v2688, %v2682
      %v2690 = vrot.slane %v2689, 4
      %v2691 = vadd.f32 %v2689, %v2690
      %v2692 = vrot.slane %v2691, 2
      %v2693 = vadd.f32 %v2691, %v2692
      %v2694 = vrot.slane %v2693, 1
      %v2695 = vadd.f32 %v2693, %v2694
      %v2696 = vsel %vm2674, %v2695, 0.0
      %v2697 = vadd.f32 %v2673, %v2696
      %2698 = vst [vmem:[%s208] sm:$0xff] %v2697
      %p2699 = scmp.lt.s32.totalorder %s16, 1
      %s2700 = scalar_select %p2699, %s16, 1
      %s2701 = smul.addr %s2700, 8
      %s2702 = smul.addr %s2701, 4
      %s2703 = scalar_lea.vmem %s3, %s2702
      %p2704 = scmp.lt.s32.totalorder %s16, 1
      %s2705 = scalar_select %p2704, %s16, 1
      %s2706 = smul.addr %s2705, 8
      %s2707 = scalar_lea.vmem %s4, %s2706
      // Predicated region
      $region33: #{basic_block_forward.4} parent=31 // pred_check
        %p2708 = pneg %p102
      $region34: #{basic_block_forward.4} parent=31 // pred_check_branch
        %2710 = sbr.rel (%p2708) target = $region36
      $region35: #{basic_block_forward.4} parent=31 // pred_region
        _
      $region36: #{basic_block_forward.4} parent=31 // pred_fallthru
        _
      // Predicated region
      $region37: #{basic_block_forward.4} parent=31 // pred_check
        %p2711 = pneg %p128
      $region38: #{basic_block_forward.4} parent=31 // pred_check_branch
        %2713 = sbr.rel (%p2711) target = $region40
      $region39: #{basic_block_forward.4} parent=31 // pred_region
        _
      $region40: #{basic_block_forward.4} parent=31 // pred_fallthru
        _
    $region32: #{basic_block_forward.4} parent=5 // pred_fallthru
      _
    %p2714 = scmp.le.s32.totalorder 2, %s11
    // Predicated region
    $region41: #{basic_block_forward.4} parent=5 // pred_check
      %p2715 = pneg %p2714
    $region42: #{basic_block_forward.4} parent=5 // pred_check_branch
      %2717 = sbr.rel (%p2715) target = $region44
    $region43: #{basic_block_forward.4} parent=5 // pred_region
      %s2718 = ssub.s32 %s11, 2
      // Predicated region
      $region45: #{basic_block_forward.4} parent=43 // pred_check
        %p2719 = pneg %p108
      $region46: #{basic_block_forward.4} parent=43 // pred_check_branch
        %2721 = sbr.rel (%p2719) target = $region48
      $region47: #{basic_block_forward.4} parent=43 // pred_region
        %p2722 = scmp.lt.s32.totalorder %s17, 1
        %s2723 = scalar_select %p2722, %s17, 1
        %s2724 = smul.addr %s2723, 8
        %s2725 = smul.addr %s2724, 4
        %s2726 = scalar_lea.vmem %s3, %s2725
      $region48: #{basic_block_forward.4} parent=43 // pred_fallthru
        _
      // Predicated region
      $region49: #{basic_block_forward.4} parent=43 // pred_check
        %p2727 = pneg %p134
      $region50: #{basic_block_forward.4} parent=43 // pred_check_branch
        %2729 = sbr.rel (%p2727) target = $region52
      $region51: #{basic_block_forward.4} parent=43 // pred_region
        %p2730 = scmp.lt.s32.totalorder %s17, 1
        %s2731 = scalar_select %p2730, %s17, 1
        %s2732 = smul.addr %s2731, 8
        %s2733 = scalar_lea.vmem %s4, %s2732
      $region52: #{basic_block_forward.4} parent=43 // pred_fallthru
        _
    $region44: #{basic_block_forward.4} parent=5 // pred_fallthru
      _
  $region6: #{basic_block_forward.4} parent=0 // loop_footer
    %s15 = sadd.s32 1, %s11
  $region7: #{basic_block_forward.4} parent=0 // loop_footer_branch
    %10 = sbr.rel target = $region3
  $region8: #{basic_block_forward.4} parent=0 // loop_exit
    _

</llo_original>
